<compile_context>
chip_gen: v5e
topology: v5e:2x2
jax: 0.10.0
libtpu: 0.0.40
codegen_flags: <defaults>
</compile_context>

<pallas_src>
import functools
import math

import jax
import jax.numpy as jnp
from jax.experimental import pallas as pl
from jax.experimental.pallas import tpu as pltpu


# ---------------------------------------------------------------------------
# In-kernel helpers (pure jnp, traced into the Pallas body)
# ---------------------------------------------------------------------------
def _gelu_tanh(x):
    # tanh-form GELU (EUP tanh); max abs deviation vs exact erf-GELU ~1e-3.
    c = 0.7978845608028654  # sqrt(2/pi)
    return 0.5 * x * (1.0 + jnp.tanh(c * (x + 0.044715 * x * x * x)))


def _layernorm(x, gamma, beta, eps=1e-5):
    mean = jnp.mean(x, axis=-1, keepdims=True)
    var = jnp.mean((x - mean) ** 2, axis=-1, keepdims=True)
    return (x - mean) * jax.lax.rsqrt(var + eps) * gamma + beta


# ---------------------------------------------------------------------------
# Pallas kernel: one grid step == one (batch element, query tile)
# ---------------------------------------------------------------------------
def _block_kernel(x_q_ref, x_full_ref,
                  wq_ref, wkv_ref, wp_ref, bp_ref,
                  g1_ref, b1_ref,
                  wfc1_ref, bfc1_ref, wfc2_ref, bfc2_ref,
                  g2_ref, b2_ref,
                  o_ref,
                  k_sc, v_sc, q_sc, att_sc,
                  *, num_heads, head_dim, seq_len, kv_tile, compute_dtype):
    H, hd, cdt = num_heads, head_dim, compute_dtype
    tq, C = x_q_ref.shape
    n_kv = k_sc.shape[1]            # padded sequence length
    kvt = kv_tile
    num_kv = n_kv // kvt            # static chunk count

    # ---- K/V for the whole (padded) sequence: one fused full-width matmul,
    #      computed once per batch element (query-tile grid axis is "arbitrary"
    #      => sequential on one core) and kept in head-major VMEM scratch. ----
    @pl.when(pl.program_id(1) == 0)
    def _():
        xf = x_full_ref[...]                                   # (n_kv, C), compute dtype
        kv = jnp.dot(xf, wkv_ref[...],
                     preferred_element_type=jnp.float32).astype(cdt)   # (n_kv, 2C)
        for h in range(H):                                     # cheap lane-slice relayout
            k_sc[h] = kv[:, h * hd:(h + 1) * hd]
            v_sc[h] = kv[:, C + h * hd:C + (h + 1) * hd]

    # ---- residual copy (f32) + Q projection for this tile (scale folded into Wq) ----
    x = x_q_ref[...].astype(jnp.float32)                       # (tq, C)
    q_flat = jnp.dot(x.astype(cdt), wq_ref[...],
                     preferred_element_type=jnp.float32)       # (tq, C)
    for h in range(H):
        q_sc[h] = q_flat[:, h * hd:(h + 1) * hd].astype(cdt)
    q_hm = q_sc[...]                                           # (H, tq, hd)

    # ---- flash-style attention over KV chunks (f32 stats, deferred normalization) ----
    m0 = jnp.full((H, tq, 1), -jnp.inf, jnp.float32)
    l0 = jnp.zeros((H, tq, 1), jnp.float32)
    a0 = jnp.zeros((H, tq, hd), jnp.float32)

    def kv_step(t, carry):
        m, l, acc = carry
        off = t * kvt
        if not isinstance(off, int):
            off = pl.multiple_of(off, kvt)
        k_t = k_sc[:, pl.ds(off, kvt), :]                      # (H, kvt, hd)
        v_t = v_sc[:, pl.ds(off, kvt), :]
        s = jnp.einsum("htd,hnd->htn", q_hm, k_t,
                       preferred_element_type=jnp.float32)     # (H, tq, kvt)
        if n_kv > seq_len:                                     # static: mask zero-padded keys
            idx = t * kvt + jax.lax.broadcasted_iota(jnp.int32, (1, 1, kvt), 2)
            s = jnp.where(idx < seq_len, s, -1e30)
        m_new = jnp.maximum(m, jnp.max(s, axis=-1, keepdims=True))
        alpha = jnp.exp(m - m_new)
        p = jnp.exp(s - m_new)                                 # unnormalized probabilities
        l_new = alpha * l + jnp.sum(p, axis=-1, keepdims=True)
        acc_new = alpha * acc + jnp.einsum("htn,hnd->htd", p.astype(cdt), v_t,
                                           preferred_element_type=jnp.float32)
        return m_new, l_new, acc_new

    if num_kv == 1:
        _, l, acc = kv_step(0, (m0, l0, a0))
    else:
        _, l, acc = jax.lax.fori_loop(0, num_kv, kv_step, (m0, l0, a0))

    o_hm = acc * pl.reciprocal(l, approx=True)                 # (H, tq, hd), EUP recip
    for h in range(H):                                         # head-concat via lane slices
        att_sc[:, h * hd:(h + 1) * hd] = o_hm[h].astype(cdt)

    # ---- output projection: one full-width matmul on concatenated heads ----
    attn = jnp.dot(att_sc[...], wp_ref[...],
                   preferred_element_type=jnp.float32) + bp_ref[...]   # (tq, C)

    # ---- x1 = norm1(x + attn(x)) ----
    x1 = _layernorm(x + attn, g1_ref[...], b1_ref[...])

    # ---- Mlp(x1): fc1 -> GELU -> fc2  (dropout p=0 -> identity) ----
    h1 = jnp.dot(x1.astype(cdt), wfc1_ref[...],
                 preferred_element_type=jnp.float32) + bfc1_ref[...]
    h1 = _gelu_tanh(h1)
    h2 = jnp.dot(h1.astype(cdt), wfc2_ref[...],
                 preferred_element_type=jnp.float32) + bfc2_ref[...]

    # ---- out = norm2(x1 + mlp(x1)) ----
    o_ref[...] = _layernorm(x1 + h2, g2_ref[...], b2_ref[...]).astype(o_ref.dtype)


# ---------------------------------------------------------------------------
# Wrapper helpers
# ---------------------------------------------------------------------------
def _derive_tiling(N, q_tile, kv_tile):
    """Return (tq, kvt, n_pad) with n_pad a multiple of both tq and kvt."""
    if N <= q_tile:
        kvt = N if N <= kv_tile else kv_tile
        n_pad = -(-N // kvt) * kvt
        tq = n_pad                              # single query tile
    else:
        tq = q_tile
        n_pad = -(-N // tq) * tq
        kvt = n_pad if n_pad <= kv_tile else kv_tile
        if n_pad % kvt:
            unit = (tq * kvt) // math.gcd(tq, kvt)
            n_pad = -(-n_pad // unit) * unit
    return tq, kvt, n_pad


def _vmem_cap_bytes():
    """~3/4 of physical VMEM (≈48 MiB v7x, ≈96 MiB v5e/v6e); safe fallback."""
    try:
        phys = int(pltpu.get_tpu_info().vmem_capacity_bytes)
    except Exception:
        phys = 64 << 20          # v7x physical size — safe on every generation
    return (phys * 3) // 4


# ---------------------------------------------------------------------------
# Wrapper
# ---------------------------------------------------------------------------
def block_forward(x, params, *, num_heads, q_tile=256, kv_tile=512,
                  compute_dtype=jnp.bfloat16, single_buffer_weights=True):
    """Fused Pallas TPU forward for `Block`.

    params (linear weights already transposed to (in, out)):
      wqkv (C,3C), wproj (C,C), bproj (1,C), g1/b1 (1,C),
      wfc1 (C,hidden), bfc1 (1,hidden), wfc2 (hidden,C), bfc2 (1,C), g2/b2 (1,C)
    """
    B, N, C = x.shape
    assert C % num_heads == 0, "dim must be divisible by num_heads"
    hd = C // num_heads
    hidden = params["wfc1"].shape[1]
    scale = hd ** -0.5
    cdt = compute_dtype
    it = jnp.dtype(cdt).itemsize
    xit = jnp.dtype(x.dtype).itemsize
    H = num_heads

    # ---- per-generation VMEM budgeting: shrink tiles before clamping ----
    w_bytes = it * (4 * C * C + 2 * C * hidden) + 4 * (6 * C + hidden)
    w_bufs = 1 if single_buffer_weights else 2

    def vmem_estimate(tq, kvt, n_pad):
        act = 2 * tq * C * 4 + 2 * n_pad * C * it + 2 * tq * C * xit       # I/O blocks (double-buf)
        scratch = (2 * H * n_pad * hd + H * tq * hd + tq * C) * it          # K/V + Q + attn-out
        inter = (8 * n_pad * C                     # fused K/V matmul result (f32) + cdt copy
                 + 4 * tq * C                      # q_flat (f32)
                 + (8 + it) * H * tq * kvt         # scores + probs (f32) + probs cast
                 + 12 * H * tq * hd                # m / l / acc / o (f32)
                 + 4 * tq * C                      # attn / x1
                 + 12 * tq * hidden)               # MLP intermediates
        return w_bufs * w_bytes + act + scratch + inter + (6 << 20)

    cap = _vmem_cap_bytes()
    q_t, kv_t = q_tile, kv_tile
    tq, kvt, n_pad = _derive_tiling(N, q_t, kv_t)
    est = vmem_estimate(tq, kvt, n_pad)
    for _ in range(8):
        if est <= cap:
            break
        if kvt > 128 and kvt >= tq:
            kv_t = max(128, kv_t // 2)
        elif tq > 64 and N > 64:
            q_t = max(64, q_t // 2)
        elif kvt > 128:
            kv_t = max(128, kv_t // 2)
        else:
            break  # TODO(synk): stream K/V from HBM when even minimal tiles exceed the cap
        tq, kvt, n_pad = _derive_tiling(N, q_t, kv_t)
        est = vmem_estimate(tq, kvt, n_pad)

    if N > tq:
        assert tq % 8 == 0, "query tile must be a multiple of 8"
    n_q = n_pad // tq
    vmem_limit = int(min(max(est, 32 << 20), cap))

    # ---- inputs: f32 query/residual path + pre-cast compute-dtype full sequence ----
    x_pad = x if n_pad == N else jnp.pad(x, ((0, 0), (0, n_pad - N), (0, 0)))
    x_full_cdt = x_pad.astype(cdt)

    # ---- weight prep: fold softmax scale into Wq (f32) before the cast ----
    wqkv = params["wqkv"].astype(jnp.float32)                       # (C, 3C)
    wq = (wqkv[:, :C] * scale).astype(cdt)                          # (C, C)
    wkv = wqkv[:, C:].astype(cdt)                                   # (C, 2C) fused K|V
    wproj = params["wproj"].astype(cdt)                             # (C, C)
    wfc1 = params["wfc1"].astype(cdt)
    wfc2 = params["wfc2"].astype(cdt)
    f32 = lambda a: a.astype(jnp.float32)
    bproj, g1, b1 = f32(params["bproj"]), f32(params["g1"]), f32(params["b1"])
    bfc1, bfc2 = f32(params["bfc1"]), f32(params["bfc2"])
    g2, b2 = f32(params["g2"]), f32(params["b2"])

    args = (x_pad, x_full_cdt, wq, wkv, wproj, bproj, g1, b1,
            wfc1, bfc1, wfc2, bfc2, g2, b2)

    # ---- advisory cost estimate ----
    flops = 2 * B * (3 * n_pad * C * C            # qkv projections
                     + 2 * n_pad * n_pad * C      # scores + probs @ V
                     + n_pad * C * C              # output projection
                     + 2 * n_pad * C * hidden)    # MLP
    transcendentals = B * (H * n_pad * n_pad + n_pad * hidden)      # exp + tanh
    bytes_accessed = int(x_pad.size) * (4 + it + xit) + int(w_bytes)
    cost = pl.CostEstimate(flops=int(flops), transcendentals=int(transcendentals),
                           bytes_accessed=int(bytes_accessed))

    kernel = functools.partial(_block_kernel, num_heads=H, head_dim=hd,
                               seq_len=N, kv_tile=kvt, compute_dtype=cdt)

    def build(single_buffer):
        wopts = {"pipeline_mode": pl.Buffered(1)} if single_buffer else {}

        def wspec(shape):
            return pl.BlockSpec(shape, lambda b, q: (0,) * len(shape), **wopts)

        in_specs = [
            pl.BlockSpec((pl.Squeezed(), tq, C), lambda b, q: (b, q, 0)),     # x (query tile, f32)
            pl.BlockSpec((pl.Squeezed(), n_pad, C), lambda b, q: (b, 0, 0)),  # x (full seq, cdt)
            wspec((C, C)),                 # wq (scale folded in)
            wspec((C, 2 * C)),             # wkv (fused K|V)
            wspec((C, C)),                 # wproj
            wspec((1, C)),                 # bproj
            wspec((1, C)), wspec((1, C)),  # norm1 gamma / beta
            wspec((C, hidden)),            # wfc1
            wspec((1, hidden)),            # bfc1
            wspec((hidden, C)),            # wfc2
            wspec((1, C)),                 # bfc2
            wspec((1, C)), wspec((1, C)),  # norm2 gamma / beta
        ]
        out_spec = pl.BlockSpec((pl.Squeezed(), tq, C), lambda b, q: (b, q, 0))

        # NOTE: K/V scratch persistence across query tiles requires the query
        # axis (grid axis 1) to be innermost and "arbitrary" — do not reorder.
        return pl.pallas_call(
            kernel,
            out_shape=jax.ShapeDtypeStruct((B, n_pad, C), x.dtype),
            grid_spec=pltpu.PrefetchScalarGridSpec(
                num_scalar_prefetch=0,
                grid=(B, n_q),
                in_specs=in_specs,
                out_specs=out_spec,
                scratch_shapes=[pltpu.VMEM((H, n_pad, hd), cdt),   # K scratch (head-major)
                                pltpu.VMEM((H, n_pad, hd), cdt),   # V scratch (head-major)
                                pltpu.VMEM((H, tq, hd), cdt),      # Q (head-major)
                                pltpu.VMEM((tq, C), cdt)],         # attn output (head-concat)
            ),
            compiler_params=pltpu.CompilerParams(
                dimension_semantics=("parallel", "arbitrary"),
                vmem_limit_bytes=vmem_limit),
            cost_estimate=cost,
        )

    if single_buffer_weights:
        try:
            out = build(True)(*args)
        except Exception:
            # Fallback if this JAX build rejects Buffered(1) at the top-level grid.
            out = build(False)(*args)
    else:
        out = build(False)(*args)
    return out[:, :N, :]


# ---------------------------------------------------------------------------
# Pure-JAX reference (mirrors the torch module, f32, exact-erf GELU)
# ---------------------------------------------------------------------------
def block_reference(x, params, *, num_heads):
    B, N, C = x.shape
    hd = C // num_heads
    scale = hd ** -0.5
    qkv = x @ params["wqkv"]                                  # (B, N, 3C)
    qkv = qkv.reshape(B, N, 3, num_heads, hd).transpose(2, 0, 3, 1, 4)
    q, k, v = qkv[0] * scale, qkv[1], qkv[2]                  # (B, H, N, hd)
    attn = jax.nn.softmax(q @ jnp.swapaxes(k, -2, -1), axis=-1)
    a = (attn @ v).transpose(0, 2, 1, 3).reshape(B, N, C)
    a = a @ params["wproj"] + params["bproj"][0]

    def ln(y, g, b, eps=1e-5):
        m = y.mean(-1, keepdims=True)
        var = ((y - m) ** 2).mean(-1, keepdims=True)
        return (y - m) * jax.lax.rsqrt(var + eps) * g[0] + b[0]

    x1 = ln(x + a, params["g1"], params["b1"])
    h = jax.nn.gelu(x1 @ params["wfc1"] + params["bfc1"][0], approximate=False)
    h = h @ params["wfc2"] + params["bfc2"][0]
    return ln(x1 + h, params["g2"], params["b2"])


# ---------------------------------------------------------------------------
if __name__ == "__main__":
    def make_params(key, C, hidden):
        ks = jax.random.split(key, 11)
        return {
            "wqkv": 0.05 * jax.random.normal(ks[0], (C, 3 * C), jnp.float32),
            "wproj": 0.05 * jax.random.normal(ks[1], (C, C), jnp.float32),
            "bproj": 0.05 * jax.random.normal(ks[2], (1, C), jnp.float32),
            "g1": 1.0 + 0.1 * jax.random.normal(ks[3], (1, C), jnp.float32),
            "b1": 0.1 * jax.random.normal(ks[4], (1, C), jnp.float32),
            "wfc1": 0.05 * jax.random.normal(ks[5], (C, hidden), jnp.float32),
            "bfc1": 0.05 * jax.random.normal(ks[6], (1, hidden), jnp.float32),
            "wfc2": 0.05 * jax.random.normal(ks[7], (hidden, C), jnp.float32),
            "bfc2": 0.05 * jax.random.normal(ks[8], (1, C), jnp.float32),
            "g2": 1.0 + 0.1 * jax.random.normal(ks[9], (1, C), jnp.float32),
            "b2": 0.1 * jax.random.normal(ks[10], (1, C), jnp.float32),
        }

    key = jax.random.PRNGKey(0)
    k1, k2, k3, k4 = jax.random.split(key, 4)

    # Case 1: B=2, N=8, C=32, H=8, mlp_ratio=4  (single query tile, single KV chunk).
    B, N, C, H = 2, 8, 32, 8
    params = make_params(k1, C, int(4.0 * C))
    x = jax.random.normal(k2, (B, N, C), jnp.float32)
    ref = block_reference(x, params, num_heads=H)

    # f32 compute path: only intentional approximations are tanh-GELU + approx recip.
    out_f32 = jax.block_until_ready(
        block_forward(x, params, num_heads=H, compute_dtype=jnp.float32))
    assert out_f32.shape == (B, N, C)
    assert jnp.allclose(out_f32, ref, atol=5e-3, rtol=5e-3), "f32 path mismatch"

    # bf16 compute path (MXU-friendly); f32 accumulation + f32 softmax/LN stats.
    out_bf16 = jax.block_until_ready(
        block_forward(x, params, num_heads=H, compute_dtype=jnp.bfloat16))
    assert jnp.allclose(out_bf16, ref, atol=3e-2, rtol=3e-2), "bf16 path mismatch"

    # Case 2: exercises sequence tiling + KV-chunked online softmax + key-padding mask
    # (N=20 -> padded to 24, query tile 8 -> 3 tiles, kv tile 8 -> 3 chunks).
    B2, N2, C2, H2 = 2, 20, 32, 4
    params2 = make_params(k3, C2, 64)
    x2 = jax.random.normal(k4, (B2, N2, C2), jnp.float32)
    ref2 = block_reference(x2, params2, num_heads=H2)
    out2 = jax.block_until_ready(
        block_forward(x2, params2, num_heads=H2, q_tile=8, kv_tile=8,
                      compute_dtype=jnp.float32))
    assert out2.shape == (B2, N2, C2)
    assert jnp.allclose(out2, ref2, atol=5e-3, rtol=5e-3), "tiled path mismatch"

    print("KERNEL_OK")
</pallas_src>

<mosaic_0001>
module attributes {stable_mosaic.version = 11 : i64} {
  func.func @_block_kernel(%arg0: i32, %arg1: i32, %arg2: memref<1x8x32xf32, #tpu.memory_space<vmem>>, %arg3: memref<1x8x32xf32, #tpu.memory_space<vmem>>, %arg4: memref<32x32xf32, #tpu.memory_space<vmem>>, %arg5: memref<32x64xf32, #tpu.memory_space<vmem>>, %arg6: memref<32x32xf32, #tpu.memory_space<vmem>>, %arg7: memref<1x32xf32, #tpu.memory_space<vmem>>, %arg8: memref<1x32xf32, #tpu.memory_space<vmem>>, %arg9: memref<1x32xf32, #tpu.memory_space<vmem>>, %arg10: memref<32x128xf32, #tpu.memory_space<vmem>>, %arg11: memref<1x128xf32, #tpu.memory_space<vmem>>, %arg12: memref<128x32xf32, #tpu.memory_space<vmem>>, %arg13: memref<1x32xf32, #tpu.memory_space<vmem>>, %arg14: memref<1x32xf32, #tpu.memory_space<vmem>>, %arg15: memref<1x32xf32, #tpu.memory_space<vmem>>, %arg16: memref<1x8x32xf32, #tpu.memory_space<vmem>>, %arg17: memref<8x8x4xf32, #tpu.memory_space<vmem>>, %arg18: memref<8x8x4xf32, #tpu.memory_space<vmem>>, %arg19: memref<8x8x4xf32, #tpu.memory_space<vmem>>, %arg20: memref<8x32xf32, #tpu.memory_space<vmem>>) attributes {dimension_semantics = [#tpu.dimension_semantics<parallel>, #tpu.dimension_semantics<arbitrary>], iteration_bounds = array<i64: 2, 1>, scalar_prefetch = 0 : i64, scratch_operands = 4 : i64, tpu.core_type = #tpu.core_type<tc>, window_params = [{transform_indices = @transform_0, window_bounds = array<i64: 1, 8, 32>}, {transform_indices = @transform_1, window_bounds = array<i64: 1, 8, 32>}, {pipeline_mode = #tpu.pipeline_mode<synchronous>, transform_indices = @transform_2, window_bounds = array<i64: 32, 32>}, {pipeline_mode = #tpu.pipeline_mode<synchronous>, transform_indices = @transform_3, window_bounds = array<i64: 32, 64>}, {pipeline_mode = #tpu.pipeline_mode<synchronous>, transform_indices = @transform_4, window_bounds = array<i64: 32, 32>}, {pipeline_mode = #tpu.pipeline_mode<synchronous>, transform_indices = @transform_5, window_bounds = array<i64: 1, 32>}, {pipeline_mode = #tpu.pipeline_mode<synchronous>, transform_indices = @transform_6, window_bounds = array<i64: 1, 32>}, {pipeline_mode = #tpu.pipeline_mode<synchronous>, transform_indices = @transform_7, window_bounds = array<i64: 1, 32>}, {pipeline_mode = #tpu.pipeline_mode<synchronous>, transform_indices = @transform_8, window_bounds = array<i64: 32, 128>}, {pipeline_mode = #tpu.pipeline_mode<synchronous>, transform_indices = @transform_9, window_bounds = array<i64: 1, 128>}, {pipeline_mode = #tpu.pipeline_mode<synchronous>, transform_indices = @transform_10, window_bounds = array<i64: 128, 32>}, {pipeline_mode = #tpu.pipeline_mode<synchronous>, transform_indices = @transform_11, window_bounds = array<i64: 1, 32>}, {pipeline_mode = #tpu.pipeline_mode<synchronous>, transform_indices = @transform_12, window_bounds = array<i64: 1, 32>}, {pipeline_mode = #tpu.pipeline_mode<synchronous>, transform_indices = @transform_13, window_bounds = array<i64: 1, 32>}, {transform_indices = @transform_14, window_bounds = array<i64: 1, 8, 32>}]} {
    %c0_i32 = arith.constant 0 : i32
    %0 = arith.cmpi eq, %arg1, %c0_i32 : i32
    %1 = arith.extui %0 : i1 to i32
    %c0_i32_0 = arith.constant 0 : i32
    %2 = arith.cmpi ne, %1, %c0_i32_0 : i32
    scf.if %2 {
      %c0_90 = arith.constant 0 : index
      %c0_91 = arith.constant 0 : index
      %c0_92 = arith.constant 0 : index
      %171 = vector.load %arg3[%c0_90, %c0_91, %c0_92] : memref<1x8x32xf32, #tpu.memory_space<vmem>>, vector<1x8x32xf32>
      %172 = vector.shape_cast %171 : vector<1x8x32xf32> to vector<8x32xf32>
      %c0_93 = arith.constant 0 : index
      %c0_94 = arith.constant 0 : index
      %173 = vector.load %arg5[%c0_93, %c0_94] : memref<32x64xf32, #tpu.memory_space<vmem>>, vector<32x64xf32>
      %cst_95 = arith.constant dense<0.000000e+00> : vector<8x64xf32>
      %174 = tpu.matmul %172, %173, %cst_95 {dimension_numbers = #tpu.dot_dimension_numbers<[1], [0], [0], [1], [0, 0, 1, 1], [], []>} : vector<8x32xf32>, vector<32x64xf32>, vector<8x64xf32> -> vector<8x64xf32>
      %175 = vector.extract_strided_slice %174 {offsets = [0, 0], sizes = [8, 4], strides = [1, 1]} : vector<8x64xf32> to vector<8x4xf32>
      %c0_96 = arith.constant 0 : index
      %c0_97 = arith.constant 0 : index
      %c0_98 = arith.constant 0 : index
      %176 = vector.load %arg17[%c0_96, %c0_97, %c0_98] : memref<8x8x4xf32, #tpu.memory_space<vmem>>, vector<1x8x4xf32>
      %177 = vector.shape_cast %176 : vector<1x8x4xf32> to vector<8x4xf32>
      %178 = vector.shape_cast %175 : vector<8x4xf32> to vector<1x8x4xf32>
      tpu.vector_store %arg17[%c0_96, %c0_97, %c0_98], %178 {strides = array<i32>} : memref<8x8x4xf32, #tpu.memory_space<vmem>>, vector<1x8x4xf32>,
      %179 = vector.extract_strided_slice %174 {offsets = [0, 32], sizes = [8, 4], strides = [1, 1]} : vector<8x64xf32> to vector<8x4xf32>
      %c0_99 = arith.constant 0 : index
      %c0_100 = arith.constant 0 : index
      %c0_101 = arith.constant 0 : index
      %180 = vector.load %arg18[%c0_99, %c0_100, %c0_101] : memref<8x8x4xf32, #tpu.memory_space<vmem>>, vector<1x8x4xf32>
      %181 = vector.shape_cast %180 : vector<1x8x4xf32> to vector<8x4xf32>
      %182 = vector.shape_cast %179 : vector<8x4xf32> to vector<1x8x4xf32>
      tpu.vector_store %arg18[%c0_99, %c0_100, %c0_101], %182 {strides = array<i32>} : memref<8x8x4xf32, #tpu.memory_space<vmem>>, vector<1x8x4xf32>,
      %183 = vector.extract_strided_slice %174 {offsets = [0, 4], sizes = [8, 4], strides = [1, 1]} : vector<8x64xf32> to vector<8x4xf32>
      %c1_102 = arith.constant 1 : index
      %c0_103 = arith.constant 0 : index
      %c0_104 = arith.constant 0 : index
      %184 = vector.load %arg17[%c1_102, %c0_103, %c0_104] : memref<8x8x4xf32, #tpu.memory_space<vmem>>, vector<1x8x4xf32>
      %185 = vector.shape_cast %184 : vector<1x8x4xf32> to vector<8x4xf32>
      %186 = vector.shape_cast %183 : vector<8x4xf32> to vector<1x8x4xf32>
      tpu.vector_store %arg17[%c1_102, %c0_103, %c0_104], %186 {strides = array<i32>} : memref<8x8x4xf32, #tpu.memory_space<vmem>>, vector<1x8x4xf32>,
      %187 = vector.extract_strided_slice %174 {offsets = [0, 36], sizes = [8, 4], strides = [1, 1]} : vector<8x64xf32> to vector<8x4xf32>
      %c1_105 = arith.constant 1 : index
      %c0_106 = arith.constant 0 : index
      %c0_107 = arith.constant 0 : index
      %188 = vector.load %arg18[%c1_105, %c0_106, %c0_107] : memref<8x8x4xf32, #tpu.memory_space<vmem>>, vector<1x8x4xf32>
      %189 = vector.shape_cast %188 : vector<1x8x4xf32> to vector<8x4xf32>
      %190 = vector.shape_cast %187 : vector<8x4xf32> to vector<1x8x4xf32>
      tpu.vector_store %arg18[%c1_105, %c0_106, %c0_107], %190 {strides = array<i32>} : memref<8x8x4xf32, #tpu.memory_space<vmem>>, vector<1x8x4xf32>,
      %191 = vector.extract_strided_slice %174 {offsets = [0, 8], sizes = [8, 4], strides = [1, 1]} : vector<8x64xf32> to vector<8x4xf32>
      %c2_108 = arith.constant 2 : index
      %c0_109 = arith.constant 0 : index
      %c0_110 = arith.constant 0 : index
      %192 = vector.load %arg17[%c2_108, %c0_109, %c0_110] : memref<8x8x4xf32, #tpu.memory_space<vmem>>, vector<1x8x4xf32>
      %193 = vector.shape_cast %192 : vector<1x8x4xf32> to vector<8x4xf32>
      %194 = vector.shape_cast %191 : vector<8x4xf32> to vector<1x8x4xf32>
      tpu.vector_store %arg17[%c2_108, %c0_109, %c0_110], %194 {strides = array<i32>} : memref<8x8x4xf32, #tpu.memory_space<vmem>>, vector<1x8x4xf32>,
      %195 = vector.extract_strided_slice %174 {offsets = [0, 40], sizes = [8, 4], strides = [1, 1]} : vector<8x64xf32> to vector<8x4xf32>
      %c2_111 = arith.constant 2 : index
      %c0_112 = arith.constant 0 : index
      %c0_113 = arith.constant 0 : index
      %196 = vector.load %arg18[%c2_111, %c0_112, %c0_113] : memref<8x8x4xf32, #tpu.memory_space<vmem>>, vector<1x8x4xf32>
      %197 = vector.shape_cast %196 : vector<1x8x4xf32> to vector<8x4xf32>
      %198 = vector.shape_cast %195 : vector<8x4xf32> to vector<1x8x4xf32>
      tpu.vector_store %arg18[%c2_111, %c0_112, %c0_113], %198 {strides = array<i32>} : memref<8x8x4xf32, #tpu.memory_space<vmem>>, vector<1x8x4xf32>,
      %199 = vector.extract_strided_slice %174 {offsets = [0, 12], sizes = [8, 4], strides = [1, 1]} : vector<8x64xf32> to vector<8x4xf32>
      %c3_114 = arith.constant 3 : index
      %c0_115 = arith.constant 0 : index
      %c0_116 = arith.constant 0 : index
      %200 = vector.load %arg17[%c3_114, %c0_115, %c0_116] : memref<8x8x4xf32, #tpu.memory_space<vmem>>, vector<1x8x4xf32>
      %201 = vector.shape_cast %200 : vector<1x8x4xf32> to vector<8x4xf32>
      %202 = vector.shape_cast %199 : vector<8x4xf32> to vector<1x8x4xf32>
      tpu.vector_store %arg17[%c3_114, %c0_115, %c0_116], %202 {strides = array<i32>} : memref<8x8x4xf32, #tpu.memory_space<vmem>>, vector<1x8x4xf32>,
      %203 = vector.extract_strided_slice %174 {offsets = [0, 44], sizes = [8, 4], strides = [1, 1]} : vector<8x64xf32> to vector<8x4xf32>
      %c3_117 = arith.constant 3 : index
      %c0_118 = arith.constant 0 : index
      %c0_119 = arith.constant 0 : index
      %204 = vector.load %arg18[%c3_117, %c0_118, %c0_119] : memref<8x8x4xf32, #tpu.memory_space<vmem>>, vector<1x8x4xf32>
      %205 = vector.shape_cast %204 : vector<1x8x4xf32> to vector<8x4xf32>
      %206 = vector.shape_cast %203 : vector<8x4xf32> to vector<1x8x4xf32>
      tpu.vector_store %arg18[%c3_117, %c0_118, %c0_119], %206 {strides = array<i32>} : memref<8x8x4xf32, #tpu.memory_space<vmem>>, vector<1x8x4xf32>,
      %207 = vector.extract_strided_slice %174 {offsets = [0, 16], sizes = [8, 4], strides = [1, 1]} : vector<8x64xf32> to vector<8x4xf32>
      %c4_120 = arith.constant 4 : index
      %c0_121 = arith.constant 0 : index
      %c0_122 = arith.constant 0 : index
      %208 = vector.load %arg17[%c4_120, %c0_121, %c0_122] : memref<8x8x4xf32, #tpu.memory_space<vmem>>, vector<1x8x4xf32>
      %209 = vector.shape_cast %208 : vector<1x8x4xf32> to vector<8x4xf32>
      %210 = vector.shape_cast %207 : vector<8x4xf32> to vector<1x8x4xf32>
      tpu.vector_store %arg17[%c4_120, %c0_121, %c0_122], %210 {strides = array<i32>} : memref<8x8x4xf32, #tpu.memory_space<vmem>>, vector<1x8x4xf32>,
      %211 = vector.extract_strided_slice %174 {offsets = [0, 48], sizes = [8, 4], strides = [1, 1]} : vector<8x64xf32> to vector<8x4xf32>
      %c4_123 = arith.constant 4 : index
      %c0_124 = arith.constant 0 : index
      %c0_125 = arith.constant 0 : index
      %212 = vector.load %arg18[%c4_123, %c0_124, %c0_125] : memref<8x8x4xf32, #tpu.memory_space<vmem>>, vector<1x8x4xf32>
      %213 = vector.shape_cast %212 : vector<1x8x4xf32> to vector<8x4xf32>
      %214 = vector.shape_cast %211 : vector<8x4xf32> to vector<1x8x4xf32>
      tpu.vector_store %arg18[%c4_123, %c0_124, %c0_125], %214 {strides = array<i32>} : memref<8x8x4xf32, #tpu.memory_space<vmem>>, vector<1x8x4xf32>,
      %215 = vector.extract_strided_slice %174 {offsets = [0, 20], sizes = [8, 4], strides = [1, 1]} : vector<8x64xf32> to vector<8x4xf32>
      %c5_126 = arith.constant 5 : index
      %c0_127 = arith.constant 0 : index
      %c0_128 = arith.constant 0 : index
      %216 = vector.load %arg17[%c5_126, %c0_127, %c0_128] : memref<8x8x4xf32, #tpu.memory_space<vmem>>, vector<1x8x4xf32>
      %217 = vector.shape_cast %216 : vector<1x8x4xf32> to vector<8x4xf32>
      %218 = vector.shape_cast %215 : vector<8x4xf32> to vector<1x8x4xf32>
      tpu.vector_store %arg17[%c5_126, %c0_127, %c0_128], %218 {strides = array<i32>} : memref<8x8x4xf32, #tpu.memory_space<vmem>>, vector<1x8x4xf32>,
      %219 = vector.extract_strided_slice %174 {offsets = [0, 52], sizes = [8, 4], strides = [1, 1]} : vector<8x64xf32> to vector<8x4xf32>
      %c5_129 = arith.constant 5 : index
      %c0_130 = arith.constant 0 : index
      %c0_131 = arith.constant 0 : index
      %220 = vector.load %arg18[%c5_129, %c0_130, %c0_131] : memref<8x8x4xf32, #tpu.memory_space<vmem>>, vector<1x8x4xf32>
      %221 = vector.shape_cast %220 : vector<1x8x4xf32> to vector<8x4xf32>
      %222 = vector.shape_cast %219 : vector<8x4xf32> to vector<1x8x4xf32>
      tpu.vector_store %arg18[%c5_129, %c0_130, %c0_131], %222 {strides = array<i32>} : memref<8x8x4xf32, #tpu.memory_space<vmem>>, vector<1x8x4xf32>,
      %223 = vector.extract_strided_slice %174 {offsets = [0, 24], sizes = [8, 4], strides = [1, 1]} : vector<8x64xf32> to vector<8x4xf32>
      %c6_132 = arith.constant 6 : index
      %c0_133 = arith.constant 0 : index
      %c0_134 = arith.constant 0 : index
      %224 = vector.load %arg17[%c6_132, %c0_133, %c0_134] : memref<8x8x4xf32, #tpu.memory_space<vmem>>, vector<1x8x4xf32>
      %225 = vector.shape_cast %224 : vector<1x8x4xf32> to vector<8x4xf32>
      %226 = vector.shape_cast %223 : vector<8x4xf32> to vector<1x8x4xf32>
      tpu.vector_store %arg17[%c6_132, %c0_133, %c0_134], %226 {strides = array<i32>} : memref<8x8x4xf32, #tpu.memory_space<vmem>>, vector<1x8x4xf32>,
      %227 = vector.extract_strided_slice %174 {offsets = [0, 56], sizes = [8, 4], strides = [1, 1]} : vector<8x64xf32> to vector<8x4xf32>
      %c6_135 = arith.constant 6 : index
      %c0_136 = arith.constant 0 : index
      %c0_137 = arith.constant 0 : index
      %228 = vector.load %arg18[%c6_135, %c0_136, %c0_137] : memref<8x8x4xf32, #tpu.memory_space<vmem>>, vector<1x8x4xf32>
      %229 = vector.shape_cast %228 : vector<1x8x4xf32> to vector<8x4xf32>
      %230 = vector.shape_cast %227 : vector<8x4xf32> to vector<1x8x4xf32>
      tpu.vector_store %arg18[%c6_135, %c0_136, %c0_137], %230 {strides = array<i32>} : memref<8x8x4xf32, #tpu.memory_space<vmem>>, vector<1x8x4xf32>,
      %231 = vector.extract_strided_slice %174 {offsets = [0, 28], sizes = [8, 4], strides = [1, 1]} : vector<8x64xf32> to vector<8x4xf32>
      %c7_138 = arith.constant 7 : index
      %c0_139 = arith.constant 0 : index
      %c0_140 = arith.constant 0 : index
      %232 = vector.load %arg17[%c7_138, %c0_139, %c0_140] : memref<8x8x4xf32, #tpu.memory_space<vmem>>, vector<1x8x4xf32>
      %233 = vector.shape_cast %232 : vector<1x8x4xf32> to vector<8x4xf32>
      %234 = vector.shape_cast %231 : vector<8x4xf32> to vector<1x8x4xf32>
      tpu.vector_store %arg17[%c7_138, %c0_139, %c0_140], %234 {strides = array<i32>} : memref<8x8x4xf32, #tpu.memory_space<vmem>>, vector<1x8x4xf32>,
      %235 = vector.extract_strided_slice %174 {offsets = [0, 60], sizes = [8, 4], strides = [1, 1]} : vector<8x64xf32> to vector<8x4xf32>
      %c7_141 = arith.constant 7 : index
      %c0_142 = arith.constant 0 : index
      %c0_143 = arith.constant 0 : index
      %236 = vector.load %arg18[%c7_141, %c0_142, %c0_143] : memref<8x8x4xf32, #tpu.memory_space<vmem>>, vector<1x8x4xf32>
      %237 = vector.shape_cast %236 : vector<1x8x4xf32> to vector<8x4xf32>
      %238 = vector.shape_cast %235 : vector<8x4xf32> to vector<1x8x4xf32>
      tpu.vector_store %arg18[%c7_141, %c0_142, %c0_143], %238 {strides = array<i32>} : memref<8x8x4xf32, #tpu.memory_space<vmem>>, vector<1x8x4xf32>,
    } else {
    }
    %c0 = arith.constant 0 : index
    %c0_1 = arith.constant 0 : index
    %c0_2 = arith.constant 0 : index
    %3 = vector.load %arg2[%c0, %c0_1, %c0_2] : memref<1x8x32xf32, #tpu.memory_space<vmem>>, vector<1x8x32xf32>
    %4 = vector.shape_cast %3 : vector<1x8x32xf32> to vector<8x32xf32>
    %c0_3 = arith.constant 0 : index
    %c0_4 = arith.constant 0 : index
    %5 = vector.load %arg4[%c0_3, %c0_4] : memref<32x32xf32, #tpu.memory_space<vmem>>, vector<32x32xf32>
    %cst = arith.constant dense<0.000000e+00> : vector<8x32xf32>
    %6 = tpu.matmul %4, %5, %cst {dimension_numbers = #tpu.dot_dimension_numbers<[1], [0], [0], [1], [0, 0, 1, 1], [], []>} : vector<8x32xf32>, vector<32x32xf32>, vector<8x32xf32> -> vector<8x32xf32>
    %7 = vector.extract_strided_slice %6 {offsets = [0, 0], sizes = [8, 4], strides = [1, 1]} : vector<8x32xf32> to vector<8x4xf32>
    %c0_5 = arith.constant 0 : index
    %c0_6 = arith.constant 0 : index
    %c0_7 = arith.constant 0 : index
    %8 = vector.load %arg19[%c0_5, %c0_6, %c0_7] : memref<8x8x4xf32, #tpu.memory_space<vmem>>, vector<1x8x4xf32>
    %9 = vector.shape_cast %8 : vector<1x8x4xf32> to vector<8x4xf32>
    %10 = vector.shape_cast %7 : vector<8x4xf32> to vector<1x8x4xf32>
    tpu.vector_store %arg19[%c0_5, %c0_6, %c0_7], %10 {strides = array<i32>} : memref<8x8x4xf32, #tpu.memory_space<vmem>>, vector<1x8x4xf32>,
    %11 = vector.extract_strided_slice %6 {offsets = [0, 4], sizes = [8, 4], strides = [1, 1]} : vector<8x32xf32> to vector<8x4xf32>
    %c1 = arith.constant 1 : index
    %c0_8 = arith.constant 0 : index
    %c0_9 = arith.constant 0 : index
    %12 = vector.load %arg19[%c1, %c0_8, %c0_9] : memref<8x8x4xf32, #tpu.memory_space<vmem>>, vector<1x8x4xf32>
    %13 = vector.shape_cast %12 : vector<1x8x4xf32> to vector<8x4xf32>
    %14 = vector.shape_cast %11 : vector<8x4xf32> to vector<1x8x4xf32>
    tpu.vector_store %arg19[%c1, %c0_8, %c0_9], %14 {strides = array<i32>} : memref<8x8x4xf32, #tpu.memory_space<vmem>>, vector<1x8x4xf32>,
    %15 = vector.extract_strided_slice %6 {offsets = [0, 8], sizes = [8, 4], strides = [1, 1]} : vector<8x32xf32> to vector<8x4xf32>
    %c2 = arith.constant 2 : index
    %c0_10 = arith.constant 0 : index
    %c0_11 = arith.constant 0 : index
    %16 = vector.load %arg19[%c2, %c0_10, %c0_11] : memref<8x8x4xf32, #tpu.memory_space<vmem>>, vector<1x8x4xf32>
    %17 = vector.shape_cast %16 : vector<1x8x4xf32> to vector<8x4xf32>
    %18 = vector.shape_cast %15 : vector<8x4xf32> to vector<1x8x4xf32>
    tpu.vector_store %arg19[%c2, %c0_10, %c0_11], %18 {strides = array<i32>} : memref<8x8x4xf32, #tpu.memory_space<vmem>>, vector<1x8x4xf32>,
    %19 = vector.extract_strided_slice %6 {offsets = [0, 12], sizes = [8, 4], strides = [1, 1]} : vector<8x32xf32> to vector<8x4xf32>
    %c3 = arith.constant 3 : index
    %c0_12 = arith.constant 0 : index
    %c0_13 = arith.constant 0 : index
    %20 = vector.load %arg19[%c3, %c0_12, %c0_13] : memref<8x8x4xf32, #tpu.memory_space<vmem>>, vector<1x8x4xf32>
    %21 = vector.shape_cast %20 : vector<1x8x4xf32> to vector<8x4xf32>
    %22 = vector.shape_cast %19 : vector<8x4xf32> to vector<1x8x4xf32>
    tpu.vector_store %arg19[%c3, %c0_12, %c0_13], %22 {strides = array<i32>} : memref<8x8x4xf32, #tpu.memory_space<vmem>>, vector<1x8x4xf32>,
    %23 = vector.extract_strided_slice %6 {offsets = [0, 16], sizes = [8, 4], strides = [1, 1]} : vector<8x32xf32> to vector<8x4xf32>
    %c4 = arith.constant 4 : index
    %c0_14 = arith.constant 0 : index
    %c0_15 = arith.constant 0 : index
    %24 = vector.load %arg19[%c4, %c0_14, %c0_15] : memref<8x8x4xf32, #tpu.memory_space<vmem>>, vector<1x8x4xf32>
    %25 = vector.shape_cast %24 : vector<1x8x4xf32> to vector<8x4xf32>
    %26 = vector.shape_cast %23 : vector<8x4xf32> to vector<1x8x4xf32>
    tpu.vector_store %arg19[%c4, %c0_14, %c0_15], %26 {strides = array<i32>} : memref<8x8x4xf32, #tpu.memory_space<vmem>>, vector<1x8x4xf32>,
    %27 = vector.extract_strided_slice %6 {offsets = [0, 20], sizes = [8, 4], strides = [1, 1]} : vector<8x32xf32> to vector<8x4xf32>
    %c5 = arith.constant 5 : index
    %c0_16 = arith.constant 0 : index
    %c0_17 = arith.constant 0 : index
    %28 = vector.load %arg19[%c5, %c0_16, %c0_17] : memref<8x8x4xf32, #tpu.memory_space<vmem>>, vector<1x8x4xf32>
    %29 = vector.shape_cast %28 : vector<1x8x4xf32> to vector<8x4xf32>
    %30 = vector.shape_cast %27 : vector<8x4xf32> to vector<1x8x4xf32>
    tpu.vector_store %arg19[%c5, %c0_16, %c0_17], %30 {strides = array<i32>} : memref<8x8x4xf32, #tpu.memory_space<vmem>>, vector<1x8x4xf32>,
    %31 = vector.extract_strided_slice %6 {offsets = [0, 24], sizes = [8, 4], strides = [1, 1]} : vector<8x32xf32> to vector<8x4xf32>
    %c6 = arith.constant 6 : index
    %c0_18 = arith.constant 0 : index
    %c0_19 = arith.constant 0 : index
    %32 = vector.load %arg19[%c6, %c0_18, %c0_19] : memref<8x8x4xf32, #tpu.memory_space<vmem>>, vector<1x8x4xf32>
    %33 = vector.shape_cast %32 : vector<1x8x4xf32> to vector<8x4xf32>
    %34 = vector.shape_cast %31 : vector<8x4xf32> to vector<1x8x4xf32>
    tpu.vector_store %arg19[%c6, %c0_18, %c0_19], %34 {strides = array<i32>} : memref<8x8x4xf32, #tpu.memory_space<vmem>>, vector<1x8x4xf32>,
    %35 = vector.extract_strided_slice %6 {offsets = [0, 28], sizes = [8, 4], strides = [1, 1]} : vector<8x32xf32> to vector<8x4xf32>
    %c7 = arith.constant 7 : index
    %c0_20 = arith.constant 0 : index
    %c0_21 = arith.constant 0 : index
    %36 = vector.load %arg19[%c7, %c0_20, %c0_21] : memref<8x8x4xf32, #tpu.memory_space<vmem>>, vector<1x8x4xf32>
    %37 = vector.shape_cast %36 : vector<1x8x4xf32> to vector<8x4xf32>
    %38 = vector.shape_cast %35 : vector<8x4xf32> to vector<1x8x4xf32>
    tpu.vector_store %arg19[%c7, %c0_20, %c0_21], %38 {strides = array<i32>} : memref<8x8x4xf32, #tpu.memory_space<vmem>>, vector<1x8x4xf32>,
    %c0_22 = arith.constant 0 : index
    %c0_23 = arith.constant 0 : index
    %c0_24 = arith.constant 0 : index
    %39 = vector.load %arg19[%c0_22, %c0_23, %c0_24] : memref<8x8x4xf32, #tpu.memory_space<vmem>>, vector<8x8x4xf32>
    %cst_25 = arith.constant 0xFF800000 : f32
    %40 = vector.broadcast %cst_25 : f32 to vector<8x8x1xf32>
    %cst_26 = arith.constant 0.000000e+00 : f32
    %41 = vector.broadcast %cst_26 : f32 to vector<8x8x1xf32>
    %cst_27 = arith.constant 0.000000e+00 : f32
    %42 = vector.broadcast %cst_27 : f32 to vector<8x8x4xf32>
    %c0_28 = arith.constant 0 : index
    %c0_29 = arith.constant 0 : index
    %c0_30 = arith.constant 0 : index
    %43 = vector.load %arg17[%c0_28, %c0_29, %c0_30] : memref<8x8x4xf32, #tpu.memory_space<vmem>>, vector<8x8x4xf32>
    %c0_31 = arith.constant 0 : index
    %c0_32 = arith.constant 0 : index
    %c0_33 = arith.constant 0 : index
    %44 = vector.load %arg18[%c0_31, %c0_32, %c0_33] : memref<8x8x4xf32, #tpu.memory_space<vmem>>, vector<8x8x4xf32>
    "tpu.trace_start"() <{level = 10 : i32, message = "htd,hnd->htn"}> : () -> ()
    %cst_34 = arith.constant dense<0.000000e+00> : vector<8x8x8xf32>
    %45 = tpu.matmul %39, %43, %cst_34 {dimension_numbers = #tpu.dot_dimension_numbers<[2], [2], [1], [1], [0, 0, 0, 1, 1, 1], [0], [0]>} : vector<8x8x4xf32>, vector<8x8x4xf32>, vector<8x8x8xf32> -> vector<8x8x8xf32>
    "tpu.trace_stop"() : () -> ()
    %cst_35 = arith.constant dense<0xFF800000> : vector<8x8xf32>
    %46 = vector.multi_reduction <maximumf>, %45, %cst_35 [2] : vector<8x8x8xf32> to vector<8x8xf32>
    %47 = vector.shape_cast %46 : vector<8x8xf32> to vector<8x8x1xf32>
    %48 = arith.maximumf %40, %47 : vector<8x8x1xf32>
    %49 = arith.subf %40, %48 : vector<8x8x1xf32>
    %50 = math.exp %49 : vector<8x8x1xf32>
    %51 = vector.broadcast %48 : vector<8x8x1xf32> to vector<8x8x8xf32>
    %52 = arith.subf %45, %51 : vector<8x8x8xf32>
    %53 = math.exp %52 : vector<8x8x8xf32>
    %54 = arith.mulf %50, %41 : vector<8x8x1xf32>
    %cst_36 = arith.constant dense<0.000000e+00> : vector<8x8xf32>
    %55 = vector.multi_reduction <add>, %53, %cst_36 [2] : vector<8x8x8xf32> to vector<8x8xf32>
    %56 = vector.shape_cast %55 : vector<8x8xf32> to vector<8x8x1xf32>
    %57 = arith.addf %54, %56 : vector<8x8x1xf32>
    %58 = vector.broadcast %50 : vector<8x8x1xf32> to vector<8x8x4xf32>
    %59 = arith.mulf %58, %42 : vector<8x8x4xf32>
    "tpu.trace_start"() <{level = 10 : i32, message = "htn,hnd->htd"}> : () -> ()
    %cst_37 = arith.constant dense<0.000000e+00> : vector<8x8x4xf32>
    %60 = tpu.matmul %53, %44, %cst_37 {dimension_numbers = #tpu.dot_dimension_numbers<[2], [1], [1], [2], [0, 0, 0, 1, 1, 2], [0], [0]>} : vector<8x8x8xf32>, vector<8x8x4xf32>, vector<8x8x4xf32> -> vector<8x8x4xf32>
    "tpu.trace_stop"() : () -> ()
    %61 = arith.addf %59, %60 : vector<8x8x4xf32>
    %62 = tpu.reciprocal %57 {approx = true} : vector<8x8x1xf32> -> vector<8x8x1xf32>
    %63 = vector.broadcast %62 : vector<8x8x1xf32> to vector<8x8x4xf32>
    %64 = arith.mulf %61, %63 : vector<8x8x4xf32>
    %65 = vector.extract_strided_slice %64 {offsets = [0, 0, 0], sizes = [1, 8, 4], strides = [1, 1, 1]} : vector<8x8x4xf32> to vector<1x8x4xf32>
    %66 = vector.shape_cast %65 : vector<1x8x4xf32> to vector<8x4xf32>
    %c0_38 = arith.constant 0 : index
    %c0_39 = arith.constant 0 : index
    %67 = vector.load %arg20[%c0_38, %c0_39] : memref<8x32xf32, #tpu.memory_space<vmem>>, vector<8x4xf32>
    tpu.vector_store %arg20[%c0_38, %c0_39], %66 {strides = array<i32>} : memref<8x32xf32, #tpu.memory_space<vmem>>, vector<8x4xf32>,
    %68 = vector.extract_strided_slice %64 {offsets = [1, 0, 0], sizes = [1, 8, 4], strides = [1, 1, 1]} : vector<8x8x4xf32> to vector<1x8x4xf32>
    %69 = vector.shape_cast %68 : vector<1x8x4xf32> to vector<8x4xf32>
    %c0_40 = arith.constant 0 : index
    %c4_41 = arith.constant 4 : index
    %70 = vector.load %arg20[%c0_40, %c4_41] : memref<8x32xf32, #tpu.memory_space<vmem>>, vector<8x4xf32>
    tpu.vector_store %arg20[%c0_40, %c4_41], %69 {strides = array<i32>} : memref<8x32xf32, #tpu.memory_space<vmem>>, vector<8x4xf32>,
    %71 = vector.extract_strided_slice %64 {offsets = [2, 0, 0], sizes = [1, 8, 4], strides = [1, 1, 1]} : vector<8x8x4xf32> to vector<1x8x4xf32>
    %72 = vector.shape_cast %71 : vector<1x8x4xf32> to vector<8x4xf32>
    %c0_42 = arith.constant 0 : index
    %c8 = arith.constant 8 : index
    %73 = vector.load %arg20[%c0_42, %c8] : memref<8x32xf32, #tpu.memory_space<vmem>>, vector<8x4xf32>
    tpu.vector_store %arg20[%c0_42, %c8], %72 {strides = array<i32>} : memref<8x32xf32, #tpu.memory_space<vmem>>, vector<8x4xf32>,
    %74 = vector.extract_strided_slice %64 {offsets = [3, 0, 0], sizes = [1, 8, 4], strides = [1, 1, 1]} : vector<8x8x4xf32> to vector<1x8x4xf32>
    %75 = vector.shape_cast %74 : vector<1x8x4xf32> to vector<8x4xf32>
    %c0_43 = arith.constant 0 : index
    %c12 = arith.constant 12 : index
    %76 = vector.load %arg20[%c0_43, %c12] : memref<8x32xf32, #tpu.memory_space<vmem>>, vector<8x4xf32>
    tpu.vector_store %arg20[%c0_43, %c12], %75 {strides = array<i32>} : memref<8x32xf32, #tpu.memory_space<vmem>>, vector<8x4xf32>,
    %77 = vector.extract_strided_slice %64 {offsets = [4, 0, 0], sizes = [1, 8, 4], strides = [1, 1, 1]} : vector<8x8x4xf32> to vector<1x8x4xf32>
    %78 = vector.shape_cast %77 : vector<1x8x4xf32> to vector<8x4xf32>
    %c0_44 = arith.constant 0 : index
    %c16 = arith.constant 16 : index
    %79 = vector.load %arg20[%c0_44, %c16] : memref<8x32xf32, #tpu.memory_space<vmem>>, vector<8x4xf32>
    tpu.vector_store %arg20[%c0_44, %c16], %78 {strides = array<i32>} : memref<8x32xf32, #tpu.memory_space<vmem>>, vector<8x4xf32>,
    %80 = vector.extract_strided_slice %64 {offsets = [5, 0, 0], sizes = [1, 8, 4], strides = [1, 1, 1]} : vector<8x8x4xf32> to vector<1x8x4xf32>
    %81 = vector.shape_cast %80 : vector<1x8x4xf32> to vector<8x4xf32>
    %c0_45 = arith.constant 0 : index
    %c20 = arith.constant 20 : index
    %82 = vector.load %arg20[%c0_45, %c20] : memref<8x32xf32, #tpu.memory_space<vmem>>, vector<8x4xf32>
    tpu.vector_store %arg20[%c0_45, %c20], %81 {strides = array<i32>} : memref<8x32xf32, #tpu.memory_space<vmem>>, vector<8x4xf32>,
    %83 = vector.extract_strided_slice %64 {offsets = [6, 0, 0], sizes = [1, 8, 4], strides = [1, 1, 1]} : vector<8x8x4xf32> to vector<1x8x4xf32>
    %84 = vector.shape_cast %83 : vector<1x8x4xf32> to vector<8x4xf32>
    %c0_46 = arith.constant 0 : index
    %c24 = arith.constant 24 : index
    %85 = vector.load %arg20[%c0_46, %c24] : memref<8x32xf32, #tpu.memory_space<vmem>>, vector<8x4xf32>
    tpu.vector_store %arg20[%c0_46, %c24], %84 {strides = array<i32>} : memref<8x32xf32, #tpu.memory_space<vmem>>, vector<8x4xf32>,
    %86 = vector.extract_strided_slice %64 {offsets = [7, 0, 0], sizes = [1, 8, 4], strides = [1, 1, 1]} : vector<8x8x4xf32> to vector<1x8x4xf32>
    %87 = vector.shape_cast %86 : vector<1x8x4xf32> to vector<8x4xf32>
    %c0_47 = arith.constant 0 : index
    %c28 = arith.constant 28 : index
    %88 = vector.load %arg20[%c0_47, %c28] : memref<8x32xf32, #tpu.memory_space<vmem>>, vector<8x4xf32>
    tpu.vector_store %arg20[%c0_47, %c28], %87 {strides = array<i32>} : memref<8x32xf32, #tpu.memory_space<vmem>>, vector<8x4xf32>,
    %c0_48 = arith.constant 0 : index
    %c0_49 = arith.constant 0 : index
    %89 = vector.load %arg20[%c0_48, %c0_49] : memref<8x32xf32, #tpu.memory_space<vmem>>, vector<8x32xf32>
    %c0_50 = arith.constant 0 : index
    %c0_51 = arith.constant 0 : index
    %90 = vector.load %arg6[%c0_50, %c0_51] : memref<32x32xf32, #tpu.memory_space<vmem>>, vector<32x32xf32>
    %cst_52 = arith.constant dense<0.000000e+00> : vector<8x32xf32>
    %91 = tpu.matmul %89, %90, %cst_52 {dimension_numbers = #tpu.dot_dimension_numbers<[1], [0], [0], [1], [0, 0, 1, 1], [], []>} : vector<8x32xf32>, vector<32x32xf32>, vector<8x32xf32> -> vector<8x32xf32>
    %c0_53 = arith.constant 0 : index
    %c0_54 = arith.constant 0 : index
    %92 = vector.load %arg7[%c0_53, %c0_54] : memref<1x32xf32, #tpu.memory_space<vmem>>, vector<1x32xf32>
    %93 = vector.broadcast %92 : vector<1x32xf32> to vector<8x32xf32>
    %94 = arith.addf %91, %93 : vector<8x32xf32>
    %95 = arith.addf %4, %94 : vector<8x32xf32>
    %c0_55 = arith.constant 0 : index
    %c0_56 = arith.constant 0 : index
    %96 = vector.load %arg8[%c0_55, %c0_56] : memref<1x32xf32, #tpu.memory_space<vmem>>, vector<1x32xf32>
    %c0_57 = arith.constant 0 : index
    %c0_58 = arith.constant 0 : index
    %97 = vector.load %arg9[%c0_57, %c0_58] : memref<1x32xf32, #tpu.memory_space<vmem>>, vector<1x32xf32>
    %cst_59 = arith.constant dense<0.000000e+00> : vector<8xf32>
    %98 = vector.multi_reduction <add>, %95, %cst_59 [1] : vector<8x32xf32> to vector<8xf32>
    %99 = vector.shape_cast %98 : vector<8xf32> to vector<8x1xf32>
    %cst_60 = arith.constant 3.200000e+01 : f32
    %100 = vector.broadcast %cst_60 : f32 to vector<8x1xf32>
    %101 = arith.divf %99, %100 : vector<8x1xf32>
    %102 = vector.broadcast %101 : vector<8x1xf32> to vector<8x32xf32>
    %103 = arith.subf %95, %102 : vector<8x32xf32>
    %104 = arith.mulf %103, %103 : vector<8x32xf32>
    %cst_61 = arith.constant dense<0.000000e+00> : vector<8xf32>
    %105 = vector.multi_reduction <add>, %104, %cst_61 [1] : vector<8x32xf32> to vector<8xf32>
    %106 = vector.shape_cast %105 : vector<8xf32> to vector<8x1xf32>
    %cst_62 = arith.constant 3.200000e+01 : f32
    %107 = vector.broadcast %cst_62 : f32 to vector<8x1xf32>
    %108 = arith.divf %106, %107 : vector<8x1xf32>
    %109 = vector.broadcast %101 : vector<8x1xf32> to vector<8x32xf32>
    %110 = arith.subf %95, %109 : vector<8x32xf32>
    %cst_63 = arith.constant 9.99999974E-6 : f32
    %111 = vector.broadcast %cst_63 : f32 to vector<8x1xf32>
    %112 = arith.addf %108, %111 : vector<8x1xf32>
    %113 = math.rsqrt %112 : vector<8x1xf32>
    %114 = vector.broadcast %113 : vector<8x1xf32> to vector<8x32xf32>
    %115 = arith.mulf %110, %114 : vector<8x32xf32>
    %116 = vector.broadcast %96 : vector<1x32xf32> to vector<8x32xf32>
    %117 = arith.mulf %115, %116 : vector<8x32xf32>
    %118 = vector.broadcast %97 : vector<1x32xf32> to vector<8x32xf32>
    %119 = arith.addf %117, %118 : vector<8x32xf32>
    %c0_64 = arith.constant 0 : index
    %c0_65 = arith.constant 0 : index
    %120 = vector.load %arg10[%c0_64, %c0_65] : memref<32x128xf32, #tpu.memory_space<vmem>>, vector<32x128xf32>
    %cst_66 = arith.constant dense<0.000000e+00> : vector<8x128xf32>
    %121 = tpu.matmul %119, %120, %cst_66 {dimension_numbers = #tpu.dot_dimension_numbers<[1], [0], [0], [1], [0, 0, 1, 1], [], []>} : vector<8x32xf32>, vector<32x128xf32>, vector<8x128xf32> -> vector<8x128xf32>
    %c0_67 = arith.constant 0 : index
    %c0_68 = arith.constant 0 : index
    %122 = vector.load %arg11[%c0_67, %c0_68] : memref<1x128xf32, #tpu.memory_space<vmem>>, vector<1x128xf32>
    %123 = vector.broadcast %122 : vector<1x128xf32> to vector<8x128xf32>
    %124 = arith.addf %121, %123 : vector<8x128xf32>
    %cst_69 = arith.constant 5.000000e-01 : f32
    %125 = vector.broadcast %cst_69 : f32 to vector<8x128xf32>
    %126 = arith.mulf %125, %124 : vector<8x128xf32>
    %cst_70 = arith.constant 4.471500e-02 : f32
    %127 = vector.broadcast %cst_70 : f32 to vector<8x128xf32>
    %128 = arith.mulf %127, %124 : vector<8x128xf32>
    %129 = arith.mulf %128, %124 : vector<8x128xf32>
    %130 = arith.mulf %129, %124 : vector<8x128xf32>
    %131 = arith.addf %124, %130 : vector<8x128xf32>
    %cst_71 = arith.constant 0.797884583 : f32
    %132 = vector.broadcast %cst_71 : f32 to vector<8x128xf32>
    %133 = arith.mulf %132, %131 : vector<8x128xf32>
    %134 = math.tanh %133 : vector<8x128xf32>
    %cst_72 = arith.constant 1.000000e+00 : f32
    %135 = vector.broadcast %cst_72 : f32 to vector<8x128xf32>
    %136 = arith.addf %135, %134 : vector<8x128xf32>
    %137 = arith.mulf %126, %136 : vector<8x128xf32>
    %c0_73 = arith.constant 0 : index
    %c0_74 = arith.constant 0 : index
    %138 = vector.load %arg12[%c0_73, %c0_74] : memref<128x32xf32, #tpu.memory_space<vmem>>, vector<128x32xf32>
    %cst_75 = arith.constant dense<0.000000e+00> : vector<8x32xf32>
    %139 = tpu.matmul %137, %138, %cst_75 {dimension_numbers = #tpu.dot_dimension_numbers<[1], [0], [0], [1], [0, 0, 1, 1], [], []>} : vector<8x128xf32>, vector<128x32xf32>, vector<8x32xf32> -> vector<8x32xf32>
    %c0_76 = arith.constant 0 : index
    %c0_77 = arith.constant 0 : index
    %140 = vector.load %arg13[%c0_76, %c0_77] : memref<1x32xf32, #tpu.memory_space<vmem>>, vector<1x32xf32>
    %141 = vector.broadcast %140 : vector<1x32xf32> to vector<8x32xf32>
    %142 = arith.addf %139, %141 : vector<8x32xf32>
    %143 = arith.addf %119, %142 : vector<8x32xf32>
    %c0_78 = arith.constant 0 : index
    %c0_79 = arith.constant 0 : index
    %144 = vector.load %arg14[%c0_78, %c0_79] : memref<1x32xf32, #tpu.memory_space<vmem>>, vector<1x32xf32>
    %c0_80 = arith.constant 0 : index
    %c0_81 = arith.constant 0 : index
    %145 = vector.load %arg15[%c0_80, %c0_81] : memref<1x32xf32, #tpu.memory_space<vmem>>, vector<1x32xf32>
    %cst_82 = arith.constant dense<0.000000e+00> : vector<8xf32>
    %146 = vector.multi_reduction <add>, %143, %cst_82 [1] : vector<8x32xf32> to vector<8xf32>
    %147 = vector.shape_cast %146 : vector<8xf32> to vector<8x1xf32>
    %cst_83 = arith.constant 3.200000e+01 : f32
    %148 = vector.broadcast %cst_83 : f32 to vector<8x1xf32>
    %149 = arith.divf %147, %148 : vector<8x1xf32>
    %150 = vector.broadcast %149 : vector<8x1xf32> to vector<8x32xf32>
    %151 = arith.subf %143, %150 : vector<8x32xf32>
    %152 = arith.mulf %151, %151 : vector<8x32xf32>
    %cst_84 = arith.constant dense<0.000000e+00> : vector<8xf32>
    %153 = vector.multi_reduction <add>, %152, %cst_84 [1] : vector<8x32xf32> to vector<8xf32>
    %154 = vector.shape_cast %153 : vector<8xf32> to vector<8x1xf32>
    %cst_85 = arith.constant 3.200000e+01 : f32
    %155 = vector.broadcast %cst_85 : f32 to vector<8x1xf32>
    %156 = arith.divf %154, %155 : vector<8x1xf32>
    %157 = vector.broadcast %149 : vector<8x1xf32> to vector<8x32xf32>
    %158 = arith.subf %143, %157 : vector<8x32xf32>
    %cst_86 = arith.constant 9.99999974E-6 : f32
    %159 = vector.broadcast %cst_86 : f32 to vector<8x1xf32>
    %160 = arith.addf %156, %159 : vector<8x1xf32>
    %161 = math.rsqrt %160 : vector<8x1xf32>
    %162 = vector.broadcast %161 : vector<8x1xf32> to vector<8x32xf32>
    %163 = arith.mulf %158, %162 : vector<8x32xf32>
    %164 = vector.broadcast %144 : vector<1x32xf32> to vector<8x32xf32>
    %165 = arith.mulf %163, %164 : vector<8x32xf32>
    %166 = vector.broadcast %145 : vector<1x32xf32> to vector<8x32xf32>
    %167 = arith.addf %165, %166 : vector<8x32xf32>
    %c0_87 = arith.constant 0 : index
    %c0_88 = arith.constant 0 : index
    %c0_89 = arith.constant 0 : index
    %168 = vector.load %arg16[%c0_87, %c0_88, %c0_89] : memref<1x8x32xf32, #tpu.memory_space<vmem>>, vector<1x8x32xf32>
    %169 = vector.shape_cast %168 : vector<1x8x32xf32> to vector<8x32xf32>
    %170 = vector.shape_cast %167 : vector<8x32xf32> to vector<1x8x32xf32>
    tpu.vector_store %arg16[%c0_87, %c0_88, %c0_89], %170 {strides = array<i32>} : memref<1x8x32xf32, #tpu.memory_space<vmem>>, vector<1x8x32xf32>,
    return
  }
  func.func @transform_0(%arg0: i32, %arg1: i32) -> (i32, i32, i32) {
    %c0_i32 = arith.constant 0 : i32
    %c0_i32_0 = arith.constant 0 : i32
    return %arg0, %arg1, %c0_i32 : i32, i32, i32
  }
  func.func @transform_1(%arg0: i32, %arg1: i32) -> (i32, i32, i32) {
    %c0_i32 = arith.constant 0 : i32
    %c0_i32_0 = arith.constant 0 : i32
    %c0_i32_1 = arith.constant 0 : i32
    return %arg0, %c0_i32, %c0_i32_0 : i32, i32, i32
  }
  func.func @transform_2(%arg0: i32, %arg1: i32) -> (i32, i32) {
    %c0_i32 = arith.constant 0 : i32
    %c0_i32_0 = arith.constant 0 : i32
    %c0_i32_1 = arith.constant 0 : i32
    return %c0_i32, %c0_i32_0 : i32, i32
  }
  func.func @transform_3(%arg0: i32, %arg1: i32) -> (i32, i32) {
    %c0_i32 = arith.constant 0 : i32
    %c0_i32_0 = arith.constant 0 : i32
    %c0_i32_1 = arith.constant 0 : i32
    return %c0_i32, %c0_i32_0 : i32, i32
  }
  func.func @transform_4(%arg0: i32, %arg1: i32) -> (i32, i32) {
    %c0_i32 = arith.constant 0 : i32
    %c0_i32_0 = arith.constant 0 : i32
    %c0_i32_1 = arith.constant 0 : i32
    return %c0_i32, %c0_i32_0 : i32, i32
  }
  func.func @transform_5(%arg0: i32, %arg1: i32) -> (i32, i32) {
    %c0_i32 = arith.constant 0 : i32
    %c0_i32_0 = arith.constant 0 : i32
    %c0_i32_1 = arith.constant 0 : i32
    return %c0_i32, %c0_i32_0 : i32, i32
  }
  func.func @transform_6(%arg0: i32, %arg1: i32) -> (i32, i32) {
    %c0_i32 = arith.constant 0 : i32
    %c0_i32_0 = arith.constant 0 : i32
    %c0_i32_1 = arith.constant 0 : i32
    return %c0_i32, %c0_i32_0 : i32, i32
  }
  func.func @transform_7(%arg0: i32, %arg1: i32) -> (i32, i32) {
    %c0_i32 = arith.constant 0 : i32
    %c0_i32_0 = arith.constant 0 : i32
    %c0_i32_1 = arith.constant 0 : i32
    return %c0_i32, %c0_i32_0 : i32, i32
  }
  func.func @transform_8(%arg0: i32, %arg1: i32) -> (i32, i32) {
    %c0_i32 = arith.constant 0 : i32
    %c0_i32_0 = arith.constant 0 : i32
    %c0_i32_1 = arith.constant 0 : i32
    return %c0_i32, %c0_i32_0 : i32, i32
  }
  func.func @transform_9(%arg0: i32, %arg1: i32) -> (i32, i32) {
    %c0_i32 = arith.constant 0 : i32
    %c0_i32_0 = arith.constant 0 : i32
    %c0_i32_1 = arith.constant 0 : i32
    return %c0_i32, %c0_i32_0 : i32, i32
  }
  func.func @transform_10(%arg0: i32, %arg1: i32) -> (i32, i32) {
    %c0_i32 = arith.constant 0 : i32
    %c0_i32_0 = arith.constant 0 : i32
    %c0_i32_1 = arith.constant 0 : i32
    return %c0_i32, %c0_i32_0 : i32, i32
  }
  func.func @transform_11(%arg0: i32, %arg1: i32) -> (i32, i32) {
    %c0_i32 = arith.constant 0 : i32
    %c0_i32_0 = arith.constant 0 : i32
    %c0_i32_1 = arith.constant 0 : i32
    return %c0_i32, %c0_i32_0 : i32, i32
  }
  func.func @transform_12(%arg0: i32, %arg1: i32) -> (i32, i32) {
    %c0_i32 = arith.constant 0 : i32
    %c0_i32_0 = arith.constant 0 : i32
    %c0_i32_1 = arith.constant 0 : i32
    return %c0_i32, %c0_i32_0 : i32, i32
  }
  func.func @transform_13(%arg0: i32, %arg1: i32) -> (i32, i32) {
    %c0_i32 = arith.constant 0 : i32
    %c0_i32_0 = arith.constant 0 : i32
    %c0_i32_1 = arith.constant 0 : i32
    return %c0_i32, %c0_i32_0 : i32, i32
  }
  func.func @transform_14(%arg0: i32, %arg1: i32) -> (i32, i32, i32) {
    %c0_i32 = arith.constant 0 : i32
    %c0_i32_0 = arith.constant 0 : i32
    return %arg0, %arg1, %c0_i32 : i32, i32, i32
  }
}

module attributes {stable_mosaic.version = 11 : i64} {
  func.func @_block_kernel(%arg0: i32, %arg1: i32, %arg2: memref<1x8x32xf32, #tpu.memory_space<vmem>>, %arg3: memref<1x8x32xf32, #tpu.memory_space<vmem>>, %arg4: memref<32x32xf32, #tpu.memory_space<vmem>>, %arg5: memref<32x64xf32, #tpu.memory_space<vmem>>, %arg6: memref<32x32xf32, #tpu.memory_space<vmem>>, %arg7: memref<1x32xf32, #tpu.memory_space<vmem>>, %arg8: memref<1x32xf32, #tpu.memory_space<vmem>>, %arg9: memref<1x32xf32, #tpu.memory_space<vmem>>, %arg10: memref<32x128xf32, #tpu.memory_space<vmem>>, %arg11: memref<1x128xf32, #tpu.memory_space<vmem>>, %arg12: memref<128x32xf32, #tpu.memory_space<vmem>>, %arg13: memref<1x32xf32, #tpu.memory_space<vmem>>, %arg14: memref<1x32xf32, #tpu.memory_space<vmem>>, %arg15: memref<1x32xf32, #tpu.memory_space<vmem>>, %arg16: memref<1x8x32xf32, #tpu.memory_space<vmem>>, %arg17: memref<8x8x4xf32, #tpu.memory_space<vmem>>, %arg18: memref<8x8x4xf32, #tpu.memory_space<vmem>>, %arg19: memref<8x8x4xf32, #tpu.memory_space<vmem>>, %arg20: memref<8x32xf32, #tpu.memory_space<vmem>>) attributes {dimension_semantics = [#tpu.dimension_semantics<parallel>, #tpu.dimension_semantics<arbitrary>], iteration_bounds = array<i64: 2, 1>, scalar_prefetch = 0 : i64, scratch_operands = 4 : i64, tpu.core_type = #tpu.core_type<tc>, window_params = [{transform_indices = @transform_0, window_bounds = array<i64: 1, 8, 32>}, {transform_indices = @transform_1, window_bounds = array<i64: 1, 8, 32>}, {pipeline_mode = #tpu.pipeline_mode<synchronous>, transform_indices = @transform_2, window_bounds = array<i64: 32, 32>}, {pipeline_mode = #tpu.pipeline_mode<synchronous>, transform_indices = @transform_3, window_bounds = array<i64: 32, 64>}, {pipeline_mode = #tpu.pipeline_mode<synchronous>, transform_indices = @transform_4, window_bounds = array<i64: 32, 32>}, {pipeline_mode = #tpu.pipeline_mode<synchronous>, transform_indices = @transform_5, window_bounds = array<i64: 1, 32>}, {pipeline_mode = #tpu.pipeline_mode<synchronous>, transform_indices = @transform_6, window_bounds = array<i64: 1, 32>}, {pipeline_mode = #tpu.pipeline_mode<synchronous>, transform_indices = @transform_7, window_bounds = array<i64: 1, 32>}, {pipeline_mode = #tpu.pipeline_mode<synchronous>, transform_indices = @transform_8, window_bounds = array<i64: 32, 128>}, {pipeline_mode = #tpu.pipeline_mode<synchronous>, transform_indices = @transform_9, window_bounds = array<i64: 1, 128>}, {pipeline_mode = #tpu.pipeline_mode<synchronous>, transform_indices = @transform_10, window_bounds = array<i64: 128, 32>}, {pipeline_mode = #tpu.pipeline_mode<synchronous>, transform_indices = @transform_11, window_bounds = array<i64: 1, 32>}, {pipeline_mode = #tpu.pipeline_mode<synchronous>, transform_indices = @transform_12, window_bounds = array<i64: 1, 32>}, {pipeline_mode = #tpu.pipeline_mode<synchronous>, transform_indices = @transform_13, window_bounds = array<i64: 1, 32>}, {transform_indices = @transform_14, window_bounds = array<i64: 1, 8, 32>}]} {
    %c0_i32 = arith.constant 0 : i32
    %0 = arith.cmpi eq, %arg1, %c0_i32 : i32
    %1 = arith.extui %0 : i1 to i32
    %c0_i32_0 = arith.constant 0 : i32
    %2 = arith.cmpi ne, %1, %c0_i32_0 : i32
    scf.if %2 {
      %c0_90 = arith.constant 0 : index
      %c0_91 = arith.constant 0 : index
      %c0_92 = arith.constant 0 : index
      %171 = vector.load %arg3[%c0_90, %c0_91, %c0_92] : memref<1x8x32xf32, #tpu.memory_space<vmem>>, vector<1x8x32xf32>
      %172 = vector.shape_cast %171 : vector<1x8x32xf32> to vector<8x32xf32>
      %c0_93 = arith.constant 0 : index
      %c0_94 = arith.constant 0 : index
      %173 = vector.load %arg5[%c0_93, %c0_94] : memref<32x64xf32, #tpu.memory_space<vmem>>, vector<32x64xf32>
      %cst_95 = arith.constant dense<0.000000e+00> : vector<8x64xf32>
      %174 = tpu.matmul %172, %173, %cst_95 {dimension_numbers = #tpu.dot_dimension_numbers<[1], [0], [0], [1], [0, 0, 1, 1], [], []>} : vector<8x32xf32>, vector<32x64xf32>, vector<8x64xf32> -> vector<8x64xf32>
      %175 = vector.extract_strided_slice %174 {offsets = [0, 0], sizes = [8, 4], strides = [1, 1]} : vector<8x64xf32> to vector<8x4xf32>
      %c0_96 = arith.constant 0 : index
      %c0_97 = arith.constant 0 : index
      %c0_98 = arith.constant 0 : index
      %176 = vector.load %arg17[%c0_96, %c0_97, %c0_98] : memref<8x8x4xf32, #tpu.memory_space<vmem>>, vector<1x8x4xf32>
      %177 = vector.shape_cast %176 : vector<1x8x4xf32> to vector<8x4xf32>
      %178 = vector.shape_cast %175 : vector<8x4xf32> to vector<1x8x4xf32>
      tpu.vector_store %arg17[%c0_96, %c0_97, %c0_98], %178 {strides = array<i32>} : memref<8x8x4xf32, #tpu.memory_space<vmem>>, vector<1x8x4xf32>,
      %179 = vector.extract_strided_slice %174 {offsets = [0, 32], sizes = [8, 4], strides = [1, 1]} : vector<8x64xf32> to vector<8x4xf32>
      %c0_99 = arith.constant 0 : index
      %c0_100 = arith.constant 0 : index
      %c0_101 = arith.constant 0 : index
      %180 = vector.load %arg18[%c0_99, %c0_100, %c0_101] : memref<8x8x4xf32, #tpu.memory_space<vmem>>, vector<1x8x4xf32>
      %181 = vector.shape_cast %180 : vector<1x8x4xf32> to vector<8x4xf32>
      %182 = vector.shape_cast %179 : vector<8x4xf32> to vector<1x8x4xf32>
      tpu.vector_store %arg18[%c0_99, %c0_100, %c0_101], %182 {strides = array<i32>} : memref<8x8x4xf32, #tpu.memory_space<vmem>>, vector<1x8x4xf32>,
      %183 = vector.extract_strided_slice %174 {offsets = [0, 4], sizes = [8, 4], strides = [1, 1]} : vector<8x64xf32> to vector<8x4xf32>
      %c1_102 = arith.constant 1 : index
      %c0_103 = arith.constant 0 : index
      %c0_104 = arith.constant 0 : index
      %184 = vector.load %arg17[%c1_102, %c0_103, %c0_104] : memref<8x8x4xf32, #tpu.memory_space<vmem>>, vector<1x8x4xf32>
      %185 = vector.shape_cast %184 : vector<1x8x4xf32> to vector<8x4xf32>
      %186 = vector.shape_cast %183 : vector<8x4xf32> to vector<1x8x4xf32>
      tpu.vector_store %arg17[%c1_102, %c0_103, %c0_104], %186 {strides = array<i32>} : memref<8x8x4xf32, #tpu.memory_space<vmem>>, vector<1x8x4xf32>,
      %187 = vector.extract_strided_slice %174 {offsets = [0, 36], sizes = [8, 4], strides = [1, 1]} : vector<8x64xf32> to vector<8x4xf32>
      %c1_105 = arith.constant 1 : index
      %c0_106 = arith.constant 0 : index
      %c0_107 = arith.constant 0 : index
      %188 = vector.load %arg18[%c1_105, %c0_106, %c0_107] : memref<8x8x4xf32, #tpu.memory_space<vmem>>, vector<1x8x4xf32>
      %189 = vector.shape_cast %188 : vector<1x8x4xf32> to vector<8x4xf32>
      %190 = vector.shape_cast %187 : vector<8x4xf32> to vector<1x8x4xf32>
      tpu.vector_store %arg18[%c1_105, %c0_106, %c0_107], %190 {strides = array<i32>} : memref<8x8x4xf32, #tpu.memory_space<vmem>>, vector<1x8x4xf32>,
      %191 = vector.extract_strided_slice %174 {offsets = [0, 8], sizes = [8, 4], strides = [1, 1]} : vector<8x64xf32> to vector<8x4xf32>
      %c2_108 = arith.constant 2 : index
      %c0_109 = arith.constant 0 : index
      %c0_110 = arith.constant 0 : index
      %192 = vector.load %arg17[%c2_108, %c0_109, %c0_110] : memref<8x8x4xf32, #tpu.memory_space<vmem>>, vector<1x8x4xf32>
      %193 = vector.shape_cast %192 : vector<1x8x4xf32> to vector<8x4xf32>
      %194 = vector.shape_cast %191 : vector<8x4xf32> to vector<1x8x4xf32>
      tpu.vector_store %arg17[%c2_108, %c0_109, %c0_110], %194 {strides = array<i32>} : memref<8x8x4xf32, #tpu.memory_space<vmem>>, vector<1x8x4xf32>,
      %195 = vector.extract_strided_slice %174 {offsets = [0, 40], sizes = [8, 4], strides = [1, 1]} : vector<8x64xf32> to vector<8x4xf32>
      %c2_111 = arith.constant 2 : index
      %c0_112 = arith.constant 0 : index
      %c0_113 = arith.constant 0 : index
      %196 = vector.load %arg18[%c2_111, %c0_112, %c0_113] : memref<8x8x4xf32, #tpu.memory_space<vmem>>, vector<1x8x4xf32>
      %197 = vector.shape_cast %196 : vector<1x8x4xf32> to vector<8x4xf32>
      %198 = vector.shape_cast %195 : vector<8x4xf32> to vector<1x8x4xf32>
      tpu.vector_store %arg18[%c2_111, %c0_112, %c0_113], %198 {strides = array<i32>} : memref<8x8x4xf32, #tpu.memory_space<vmem>>, vector<1x8x4xf32>,
      %199 = vector.extract_strided_slice %174 {offsets = [0, 12], sizes = [8, 4], strides = [1, 1]} : vector<8x64xf32> to vector<8x4xf32>
      %c3_114 = arith.constant 3 : index
      %c0_115 = arith.constant 0 : index
      %c0_116 = arith.constant 0 : index
      %200 = vector.load %arg17[%c3_114, %c0_115, %c0_116] : memref<8x8x4xf32, #tpu.memory_space<vmem>>, vector<1x8x4xf32>
      %201 = vector.shape_cast %200 : vector<1x8x4xf32> to vector<8x4xf32>
      %202 = vector.shape_cast %199 : vector<8x4xf32> to vector<1x8x4xf32>
      tpu.vector_store %arg17[%c3_114, %c0_115, %c0_116], %202 {strides = array<i32>} : memref<8x8x4xf32, #tpu.memory_space<vmem>>, vector<1x8x4xf32>,
      %203 = vector.extract_strided_slice %174 {offsets = [0, 44], sizes = [8, 4], strides = [1, 1]} : vector<8x64xf32> to vector<8x4xf32>
      %c3_117 = arith.constant 3 : index
      %c0_118 = arith.constant 0 : index
      %c0_119 = arith.constant 0 : index
      %204 = vector.load %arg18[%c3_117, %c0_118, %c0_119] : memref<8x8x4xf32, #tpu.memory_space<vmem>>, vector<1x8x4xf32>
      %205 = vector.shape_cast %204 : vector<1x8x4xf32> to vector<8x4xf32>
      %206 = vector.shape_cast %203 : vector<8x4xf32> to vector<1x8x4xf32>
      tpu.vector_store %arg18[%c3_117, %c0_118, %c0_119], %206 {strides = array<i32>} : memref<8x8x4xf32, #tpu.memory_space<vmem>>, vector<1x8x4xf32>,
      %207 = vector.extract_strided_slice %174 {offsets = [0, 16], sizes = [8, 4], strides = [1, 1]} : vector<8x64xf32> to vector<8x4xf32>
      %c4_120 = arith.constant 4 : index
      %c0_121 = arith.constant 0 : index
      %c0_122 = arith.constant 0 : index
      %208 = vector.load %arg17[%c4_120, %c0_121, %c0_122] : memref<8x8x4xf32, #tpu.memory_space<vmem>>, vector<1x8x4xf32>
      %209 = vector.shape_cast %208 : vector<1x8x4xf32> to vector<8x4xf32>
      %210 = vector.shape_cast %207 : vector<8x4xf32> to vector<1x8x4xf32>
      tpu.vector_store %arg17[%c4_120, %c0_121, %c0_122], %210 {strides = array<i32>} : memref<8x8x4xf32, #tpu.memory_space<vmem>>, vector<1x8x4xf32>,
      %211 = vector.extract_strided_slice %174 {offsets = [0, 48], sizes = [8, 4], strides = [1, 1]} : vector<8x64xf32> to vector<8x4xf32>
      %c4_123 = arith.constant 4 : index
      %c0_124 = arith.constant 0 : index
      %c0_125 = arith.constant 0 : index
      %212 = vector.load %arg18[%c4_123, %c0_124, %c0_125] : memref<8x8x4xf32, #tpu.memory_space<vmem>>, vector<1x8x4xf32>
      %213 = vector.shape_cast %212 : vector<1x8x4xf32> to vector<8x4xf32>
      %214 = vector.shape_cast %211 : vector<8x4xf32> to vector<1x8x4xf32>
      tpu.vector_store %arg18[%c4_123, %c0_124, %c0_125], %214 {strides = array<i32>} : memref<8x8x4xf32, #tpu.memory_space<vmem>>, vector<1x8x4xf32>,
      %215 = vector.extract_strided_slice %174 {offsets = [0, 20], sizes = [8, 4], strides = [1, 1]} : vector<8x64xf32> to vector<8x4xf32>
      %c5_126 = arith.constant 5 : index
      %c0_127 = arith.constant 0 : index
      %c0_128 = arith.constant 0 : index
      %216 = vector.load %arg17[%c5_126, %c0_127, %c0_128] : memref<8x8x4xf32, #tpu.memory_space<vmem>>, vector<1x8x4xf32>
      %217 = vector.shape_cast %216 : vector<1x8x4xf32> to vector<8x4xf32>
      %218 = vector.shape_cast %215 : vector<8x4xf32> to vector<1x8x4xf32>
      tpu.vector_store %arg17[%c5_126, %c0_127, %c0_128], %218 {strides = array<i32>} : memref<8x8x4xf32, #tpu.memory_space<vmem>>, vector<1x8x4xf32>,
      %219 = vector.extract_strided_slice %174 {offsets = [0, 52], sizes = [8, 4], strides = [1, 1]} : vector<8x64xf32> to vector<8x4xf32>
      %c5_129 = arith.constant 5 : index
      %c0_130 = arith.constant 0 : index
      %c0_131 = arith.constant 0 : index
      %220 = vector.load %arg18[%c5_129, %c0_130, %c0_131] : memref<8x8x4xf32, #tpu.memory_space<vmem>>, vector<1x8x4xf32>
      %221 = vector.shape_cast %220 : vector<1x8x4xf32> to vector<8x4xf32>
      %222 = vector.shape_cast %219 : vector<8x4xf32> to vector<1x8x4xf32>
      tpu.vector_store %arg18[%c5_129, %c0_130, %c0_131], %222 {strides = array<i32>} : memref<8x8x4xf32, #tpu.memory_space<vmem>>, vector<1x8x4xf32>,
      %223 = vector.extract_strided_slice %174 {offsets = [0, 24], sizes = [8, 4], strides = [1, 1]} : vector<8x64xf32> to vector<8x4xf32>
      %c6_132 = arith.constant 6 : index
      %c0_133 = arith.constant 0 : index
      %c0_134 = arith.constant 0 : index
      %224 = vector.load %arg17[%c6_132, %c0_133, %c0_134] : memref<8x8x4xf32, #tpu.memory_space<vmem>>, vector<1x8x4xf32>
      %225 = vector.shape_cast %224 : vector<1x8x4xf32> to vector<8x4xf32>
      %226 = vector.shape_cast %223 : vector<8x4xf32> to vector<1x8x4xf32>
      tpu.vector_store %arg17[%c6_132, %c0_133, %c0_134], %226 {strides = array<i32>} : memref<8x8x4xf32, #tpu.memory_space<vmem>>, vector<1x8x4xf32>,
      %227 = vector.extract_strided_slice %174 {offsets = [0, 56], sizes = [8, 4], strides = [1, 1]} : vector<8x64xf32> to vector<8x4xf32>
      %c6_135 = arith.constant 6 : index
      %c0_136 = arith.constant 0 : index
      %c0_137 = arith.constant 0 : index
      %228 = vector.load %arg18[%c6_135, %c0_136, %c0_137] : memref<8x8x4xf32, #tpu.memory_space<vmem>>, vector<1x8x4xf32>
      %229 = vector.shape_cast %228 : vector<1x8x4xf32> to vector<8x4xf32>
      %230 = vector.shape_cast %227 : vector<8x4xf32> to vector<1x8x4xf32>
      tpu.vector_store %arg18[%c6_135, %c0_136, %c0_137], %230 {strides = array<i32>} : memref<8x8x4xf32, #tpu.memory_space<vmem>>, vector<1x8x4xf32>,
      %231 = vector.extract_strided_slice %174 {offsets = [0, 28], sizes = [8, 4], strides = [1, 1]} : vector<8x64xf32> to vector<8x4xf32>
      %c7_138 = arith.constant 7 : index
      %c0_139 = arith.constant 0 : index
      %c0_140 = arith.constant 0 : index
      %232 = vector.load %arg17[%c7_138, %c0_139, %c0_140] : memref<8x8x4xf32, #tpu.memory_space<vmem>>, vector<1x8x4xf32>
      %233 = vector.shape_cast %232 : vector<1x8x4xf32> to vector<8x4xf32>
      %234 = vector.shape_cast %231 : vector<8x4xf32> to vector<1x8x4xf32>
      tpu.vector_store %arg17[%c7_138, %c0_139, %c0_140], %234 {strides = array<i32>} : memref<8x8x4xf32, #tpu.memory_space<vmem>>, vector<1x8x4xf32>,
      %235 = vector.extract_strided_slice %174 {offsets = [0, 60], sizes = [8, 4], strides = [1, 1]} : vector<8x64xf32> to vector<8x4xf32>
      %c7_141 = arith.constant 7 : index
      %c0_142 = arith.constant 0 : index
      %c0_143 = arith.constant 0 : index
      %236 = vector.load %arg18[%c7_141, %c0_142, %c0_143] : memref<8x8x4xf32, #tpu.memory_space<vmem>>, vector<1x8x4xf32>
      %237 = vector.shape_cast %236 : vector<1x8x4xf32> to vector<8x4xf32>
      %238 = vector.shape_cast %235 : vector<8x4xf32> to vector<1x8x4xf32>
      tpu.vector_store %arg18[%c7_141, %c0_142, %c0_143], %238 {strides = array<i32>} : memref<8x8x4xf32, #tpu.memory_space<vmem>>, vector<1x8x4xf32>,
    } else {
    }
    %c0 = arith.constant 0 : index
    %c0_1 = arith.constant 0 : index
    %c0_2 = arith.constant 0 : index
    %3 = vector.load %arg2[%c0, %c0_1, %c0_2] : memref<1x8x32xf32, #tpu.memory_space<vmem>>, vector<1x8x32xf32>
    %4 = vector.shape_cast %3 : vector<1x8x32xf32> to vector<8x32xf32>
    %c0_3 = arith.constant 0 : index
    %c0_4 = arith.constant 0 : index
    %5 = vector.load %arg4[%c0_3, %c0_4] : memref<32x32xf32, #tpu.memory_space<vmem>>, vector<32x32xf32>
    %cst = arith.constant dense<0.000000e+00> : vector<8x32xf32>
    %6 = tpu.matmul %4, %5, %cst {dimension_numbers = #tpu.dot_dimension_numbers<[1], [0], [0], [1], [0, 0, 1, 1], [], []>} : vector<8x32xf32>, vector<32x32xf32>, vector<8x32xf32> -> vector<8x32xf32>
    %7 = vector.extract_strided_slice %6 {offsets = [0, 0], sizes = [8, 4], strides = [1, 1]} : vector<8x32xf32> to vector<8x4xf32>
    %c0_5 = arith.constant 0 : index
    %c0_6 = arith.constant 0 : index
    %c0_7 = arith.constant 0 : index
    %8 = vector.load %arg19[%c0_5, %c0_6, %c0_7] : memref<8x8x4xf32, #tpu.memory_space<vmem>>, vector<1x8x4xf32>
    %9 = vector.shape_cast %8 : vector<1x8x4xf32> to vector<8x4xf32>
    %10 = vector.shape_cast %7 : vector<8x4xf32> to vector<1x8x4xf32>
    tpu.vector_store %arg19[%c0_5, %c0_6, %c0_7], %10 {strides = array<i32>} : memref<8x8x4xf32, #tpu.memory_space<vmem>>, vector<1x8x4xf32>,
    %11 = vector.extract_strided_slice %6 {offsets = [0, 4], sizes = [8, 4], strides = [1, 1]} : vector<8x32xf32> to vector<8x4xf32>
    %c1 = arith.constant 1 : index
    %c0_8 = arith.constant 0 : index
    %c0_9 = arith.constant 0 : index
    %12 = vector.load %arg19[%c1, %c0_8, %c0_9] : memref<8x8x4xf32, #tpu.memory_space<vmem>>, vector<1x8x4xf32>
    %13 = vector.shape_cast %12 : vector<1x8x4xf32> to vector<8x4xf32>
    %14 = vector.shape_cast %11 : vector<8x4xf32> to vector<1x8x4xf32>
    tpu.vector_store %arg19[%c1, %c0_8, %c0_9], %14 {strides = array<i32>} : memref<8x8x4xf32, #tpu.memory_space<vmem>>, vector<1x8x4xf32>,
    %15 = vector.extract_strided_slice %6 {offsets = [0, 8], sizes = [8, 4], strides = [1, 1]} : vector<8x32xf32> to vector<8x4xf32>
    %c2 = arith.constant 2 : index
    %c0_10 = arith.constant 0 : index
    %c0_11 = arith.constant 0 : index
    %16 = vector.load %arg19[%c2, %c0_10, %c0_11] : memref<8x8x4xf32, #tpu.memory_space<vmem>>, vector<1x8x4xf32>
    %17 = vector.shape_cast %16 : vector<1x8x4xf32> to vector<8x4xf32>
    %18 = vector.shape_cast %15 : vector<8x4xf32> to vector<1x8x4xf32>
    tpu.vector_store %arg19[%c2, %c0_10, %c0_11], %18 {strides = array<i32>} : memref<8x8x4xf32, #tpu.memory_space<vmem>>, vector<1x8x4xf32>,
    %19 = vector.extract_strided_slice %6 {offsets = [0, 12], sizes = [8, 4], strides = [1, 1]} : vector<8x32xf32> to vector<8x4xf32>
    %c3 = arith.constant 3 : index
    %c0_12 = arith.constant 0 : index
    %c0_13 = arith.constant 0 : index
    %20 = vector.load %arg19[%c3, %c0_12, %c0_13] : memref<8x8x4xf32, #tpu.memory_space<vmem>>, vector<1x8x4xf32>
    %21 = vector.shape_cast %20 : vector<1x8x4xf32> to vector<8x4xf32>
    %22 = vector.shape_cast %19 : vector<8x4xf32> to vector<1x8x4xf32>
    tpu.vector_store %arg19[%c3, %c0_12, %c0_13], %22 {strides = array<i32>} : memref<8x8x4xf32, #tpu.memory_space<vmem>>, vector<1x8x4xf32>,
    %23 = vector.extract_strided_slice %6 {offsets = [0, 16], sizes = [8, 4], strides = [1, 1]} : vector<8x32xf32> to vector<8x4xf32>
    %c4 = arith.constant 4 : index
    %c0_14 = arith.constant 0 : index
    %c0_15 = arith.constant 0 : index
    %24 = vector.load %arg19[%c4, %c0_14, %c0_15] : memref<8x8x4xf32, #tpu.memory_space<vmem>>, vector<1x8x4xf32>
    %25 = vector.shape_cast %24 : vector<1x8x4xf32> to vector<8x4xf32>
    %26 = vector.shape_cast %23 : vector<8x4xf32> to vector<1x8x4xf32>
    tpu.vector_store %arg19[%c4, %c0_14, %c0_15], %26 {strides = array<i32>} : memref<8x8x4xf32, #tpu.memory_space<vmem>>, vector<1x8x4xf32>,
    %27 = vector.extract_strided_slice %6 {offsets = [0, 20], sizes = [8, 4], strides = [1, 1]} : vector<8x32xf32> to vector<8x4xf32>
    %c5 = arith.constant 5 : index
    %c0_16 = arith.constant 0 : index
    %c0_17 = arith.constant 0 : index
    %28 = vector.load %arg19[%c5, %c0_16, %c0_17] : memref<8x8x4xf32, #tpu.memory_space<vmem>>, vector<1x8x4xf32>
    %29 = vector.shape_cast %28 : vector<1x8x4xf32> to vector<8x4xf32>
    %30 = vector.shape_cast %27 : vector<8x4xf32> to vector<1x8x4xf32>
    tpu.vector_store %arg19[%c5, %c0_16, %c0_17], %30 {strides = array<i32>} : memref<8x8x4xf32, #tpu.memory_space<vmem>>, vector<1x8x4xf32>,
    %31 = vector.extract_strided_slice %6 {offsets = [0, 24], sizes = [8, 4], strides = [1, 1]} : vector<8x32xf32> to vector<8x4xf32>
    %c6 = arith.constant 6 : index
    %c0_18 = arith.constant 0 : index
    %c0_19 = arith.constant 0 : index
    %32 = vector.load %arg19[%c6, %c0_18, %c0_19] : memref<8x8x4xf32, #tpu.memory_space<vmem>>, vector<1x8x4xf32>
    %33 = vector.shape_cast %32 : vector<1x8x4xf32> to vector<8x4xf32>
    %34 = vector.shape_cast %31 : vector<8x4xf32> to vector<1x8x4xf32>
    tpu.vector_store %arg19[%c6, %c0_18, %c0_19], %34 {strides = array<i32>} : memref<8x8x4xf32, #tpu.memory_space<vmem>>, vector<1x8x4xf32>,
    %35 = vector.extract_strided_slice %6 {offsets = [0, 28], sizes = [8, 4], strides = [1, 1]} : vector<8x32xf32> to vector<8x4xf32>
    %c7 = arith.constant 7 : index
    %c0_20 = arith.constant 0 : index
    %c0_21 = arith.constant 0 : index
    %36 = vector.load %arg19[%c7, %c0_20, %c0_21] : memref<8x8x4xf32, #tpu.memory_space<vmem>>, vector<1x8x4xf32>
    %37 = vector.shape_cast %36 : vector<1x8x4xf32> to vector<8x4xf32>
    %38 = vector.shape_cast %35 : vector<8x4xf32> to vector<1x8x4xf32>
    tpu.vector_store %arg19[%c7, %c0_20, %c0_21], %38 {strides = array<i32>} : memref<8x8x4xf32, #tpu.memory_space<vmem>>, vector<1x8x4xf32>,
    %c0_22 = arith.constant 0 : index
    %c0_23 = arith.constant 0 : index
    %c0_24 = arith.constant 0 : index
    %39 = vector.load %arg19[%c0_22, %c0_23, %c0_24] : memref<8x8x4xf32, #tpu.memory_space<vmem>>, vector<8x8x4xf32>
    %cst_25 = arith.constant 0xFF800000 : f32
    %40 = vector.broadcast %cst_25 : f32 to vector<8x8x1xf32>
    %cst_26 = arith.constant 0.000000e+00 : f32
    %41 = vector.broadcast %cst_26 : f32 to vector<8x8x1xf32>
    %cst_27 = arith.constant 0.000000e+00 : f32
    %42 = vector.broadcast %cst_27 : f32 to vector<8x8x4xf32>
    %c0_28 = arith.constant 0 : index
    %c0_29 = arith.constant 0 : index
    %c0_30 = arith.constant 0 : index
    %43 = vector.load %arg17[%c0_28, %c0_29, %c0_30] : memref<8x8x4xf32, #tpu.memory_space<vmem>>, vector<8x8x4xf32>
    %c0_31 = arith.constant 0 : index
    %c0_32 = arith.constant 0 : index
    %c0_33 = arith.constant 0 : index
    %44 = vector.load %arg18[%c0_31, %c0_32, %c0_33] : memref<8x8x4xf32, #tpu.memory_space<vmem>>, vector<8x8x4xf32>
    "tpu.trace_start"() <{level = 10 : i32, message = "htd,hnd->htn"}> : () -> ()
    %cst_34 = arith.constant dense<0.000000e+00> : vector<8x8x8xf32>
    %45 = tpu.matmul %39, %43, %cst_34 {dimension_numbers = #tpu.dot_dimension_numbers<[2], [2], [1], [1], [0, 0, 0, 1, 1, 1], [0], [0]>} : vector<8x8x4xf32>, vector<8x8x4xf32>, vector<8x8x8xf32> -> vector<8x8x8xf32>
    "tpu.trace_stop"() : () -> ()
    %cst_35 = arith.constant dense<0xFF800000> : vector<8x8xf32>
    %46 = vector.multi_reduction <maximumf>, %45, %cst_35 [2] : vector<8x8x8xf32> to vector<8x8xf32>
    %47 = vector.shape_cast %46 : vector<8x8xf32> to vector<8x8x1xf32>
    %48 = arith.maximumf %40, %47 : vector<8x8x1xf32>
    %49 = arith.subf %40, %48 : vector<8x8x1xf32>
    %50 = math.exp %49 : vector<8x8x1xf32>
    %51 = vector.broadcast %48 : vector<8x8x1xf32> to vector<8x8x8xf32>
    %52 = arith.subf %45, %51 : vector<8x8x8xf32>
    %53 = math.exp %52 : vector<8x8x8xf32>
    %54 = arith.mulf %50, %41 : vector<8x8x1xf32>
    %cst_36 = arith.constant dense<0.000000e+00> : vector<8x8xf32>
    %55 = vector.multi_reduction <add>, %53, %cst_36 [2] : vector<8x8x8xf32> to vector<8x8xf32>
    %56 = vector.shape_cast %55 : vector<8x8xf32> to vector<8x8x1xf32>
    %57 = arith.addf %54, %56 : vector<8x8x1xf32>
    %58 = vector.broadcast %50 : vector<8x8x1xf32> to vector<8x8x4xf32>
    %59 = arith.mulf %58, %42 : vector<8x8x4xf32>
    "tpu.trace_start"() <{level = 10 : i32, message = "htn,hnd->htd"}> : () -> ()
    %cst_37 = arith.constant dense<0.000000e+00> : vector<8x8x4xf32>
    %60 = tpu.matmul %53, %44, %cst_37 {dimension_numbers = #tpu.dot_dimension_numbers<[2], [1], [1], [2], [0, 0, 0, 1, 1, 2], [0], [0]>} : vector<8x8x8xf32>, vector<8x8x4xf32>, vector<8x8x4xf32> -> vector<8x8x4xf32>
    "tpu.trace_stop"() : () -> ()
    %61 = arith.addf %59, %60 : vector<8x8x4xf32>
    %62 = tpu.reciprocal %57 {approx = true} : vector<8x8x1xf32> -> vector<8x8x1xf32>
    %63 = vector.broadcast %62 : vector<8x8x1xf32> to vector<8x8x4xf32>
    %64 = arith.mulf %61, %63 : vector<8x8x4xf32>
    %65 = vector.extract_strided_slice %64 {offsets = [0, 0, 0], sizes = [1, 8, 4], strides = [1, 1, 1]} : vector<8x8x4xf32> to vector<1x8x4xf32>
    %66 = vector.shape_cast %65 : vector<1x8x4xf32> to vector<8x4xf32>
    %c0_38 = arith.constant 0 : index
    %c0_39 = arith.constant 0 : index
    %67 = vector.load %arg20[%c0_38, %c0_39] : memref<8x32xf32, #tpu.memory_space<vmem>>, vector<8x4xf32>
    tpu.vector_store %arg20[%c0_38, %c0_39], %66 {strides = array<i32>} : memref<8x32xf32, #tpu.memory_space<vmem>>, vector<8x4xf32>,
    %68 = vector.extract_strided_slice %64 {offsets = [1, 0, 0], sizes = [1, 8, 4], strides = [1, 1, 1]} : vector<8x8x4xf32> to vector<1x8x4xf32>
    %69 = vector.shape_cast %68 : vector<1x8x4xf32> to vector<8x4xf32>
    %c0_40 = arith.constant 0 : index
    %c4_41 = arith.constant 4 : index
    %70 = vector.load %arg20[%c0_40, %c4_41] : memref<8x32xf32, #tpu.memory_space<vmem>>, vector<8x4xf32>
    tpu.vector_store %arg20[%c0_40, %c4_41], %69 {strides = array<i32>} : memref<8x32xf32, #tpu.memory_space<vmem>>, vector<8x4xf32>,
    %71 = vector.extract_strided_slice %64 {offsets = [2, 0, 0], sizes = [1, 8, 4], strides = [1, 1, 1]} : vector<8x8x4xf32> to vector<1x8x4xf32>
    %72 = vector.shape_cast %71 : vector<1x8x4xf32> to vector<8x4xf32>
    %c0_42 = arith.constant 0 : index
    %c8 = arith.constant 8 : index
    %73 = vector.load %arg20[%c0_42, %c8] : memref<8x32xf32, #tpu.memory_space<vmem>>, vector<8x4xf32>
    tpu.vector_store %arg20[%c0_42, %c8], %72 {strides = array<i32>} : memref<8x32xf32, #tpu.memory_space<vmem>>, vector<8x4xf32>,
    %74 = vector.extract_strided_slice %64 {offsets = [3, 0, 0], sizes = [1, 8, 4], strides = [1, 1, 1]} : vector<8x8x4xf32> to vector<1x8x4xf32>
    %75 = vector.shape_cast %74 : vector<1x8x4xf32> to vector<8x4xf32>
    %c0_43 = arith.constant 0 : index
    %c12 = arith.constant 12 : index
    %76 = vector.load %arg20[%c0_43, %c12] : memref<8x32xf32, #tpu.memory_space<vmem>>, vector<8x4xf32>
    tpu.vector_store %arg20[%c0_43, %c12], %75 {strides = array<i32>} : memref<8x32xf32, #tpu.memory_space<vmem>>, vector<8x4xf32>,
    %77 = vector.extract_strided_slice %64 {offsets = [4, 0, 0], sizes = [1, 8, 4], strides = [1, 1, 1]} : vector<8x8x4xf32> to vector<1x8x4xf32>
    %78 = vector.shape_cast %77 : vector<1x8x4xf32> to vector<8x4xf32>
    %c0_44 = arith.constant 0 : index
    %c16 = arith.constant 16 : index
    %79 = vector.load %arg20[%c0_44, %c16] : memref<8x32xf32, #tpu.memory_space<vmem>>, vector<8x4xf32>
    tpu.vector_store %arg20[%c0_44, %c16], %78 {strides = array<i32>} : memref<8x32xf32, #tpu.memory_space<vmem>>, vector<8x4xf32>,
    %80 = vector.extract_strided_slice %64 {offsets = [5, 0, 0], sizes = [1, 8, 4], strides = [1, 1, 1]} : vector<8x8x4xf32> to vector<1x8x4xf32>
    %81 = vector.shape_cast %80 : vector<1x8x4xf32> to vector<8x4xf32>
    %c0_45 = arith.constant 0 : index
    %c20 = arith.constant 20 : index
    %82 = vector.load %arg20[%c0_45, %c20] : memref<8x32xf32, #tpu.memory_space<vmem>>, vector<8x4xf32>
    tpu.vector_store %arg20[%c0_45, %c20], %81 {strides = array<i32>} : memref<8x32xf32, #tpu.memory_space<vmem>>, vector<8x4xf32>,
    %83 = vector.extract_strided_slice %64 {offsets = [6, 0, 0], sizes = [1, 8, 4], strides = [1, 1, 1]} : vector<8x8x4xf32> to vector<1x8x4xf32>
    %84 = vector.shape_cast %83 : vector<1x8x4xf32> to vector<8x4xf32>
    %c0_46 = arith.constant 0 : index
    %c24 = arith.constant 24 : index
    %85 = vector.load %arg20[%c0_46, %c24] : memref<8x32xf32, #tpu.memory_space<vmem>>, vector<8x4xf32>
    tpu.vector_store %arg20[%c0_46, %c24], %84 {strides = array<i32>} : memref<8x32xf32, #tpu.memory_space<vmem>>, vector<8x4xf32>,
    %86 = vector.extract_strided_slice %64 {offsets = [7, 0, 0], sizes = [1, 8, 4], strides = [1, 1, 1]} : vector<8x8x4xf32> to vector<1x8x4xf32>
    %87 = vector.shape_cast %86 : vector<1x8x4xf32> to vector<8x4xf32>
    %c0_47 = arith.constant 0 : index
    %c28 = arith.constant 28 : index
    %88 = vector.load %arg20[%c0_47, %c28] : memref<8x32xf32, #tpu.memory_space<vmem>>, vector<8x4xf32>
    tpu.vector_store %arg20[%c0_47, %c28], %87 {strides = array<i32>} : memref<8x32xf32, #tpu.memory_space<vmem>>, vector<8x4xf32>,
    %c0_48 = arith.constant 0 : index
    %c0_49 = arith.constant 0 : index
    %89 = vector.load %arg20[%c0_48, %c0_49] : memref<8x32xf32, #tpu.memory_space<vmem>>, vector<8x32xf32>
    %c0_50 = arith.constant 0 : index
    %c0_51 = arith.constant 0 : index
    %90 = vector.load %arg6[%c0_50, %c0_51] : memref<32x32xf32, #tpu.memory_space<vmem>>, vector<32x32xf32>
    %cst_52 = arith.constant dense<0.000000e+00> : vector<8x32xf32>
    %91 = tpu.matmul %89, %90, %cst_52 {dimension_numbers = #tpu.dot_dimension_numbers<[1], [0], [0], [1], [0, 0, 1, 1], [], []>} : vector<8x32xf32>, vector<32x32xf32>, vector<8x32xf32> -> vector<8x32xf32>
    %c0_53 = arith.constant 0 : index
    %c0_54 = arith.constant 0 : index
    %92 = vector.load %arg7[%c0_53, %c0_54] : memref<1x32xf32, #tpu.memory_space<vmem>>, vector<1x32xf32>
    %93 = vector.broadcast %92 : vector<1x32xf32> to vector<8x32xf32>
    %94 = arith.addf %91, %93 : vector<8x32xf32>
    %95 = arith.addf %4, %94 : vector<8x32xf32>
    %c0_55 = arith.constant 0 : index
    %c0_56 = arith.constant 0 : index
    %96 = vector.load %arg8[%c0_55, %c0_56] : memref<1x32xf32, #tpu.memory_space<vmem>>, vector<1x32xf32>
    %c0_57 = arith.constant 0 : index
    %c0_58 = arith.constant 0 : index
    %97 = vector.load %arg9[%c0_57, %c0_58] : memref<1x32xf32, #tpu.memory_space<vmem>>, vector<1x32xf32>
    %cst_59 = arith.constant dense<0.000000e+00> : vector<8xf32>
    %98 = vector.multi_reduction <add>, %95, %cst_59 [1] : vector<8x32xf32> to vector<8xf32>
    %99 = vector.shape_cast %98 : vector<8xf32> to vector<8x1xf32>
    %cst_60 = arith.constant 3.200000e+01 : f32
    %100 = vector.broadcast %cst_60 : f32 to vector<8x1xf32>
    %101 = arith.divf %99, %100 : vector<8x1xf32>
    %102 = vector.broadcast %101 : vector<8x1xf32> to vector<8x32xf32>
    %103 = arith.subf %95, %102 : vector<8x32xf32>
    %104 = arith.mulf %103, %103 : vector<8x32xf32>
    %cst_61 = arith.constant dense<0.000000e+00> : vector<8xf32>
    %105 = vector.multi_reduction <add>, %104, %cst_61 [1] : vector<8x32xf32> to vector<8xf32>
    %106 = vector.shape_cast %105 : vector<8xf32> to vector<8x1xf32>
    %cst_62 = arith.constant 3.200000e+01 : f32
    %107 = vector.broadcast %cst_62 : f32 to vector<8x1xf32>
    %108 = arith.divf %106, %107 : vector<8x1xf32>
    %109 = vector.broadcast %101 : vector<8x1xf32> to vector<8x32xf32>
    %110 = arith.subf %95, %109 : vector<8x32xf32>
    %cst_63 = arith.constant 9.99999974E-6 : f32
    %111 = vector.broadcast %cst_63 : f32 to vector<8x1xf32>
    %112 = arith.addf %108, %111 : vector<8x1xf32>
    %113 = math.rsqrt %112 : vector<8x1xf32>
    %114 = vector.broadcast %113 : vector<8x1xf32> to vector<8x32xf32>
    %115 = arith.mulf %110, %114 : vector<8x32xf32>
    %116 = vector.broadcast %96 : vector<1x32xf32> to vector<8x32xf32>
    %117 = arith.mulf %115, %116 : vector<8x32xf32>
    %118 = vector.broadcast %97 : vector<1x32xf32> to vector<8x32xf32>
    %119 = arith.addf %117, %118 : vector<8x32xf32>
    %c0_64 = arith.constant 0 : index
    %c0_65 = arith.constant 0 : index
    %120 = vector.load %arg10[%c0_64, %c0_65] : memref<32x128xf32, #tpu.memory_space<vmem>>, vector<32x128xf32>
    %cst_66 = arith.constant dense<0.000000e+00> : vector<8x128xf32>
    %121 = tpu.matmul %119, %120, %cst_66 {dimension_numbers = #tpu.dot_dimension_numbers<[1], [0], [0], [1], [0, 0, 1, 1], [], []>} : vector<8x32xf32>, vector<32x128xf32>, vector<8x128xf32> -> vector<8x128xf32>
    %c0_67 = arith.constant 0 : index
    %c0_68 = arith.constant 0 : index
    %122 = vector.load %arg11[%c0_67, %c0_68] : memref<1x128xf32, #tpu.memory_space<vmem>>, vector<1x128xf32>
    %123 = vector.broadcast %122 : vector<1x128xf32> to vector<8x128xf32>
    %124 = arith.addf %121, %123 : vector<8x128xf32>
    %cst_69 = arith.constant 5.000000e-01 : f32
    %125 = vector.broadcast %cst_69 : f32 to vector<8x128xf32>
    %126 = arith.mulf %125, %124 : vector<8x128xf32>
    %cst_70 = arith.constant 4.471500e-02 : f32
    %127 = vector.broadcast %cst_70 : f32 to vector<8x128xf32>
    %128 = arith.mulf %127, %124 : vector<8x128xf32>
    %129 = arith.mulf %128, %124 : vector<8x128xf32>
    %130 = arith.mulf %129, %124 : vector<8x128xf32>
    %131 = arith.addf %124, %130 : vector<8x128xf32>
    %cst_71 = arith.constant 0.797884583 : f32
    %132 = vector.broadcast %cst_71 : f32 to vector<8x128xf32>
    %133 = arith.mulf %132, %131 : vector<8x128xf32>
    %134 = math.tanh %133 : vector<8x128xf32>
    %cst_72 = arith.constant 1.000000e+00 : f32
    %135 = vector.broadcast %cst_72 : f32 to vector<8x128xf32>
    %136 = arith.addf %135, %134 : vector<8x128xf32>
    %137 = arith.mulf %126, %136 : vector<8x128xf32>
    %c0_73 = arith.constant 0 : index
    %c0_74 = arith.constant 0 : index
    %138 = vector.load %arg12[%c0_73, %c0_74] : memref<128x32xf32, #tpu.memory_space<vmem>>, vector<128x32xf32>
    %cst_75 = arith.constant dense<0.000000e+00> : vector<8x32xf32>
    %139 = tpu.matmul %137, %138, %cst_75 {dimension_numbers = #tpu.dot_dimension_numbers<[1], [0], [0], [1], [0, 0, 1, 1], [], []>} : vector<8x128xf32>, vector<128x32xf32>, vector<8x32xf32> -> vector<8x32xf32>
    %c0_76 = arith.constant 0 : index
    %c0_77 = arith.constant 0 : index
    %140 = vector.load %arg13[%c0_76, %c0_77] : memref<1x32xf32, #tpu.memory_space<vmem>>, vector<1x32xf32>
    %141 = vector.broadcast %140 : vector<1x32xf32> to vector<8x32xf32>
    %142 = arith.addf %139, %141 : vector<8x32xf32>
    %143 = arith.addf %119, %142 : vector<8x32xf32>
    %c0_78 = arith.constant 0 : index
    %c0_79 = arith.constant 0 : index
    %144 = vector.load %arg14[%c0_78, %c0_79] : memref<1x32xf32, #tpu.memory_space<vmem>>, vector<1x32xf32>
    %c0_80 = arith.constant 0 : index
    %c0_81 = arith.constant 0 : index
    %145 = vector.load %arg15[%c0_80, %c0_81] : memref<1x32xf32, #tpu.memory_space<vmem>>, vector<1x32xf32>
    %cst_82 = arith.constant dense<0.000000e+00> : vector<8xf32>
    %146 = vector.multi_reduction <add>, %143, %cst_82 [1] : vector<8x32xf32> to vector<8xf32>
    %147 = vector.shape_cast %146 : vector<8xf32> to vector<8x1xf32>
    %cst_83 = arith.constant 3.200000e+01 : f32
    %148 = vector.broadcast %cst_83 : f32 to vector<8x1xf32>
    %149 = arith.divf %147, %148 : vector<8x1xf32>
    %150 = vector.broadcast %149 : vector<8x1xf32> to vector<8x32xf32>
    %151 = arith.subf %143, %150 : vector<8x32xf32>
    %152 = arith.mulf %151, %151 : vector<8x32xf32>
    %cst_84 = arith.constant dense<0.000000e+00> : vector<8xf32>
    %153 = vector.multi_reduction <add>, %152, %cst_84 [1] : vector<8x32xf32> to vector<8xf32>
    %154 = vector.shape_cast %153 : vector<8xf32> to vector<8x1xf32>
    %cst_85 = arith.constant 3.200000e+01 : f32
    %155 = vector.broadcast %cst_85 : f32 to vector<8x1xf32>
    %156 = arith.divf %154, %155 : vector<8x1xf32>
    %157 = vector.broadcast %149 : vector<8x1xf32> to vector<8x32xf32>
    %158 = arith.subf %143, %157 : vector<8x32xf32>
    %cst_86 = arith.constant 9.99999974E-6 : f32
    %159 = vector.broadcast %cst_86 : f32 to vector<8x1xf32>
    %160 = arith.addf %156, %159 : vector<8x1xf32>
    %161 = math.rsqrt %160 : vector<8x1xf32>
    %162 = vector.broadcast %161 : vector<8x1xf32> to vector<8x32xf32>
    %163 = arith.mulf %158, %162 : vector<8x32xf32>
    %164 = vector.broadcast %144 : vector<1x32xf32> to vector<8x32xf32>
    %165 = arith.mulf %163, %164 : vector<8x32xf32>
    %166 = vector.broadcast %145 : vector<1x32xf32> to vector<8x32xf32>
    %167 = arith.addf %165, %166 : vector<8x32xf32>
    %c0_87 = arith.constant 0 : index
    %c0_88 = arith.constant 0 : index
    %c0_89 = arith.constant 0 : index
    %168 = vector.load %arg16[%c0_87, %c0_88, %c0_89] : memref<1x8x32xf32, #tpu.memory_space<vmem>>, vector<1x8x32xf32>
    %169 = vector.shape_cast %168 : vector<1x8x32xf32> to vector<8x32xf32>
    %170 = vector.shape_cast %167 : vector<8x32xf32> to vector<1x8x32xf32>
    tpu.vector_store %arg16[%c0_87, %c0_88, %c0_89], %170 {strides = array<i32>} : memref<1x8x32xf32, #tpu.memory_space<vmem>>, vector<1x8x32xf32>,
    return
  }
  func.func @transform_0(%arg0: i32, %arg1: i32) -> (i32, i32, i32) {
    %c0_i32 = arith.constant 0 : i32
    %c0_i32_0 = arith.constant 0 : i32
    return %arg0, %arg1, %c0_i32 : i32, i32, i32
  }
  func.func @transform_1(%arg0: i32, %arg1: i32) -> (i32, i32, i32) {
    %c0_i32 = arith.constant 0 : i32
    %c0_i32_0 = arith.constant 0 : i32
    %c0_i32_1 = arith.constant 0 : i32
    return %arg0, %c0_i32, %c0_i32_0 : i32, i32, i32
  }
  func.func @transform_2(%arg0: i32, %arg1: i32) -> (i32, i32) {
    %c0_i32 = arith.constant 0 : i32
    %c0_i32_0 = arith.constant 0 : i32
    %c0_i32_1 = arith.constant 0 : i32
    return %c0_i32, %c0_i32_0 : i32, i32
  }
  func.func @transform_3(%arg0: i32, %arg1: i32) -> (i32, i32) {
    %c0_i32 = arith.constant 0 : i32
    %c0_i32_0 = arith.constant 0 : i32
    %c0_i32_1 = arith.constant 0 : i32
    return %c0_i32, %c0_i32_0 : i32, i32
  }
  func.func @transform_4(%arg0: i32, %arg1: i32) -> (i32, i32) {
    %c0_i32 = arith.constant 0 : i32
    %c0_i32_0 = arith.constant 0 : i32
    %c0_i32_1 = arith.constant 0 : i32
    return %c0_i32, %c0_i32_0 : i32, i32
  }
  func.func @transform_5(%arg0: i32, %arg1: i32) -> (i32, i32) {
    %c0_i32 = arith.constant 0 : i32
    %c0_i32_0 = arith.constant 0 : i32
    %c0_i32_1 = arith.constant 0 : i32
    return %c0_i32, %c0_i32_0 : i32, i32
  }
  func.func @transform_6(%arg0: i32, %arg1: i32) -> (i32, i32) {
    %c0_i32 = arith.constant 0 : i32
    %c0_i32_0 = arith.constant 0 : i32
    %c0_i32_1 = arith.constant 0 : i32
    return %c0_i32, %c0_i32_0 : i32, i32
  }
  func.func @transform_7(%arg0: i32, %arg1: i32) -> (i32, i32) {
    %c0_i32 = arith.constant 0 : i32
    %c0_i32_0 = arith.constant 0 : i32
    %c0_i32_1 = arith.constant 0 : i32
    return %c0_i32, %c0_i32_0 : i32, i32
  }
  func.func @transform_8(%arg0: i32, %arg1: i32) -> (i32, i32) {
    %c0_i32 = arith.constant 0 : i32
    %c0_i32_0 = arith.constant 0 : i32
    %c0_i32_1 = arith.constant 0 : i32
    return %c0_i32, %c0_i32_0 : i32, i32
  }
  func.func @transform_9(%arg0: i32, %arg1: i32) -> (i32, i32) {
    %c0_i32 = arith.constant 0 : i32
    %c0_i32_0 = arith.constant 0 : i32
    %c0_i32_1 = arith.constant 0 : i32
    return %c0_i32, %c0_i32_0 : i32, i32
  }
  func.func @transform_10(%arg0: i32, %arg1: i32) -> (i32, i32) {
    %c0_i32 = arith.constant 0 : i32
    %c0_i32_0 = arith.constant 0 : i32
    %c0_i32_1 = arith.constant 0 : i32
    return %c0_i32, %c0_i32_0 : i32, i32
  }
  func.func @transform_11(%arg0: i32, %arg1: i32) -> (i32, i32) {
    %c0_i32 = arith.constant 0 : i32
    %c0_i32_0 = arith.constant 0 : i32
    %c0_i32_1 = arith.constant 0 : i32
    return %c0_i32, %c0_i32_0 : i32, i32
  }
  func.func @transform_12(%arg0: i32, %arg1: i32) -> (i32, i32) {
    %c0_i32 = arith.constant 0 : i32
    %c0_i32_0 = arith.constant 0 : i32
    %c0_i32_1 = arith.constant 0 : i32
    return %c0_i32, %c0_i32_0 : i32, i32
  }
  func.func @transform_13(%arg0: i32, %arg1: i32) -> (i32, i32) {
    %c0_i32 = arith.constant 0 : i32
    %c0_i32_0 = arith.constant 0 : i32
    %c0_i32_1 = arith.constant 0 : i32
    return %c0_i32, %c0_i32_0 : i32, i32
  }
  func.func @transform_14(%arg0: i32, %arg1: i32) -> (i32, i32, i32) {
    %c0_i32 = arith.constant 0 : i32
    %c0_i32_0 = arith.constant 0 : i32
    return %arg0, %arg1, %c0_i32 : i32, i32, i32
  }
}

</mosaic_0001>

<llo_original>
// kernel: tpu_custom_call.1
$region0: #{tpu_custom_call.1}
  #allocation0 [shape = 'u32[]', space=smem, size = 0x4, offset = 0x4, fixed_abs, tag = 'smem constant byte address 0x4 - core index']
  #allocation1 [shape = 'u32[72,128]{1,0:T(1,128)}', space=vmem, size = 0x9000, scoped, tag = 'internal scratch']
  #allocation2 [shape = 'f32[8,8,4]{2,1,0:T(8,128)}', space=vmem, size = 0x8000, scoped, tag = 'scratch operand']
  #allocation3 [shape = 'f32[8,8,4]{2,1,0:T(8,128)}', space=vmem, size = 0x8000, scoped, tag = 'scratch operand']
  #allocation4 [shape = 'f32[8,8,4]{2,1,0:T(8,128)}', space=vmem, size = 0x8000, scoped, tag = 'scratch operand']
  #allocation5 [shape = 'f32[8,32]{1,0:T(8,128)}', space=vmem, size = 0x1000, scoped, tag = 'scratch operand']
  %s0 = inlined_call_operand.vmem [shape: f32[2,8,32], index: 0, kind: input, shape index: {}]
  %s1 = inlined_call_operand.vmem [shape: f32[2,8,32], index: 1, kind: input, shape index: {}]
  %s2 = inlined_call_operand.vmem [shape: f32[32,32], index: 2, kind: input, shape index: {}]
  %s3 = inlined_call_operand.vmem [shape: f32[32,64], index: 3, kind: input, shape index: {}]
  %s4 = inlined_call_operand.vmem [shape: f32[32,32], index: 4, kind: input, shape index: {}]
  %s5 = inlined_call_operand.vmem [shape: f32[1,32], index: 5, kind: input, shape index: {}]
  %s6 = inlined_call_operand.vmem [shape: f32[1,32], index: 6, kind: input, shape index: {}]
  %s7 = inlined_call_operand.vmem [shape: f32[1,32], index: 7, kind: input, shape index: {}]
  %s8 = inlined_call_operand.vmem [shape: f32[32,128], index: 8, kind: input, shape index: {}]
  %s9 = inlined_call_operand.vmem [shape: f32[1,128], index: 9, kind: input, shape index: {}]
  %s10 = inlined_call_operand.vmem [shape: f32[128,32], index: 10, kind: input, shape index: {}]
  %s11 = inlined_call_operand.vmem [shape: f32[1,32], index: 11, kind: input, shape index: {}]
  %s12 = inlined_call_operand.vmem [shape: f32[1,32], index: 12, kind: input, shape index: {}]
  %s13 = inlined_call_operand.vmem [shape: f32[1,32], index: 13, kind: input, shape index: {}]
  %s14 = inlined_call_operand.hbm [shape: f32[2,8,32], index: 14, kind: output, shape index: {}]
  %s15 = sld [smem:[#allocation0]]
  $region93: #{tpu_custom_call.1} parent=0
    _
  %s17 = ssub.s32 1, %s15
  %s18 = scalar_select 0, %s17, %s15
  $region1: #{tpu_custom_call.1} parent=0
    #allocation6 [shape = 'u8[8192]{0}', space=vmem, size = 0x2000, scoped, tag = 'output window, operand 0']
    #allocation7 [shape = 's32[2]{0}', space=sflag, size = 0x8, scoped, tag = 'scoped memory for tpu_custom_call.1']
    %19 = vsyncpa [#allocation7], 0
    %s20 = scalar_lea.sflag [#allocation7], 1
    %21 = vsyncpa %s20, 0
    loop: start=0, step=1, limit=4
    $region2: #{tpu_custom_call.1} parent=1 // loop_pre_header
      _
    $region3: #{tpu_custom_call.1} parent=1 // loop_header
      %s23 = sphi 0, %s27
      %p24 = scmp.ge.s32.totalorder %s23, 4
      %s30 = sphi 0, %s42
      %s31 = sphi 0, %s38
      %s32 = sphi 0, %s30
      %s33 = sphi 0, %s31
      %s34 = sphi 0, %s32
      %s35 = sphi 0, %s33
      %s47 = sphi 0, %s49
      %s50 = sphi 0, %s47
      %s51 = sphi 0, %s50
      %s67 = sphi 0, %s51
      %s73 = sphi 0, %s75
      %s76 = sphi 0, %s73
      %s77 = sphi 0, %s76
      %s93 = sphi 0, %s77
      %s97 = sphi 0, %s97
      %s99 = sphi 0, %s97
      %s100 = sphi 0, %s99
      %s114 = sphi 0, %s100
      %s118 = sphi 0, %s118
      %s120 = sphi 0, %s118
      %s121 = sphi 0, %s120
      %s135 = sphi 0, %s121
      %s139 = sphi 0, %s139
      %s141 = sphi 0, %s139
      %s142 = sphi 0, %s141
      %s156 = sphi 0, %s142
      %s160 = sphi 0, %s160
      %s162 = sphi 0, %s160
      %s163 = sphi 0, %s162
      %s177 = sphi 0, %s163
      %s181 = sphi 0, %s181
      %s183 = sphi 0, %s181
      %s184 = sphi 0, %s183
      %s198 = sphi 0, %s184
      %s202 = sphi 0, %s202
      %s204 = sphi 0, %s202
      %s205 = sphi 0, %s204
      %s219 = sphi 0, %s205
      %s223 = sphi 0, %s223
      %s225 = sphi 0, %s223
      %s226 = sphi 0, %s225
      %s240 = sphi 0, %s226
      %s244 = sphi 0, %s244
      %s246 = sphi 0, %s244
      %s247 = sphi 0, %s246
      %s261 = sphi 0, %s247
      %s265 = sphi 0, %s265
      %s267 = sphi 0, %s265
      %s268 = sphi 0, %s267
      %s282 = sphi 0, %s268
      %s286 = sphi 0, %s286
      %s288 = sphi 0, %s286
      %s289 = sphi 0, %s288
      %s303 = sphi 0, %s289
      %s307 = sphi 0, %s307
      %s309 = sphi 0, %s307
      %s310 = sphi 0, %s309
      %s324 = sphi 0, %s310
      %s328 = sphi 0, %s328
      %s330 = sphi 0, %s328
      %s331 = sphi 0, %s330
      %s345 = sphi 0, %s331
      %s353 = sphi 0, %s355
      %s356 = sphi 0, %s353
      %s357 = sphi 0, %s356
      %s373 = sphi 0, %s357
    $region4: #{tpu_custom_call.1} parent=1 // loop_header_branch
      %26 = sbr.rel (%p24) target = $region8
    $region5: #{tpu_custom_call.1} parent=1 // loop_body
      %s28 = ssub.s32 %s23, 1
      %s29 = ssub.s32 %s23, 2
      %s36 = sadd.s32 1, %s31
      %p37 = scmp.ge.s32.totalorder %s36, 1
      %s38 = scalar_select %p37, 0, %s36
      %s39 = sadd.s32 1, %s30
      %s40 = scalar_select %p37, %s39, %s30
      %p41 = scmp.ge.s32.totalorder %s40, 2
      %s42 = scalar_select %p41, 0, %s40
      %s43 = ssub.s32 %s30, %s42
      %s44 = ssub.s32 %s31, %s38
      %s45 = sor.u32 %s43, %s44
      %p46 = scmp.eq.s32.totalorder %s45, 0
      %s48 = sadd.s32 %s47, 1
      %s49 = scalar_select %p46, %s47, %s48
      %p52 = pneg %p46
      %p53 = scmp.eq.s32.totalorder %s23, 1
      %p54 = por %p52, %p53
      %p55 = scmp.ne.s32.totalorder %s47, %s50
      %p56 = scmp.eq.s32.totalorder %s23, 0
      %p57 = por %p55, %p56
      %p58 = scmp.ne.s32.totalorder %s47, %s50
      %p59 = scmp.eq.s32.totalorder %s28, 1
      %p60 = por %p58, %p59
      %p61 = scmp.ne.s32.totalorder %s50, %s51
      %p62 = scmp.eq.s32.totalorder %s28, 0
      %p63 = por %p61, %p62
      %p64 = scmp.ne.s32.totalorder %s50, %s51
      %p65 = scmp.eq.s32.totalorder %s29, 1
      %p66 = por %p64, %p65
      %p68 = scmp.ne.s32.totalorder %s51, %s67
      %p69 = scmp.eq.s32.totalorder %s29, 0
      %p70 = por %p68, %p69
      %s71 = ssub.s32 %s30, %s42
      %p72 = scmp.eq.s32.totalorder %s71, 0
      %s74 = sadd.s32 %s73, 1
      %s75 = scalar_select %p72, %s73, %s74
      %p78 = pneg %p72
      %p79 = scmp.eq.s32.totalorder %s23, 1
      %p80 = por %p78, %p79
      %p81 = scmp.ne.s32.totalorder %s73, %s76
      %p82 = scmp.eq.s32.totalorder %s23, 0
      %p83 = por %p81, %p82
      %p84 = scmp.ne.s32.totalorder %s73, %s76
      %p85 = scmp.eq.s32.totalorder %s28, 1
      %p86 = por %p84, %p85
      %p87 = scmp.ne.s32.totalorder %s76, %s77
      %p88 = scmp.eq.s32.totalorder %s28, 0
      %p89 = por %p87, %p88
      %p90 = scmp.ne.s32.totalorder %s76, %s77
      %p91 = scmp.eq.s32.totalorder %s29, 1
      %p92 = por %p90, %p91
      %p94 = scmp.ne.s32.totalorder %s77, %s93
      %p95 = scmp.eq.s32.totalorder %s29, 0
      %p96 = por %p94, %p95
      %s98 = sadd.s32 %s97, 1
      %p101 = scmp.eq.s32.totalorder %s23, 1
      %p102 = scmp.ne.s32.totalorder %s97, %s99
      %p103 = scmp.eq.s32.totalorder %s23, 0
      %p104 = por %p102, %p103
      %p105 = scmp.ne.s32.totalorder %s97, %s99
      %p106 = scmp.eq.s32.totalorder %s28, 1
      %p107 = por %p105, %p106
      %p108 = scmp.ne.s32.totalorder %s99, %s100
      %p109 = scmp.eq.s32.totalorder %s28, 0
      %p110 = por %p108, %p109
      %p111 = scmp.ne.s32.totalorder %s99, %s100
      %p112 = scmp.eq.s32.totalorder %s29, 1
      %p113 = por %p111, %p112
      %p115 = scmp.ne.s32.totalorder %s100, %s114
      %p116 = scmp.eq.s32.totalorder %s29, 0
      %p117 = por %p115, %p116
      %s119 = sadd.s32 %s118, 1
      %p122 = scmp.eq.s32.totalorder %s23, 1
      %p123 = scmp.ne.s32.totalorder %s118, %s120
      %p124 = scmp.eq.s32.totalorder %s23, 0
      %p125 = por %p123, %p124
      %p126 = scmp.ne.s32.totalorder %s118, %s120
      %p127 = scmp.eq.s32.totalorder %s28, 1
      %p128 = por %p126, %p127
      %p129 = scmp.ne.s32.totalorder %s120, %s121
      %p130 = scmp.eq.s32.totalorder %s28, 0
      %p131 = por %p129, %p130
      %p132 = scmp.ne.s32.totalorder %s120, %s121
      %p133 = scmp.eq.s32.totalorder %s29, 1
      %p134 = por %p132, %p133
      %p136 = scmp.ne.s32.totalorder %s121, %s135
      %p137 = scmp.eq.s32.totalorder %s29, 0
      %p138 = por %p136, %p137
      %s140 = sadd.s32 %s139, 1
      %p143 = scmp.eq.s32.totalorder %s23, 1
      %p144 = scmp.ne.s32.totalorder %s139, %s141
      %p145 = scmp.eq.s32.totalorder %s23, 0
      %p146 = por %p144, %p145
      %p147 = scmp.ne.s32.totalorder %s139, %s141
      %p148 = scmp.eq.s32.totalorder %s28, 1
      %p149 = por %p147, %p148
      %p150 = scmp.ne.s32.totalorder %s141, %s142
      %p151 = scmp.eq.s32.totalorder %s28, 0
      %p152 = por %p150, %p151
      %p153 = scmp.ne.s32.totalorder %s141, %s142
      %p154 = scmp.eq.s32.totalorder %s29, 1
      %p155 = por %p153, %p154
      %p157 = scmp.ne.s32.totalorder %s142, %s156
      %p158 = scmp.eq.s32.totalorder %s29, 0
      %p159 = por %p157, %p158
      %s161 = sadd.s32 %s160, 1
      %p164 = scmp.eq.s32.totalorder %s23, 1
      %p165 = scmp.ne.s32.totalorder %s160, %s162
      %p166 = scmp.eq.s32.totalorder %s23, 0
      %p167 = por %p165, %p166
      %p168 = scmp.ne.s32.totalorder %s160, %s162
      %p169 = scmp.eq.s32.totalorder %s28, 1
      %p170 = por %p168, %p169
      %p171 = scmp.ne.s32.totalorder %s162, %s163
      %p172 = scmp.eq.s32.totalorder %s28, 0
      %p173 = por %p171, %p172
      %p174 = scmp.ne.s32.totalorder %s162, %s163
      %p175 = scmp.eq.s32.totalorder %s29, 1
      %p176 = por %p174, %p175
      %p178 = scmp.ne.s32.totalorder %s163, %s177
      %p179 = scmp.eq.s32.totalorder %s29, 0
      %p180 = por %p178, %p179
      %s182 = sadd.s32 %s181, 1
      %p185 = scmp.eq.s32.totalorder %s23, 1
      %p186 = scmp.ne.s32.totalorder %s181, %s183
      %p187 = scmp.eq.s32.totalorder %s23, 0
      %p188 = por %p186, %p187
      %p189 = scmp.ne.s32.totalorder %s181, %s183
      %p190 = scmp.eq.s32.totalorder %s28, 1
      %p191 = por %p189, %p190
      %p192 = scmp.ne.s32.totalorder %s183, %s184
      %p193 = scmp.eq.s32.totalorder %s28, 0
      %p194 = por %p192, %p193
      %p195 = scmp.ne.s32.totalorder %s183, %s184
      %p196 = scmp.eq.s32.totalorder %s29, 1
      %p197 = por %p195, %p196
      %p199 = scmp.ne.s32.totalorder %s184, %s198
      %p200 = scmp.eq.s32.totalorder %s29, 0
      %p201 = por %p199, %p200
      %s203 = sadd.s32 %s202, 1
      %p206 = scmp.eq.s32.totalorder %s23, 1
      %p207 = scmp.ne.s32.totalorder %s202, %s204
      %p208 = scmp.eq.s32.totalorder %s23, 0
      %p209 = por %p207, %p208
      %p210 = scmp.ne.s32.totalorder %s202, %s204
      %p211 = scmp.eq.s32.totalorder %s28, 1
      %p212 = por %p210, %p211
      %p213 = scmp.ne.s32.totalorder %s204, %s205
      %p214 = scmp.eq.s32.totalorder %s28, 0
      %p215 = por %p213, %p214
      %p216 = scmp.ne.s32.totalorder %s204, %s205
      %p217 = scmp.eq.s32.totalorder %s29, 1
      %p218 = por %p216, %p217
      %p220 = scmp.ne.s32.totalorder %s205, %s219
      %p221 = scmp.eq.s32.totalorder %s29, 0
      %p222 = por %p220, %p221
      %s224 = sadd.s32 %s223, 1
      %p227 = scmp.eq.s32.totalorder %s23, 1
      %p228 = scmp.ne.s32.totalorder %s223, %s225
      %p229 = scmp.eq.s32.totalorder %s23, 0
      %p230 = por %p228, %p229
      %p231 = scmp.ne.s32.totalorder %s223, %s225
      %p232 = scmp.eq.s32.totalorder %s28, 1
      %p233 = por %p231, %p232
      %p234 = scmp.ne.s32.totalorder %s225, %s226
      %p235 = scmp.eq.s32.totalorder %s28, 0
      %p236 = por %p234, %p235
      %p237 = scmp.ne.s32.totalorder %s225, %s226
      %p238 = scmp.eq.s32.totalorder %s29, 1
      %p239 = por %p237, %p238
      %p241 = scmp.ne.s32.totalorder %s226, %s240
      %p242 = scmp.eq.s32.totalorder %s29, 0
      %p243 = por %p241, %p242
      %s245 = sadd.s32 %s244, 1
      %p248 = scmp.eq.s32.totalorder %s23, 1
      %p249 = scmp.ne.s32.totalorder %s244, %s246
      %p250 = scmp.eq.s32.totalorder %s23, 0
      %p251 = por %p249, %p250
      %p252 = scmp.ne.s32.totalorder %s244, %s246
      %p253 = scmp.eq.s32.totalorder %s28, 1
      %p254 = por %p252, %p253
      %p255 = scmp.ne.s32.totalorder %s246, %s247
      %p256 = scmp.eq.s32.totalorder %s28, 0
      %p257 = por %p255, %p256
      %p258 = scmp.ne.s32.totalorder %s246, %s247
      %p259 = scmp.eq.s32.totalorder %s29, 1
      %p260 = por %p258, %p259
      %p262 = scmp.ne.s32.totalorder %s247, %s261
      %p263 = scmp.eq.s32.totalorder %s29, 0
      %p264 = por %p262, %p263
      %s266 = sadd.s32 %s265, 1
      %p269 = scmp.eq.s32.totalorder %s23, 1
      %p270 = scmp.ne.s32.totalorder %s265, %s267
      %p271 = scmp.eq.s32.totalorder %s23, 0
      %p272 = por %p270, %p271
      %p273 = scmp.ne.s32.totalorder %s265, %s267
      %p274 = scmp.eq.s32.totalorder %s28, 1
      %p275 = por %p273, %p274
      %p276 = scmp.ne.s32.totalorder %s267, %s268
      %p277 = scmp.eq.s32.totalorder %s28, 0
      %p278 = por %p276, %p277
      %p279 = scmp.ne.s32.totalorder %s267, %s268
      %p280 = scmp.eq.s32.totalorder %s29, 1
      %p281 = por %p279, %p280
      %p283 = scmp.ne.s32.totalorder %s268, %s282
      %p284 = scmp.eq.s32.totalorder %s29, 0
      %p285 = por %p283, %p284
      %s287 = sadd.s32 %s286, 1
      %p290 = scmp.eq.s32.totalorder %s23, 1
      %p291 = scmp.ne.s32.totalorder %s286, %s288
      %p292 = scmp.eq.s32.totalorder %s23, 0
      %p293 = por %p291, %p292
      %p294 = scmp.ne.s32.totalorder %s286, %s288
      %p295 = scmp.eq.s32.totalorder %s28, 1
      %p296 = por %p294, %p295
      %p297 = scmp.ne.s32.totalorder %s288, %s289
      %p298 = scmp.eq.s32.totalorder %s28, 0
      %p299 = por %p297, %p298
      %p300 = scmp.ne.s32.totalorder %s288, %s289
      %p301 = scmp.eq.s32.totalorder %s29, 1
      %p302 = por %p300, %p301
      %p304 = scmp.ne.s32.totalorder %s289, %s303
      %p305 = scmp.eq.s32.totalorder %s29, 0
      %p306 = por %p304, %p305
      %s308 = sadd.s32 %s307, 1
      %p311 = scmp.eq.s32.totalorder %s23, 1
      %p312 = scmp.ne.s32.totalorder %s307, %s309
      %p313 = scmp.eq.s32.totalorder %s23, 0
      %p314 = por %p312, %p313
      %p315 = scmp.ne.s32.totalorder %s307, %s309
      %p316 = scmp.eq.s32.totalorder %s28, 1
      %p317 = por %p315, %p316
      %p318 = scmp.ne.s32.totalorder %s309, %s310
      %p319 = scmp.eq.s32.totalorder %s28, 0
      %p320 = por %p318, %p319
      %p321 = scmp.ne.s32.totalorder %s309, %s310
      %p322 = scmp.eq.s32.totalorder %s29, 1
      %p323 = por %p321, %p322
      %p325 = scmp.ne.s32.totalorder %s310, %s324
      %p326 = scmp.eq.s32.totalorder %s29, 0
      %p327 = por %p325, %p326
      %s329 = sadd.s32 %s328, 1
      %p332 = scmp.eq.s32.totalorder %s23, 1
      %p333 = scmp.ne.s32.totalorder %s328, %s330
      %p334 = scmp.eq.s32.totalorder %s23, 0
      %p335 = por %p333, %p334
      %p336 = scmp.ne.s32.totalorder %s328, %s330
      %p337 = scmp.eq.s32.totalorder %s28, 1
      %p338 = por %p336, %p337
      %p339 = scmp.ne.s32.totalorder %s330, %s331
      %p340 = scmp.eq.s32.totalorder %s28, 0
      %p341 = por %p339, %p340
      %p342 = scmp.ne.s32.totalorder %s330, %s331
      %p343 = scmp.eq.s32.totalorder %s29, 1
      %p344 = por %p342, %p343
      %p346 = scmp.ne.s32.totalorder %s331, %s345
      %p347 = scmp.eq.s32.totalorder %s29, 0
      %p348 = por %p346, %p347
      %s349 = ssub.s32 %s30, %s42
      %s350 = ssub.s32 %s31, %s38
      %s351 = sor.u32 %s349, %s350
      %p352 = scmp.eq.s32.totalorder %s351, 0
      %s354 = sadd.s32 %s353, 1
      %s355 = scalar_select %p352, %s353, %s354
      %p358 = pneg %p352
      %p359 = scmp.eq.s32.totalorder %s23, 1
      %p360 = por %p358, %p359
      %p361 = scmp.ne.s32.totalorder %s353, %s356
      %p362 = scmp.eq.s32.totalorder %s23, 0
      %p363 = por %p361, %p362
      %p364 = scmp.ne.s32.totalorder %s353, %s356
      %p365 = scmp.eq.s32.totalorder %s28, 1
      %p366 = por %p364, %p365
      %p367 = scmp.ne.s32.totalorder %s356, %s357
      %p368 = scmp.eq.s32.totalorder %s28, 0
      %p369 = por %p367, %p368
      %p370 = scmp.ne.s32.totalorder %s356, %s357
      %p371 = scmp.eq.s32.totalorder %s29, 1
      %p372 = por %p370, %p371
      %p374 = scmp.ne.s32.totalorder %s357, %s373
      %p375 = scmp.eq.s32.totalorder %s29, 0
      %p376 = por %p374, %p375
      %p377 = scmp.le.s32.totalorder 1, %s23
      %p378 = scmp.lt.s32.totalorder %s23, 3
      %p379 = pnand %p377, %p378
      %p380 = pneg %p379
      // Predicated region
      $region9: #{tpu_custom_call.1} parent=5 // pred_check
        _
      $region10: #{tpu_custom_call.1} parent=5 // pred_check_branch
        %382 = sbr.rel (%p379) target = $region12
      $region11: #{tpu_custom_call.1} parent=5 // pred_region
        %s383 = ssub.s32 %s23, 1
        // Predicated region
        $region13: #{tpu_custom_call.1} parent=11 // pred_check
          %p384 = pneg %p110
        $region14: #{tpu_custom_call.1} parent=11 // pred_check_branch
          %386 = sbr.rel (%p384) target = $region16
        $region15: #{tpu_custom_call.1} parent=11 // pred_region
          _
        $region16: #{tpu_custom_call.1} parent=11 // pred_fallthru
          _
        // Predicated region
        $region17: #{tpu_custom_call.1} parent=11 // pred_check
          %p387 = pneg %p131
        $region18: #{tpu_custom_call.1} parent=11 // pred_check_branch
          %389 = sbr.rel (%p387) target = $region20
        $region19: #{tpu_custom_call.1} parent=11 // pred_region
          _
        $region20: #{tpu_custom_call.1} parent=11 // pred_fallthru
          _
        // Predicated region
        $region21: #{tpu_custom_call.1} parent=11 // pred_check
          %p390 = pneg %p152
        $region22: #{tpu_custom_call.1} parent=11 // pred_check_branch
          %392 = sbr.rel (%p390) target = $region24
        $region23: #{tpu_custom_call.1} parent=11 // pred_region
          _
        $region24: #{tpu_custom_call.1} parent=11 // pred_fallthru
          _
        // Predicated region
        $region25: #{tpu_custom_call.1} parent=11 // pred_check
          %p393 = pneg %p173
        $region26: #{tpu_custom_call.1} parent=11 // pred_check_branch
          %395 = sbr.rel (%p393) target = $region28
        $region27: #{tpu_custom_call.1} parent=11 // pred_region
          _
        $region28: #{tpu_custom_call.1} parent=11 // pred_fallthru
          _
        // Predicated region
        $region29: #{tpu_custom_call.1} parent=11 // pred_check
          %p396 = pneg %p194
        $region30: #{tpu_custom_call.1} parent=11 // pred_check_branch
          %398 = sbr.rel (%p396) target = $region32
        $region31: #{tpu_custom_call.1} parent=11 // pred_region
          _
        $region32: #{tpu_custom_call.1} parent=11 // pred_fallthru
          _
        // Predicated region
        $region33: #{tpu_custom_call.1} parent=11 // pred_check
          %p399 = pneg %p215
        $region34: #{tpu_custom_call.1} parent=11 // pred_check_branch
          %401 = sbr.rel (%p399) target = $region36
        $region35: #{tpu_custom_call.1} parent=11 // pred_region
          _
        $region36: #{tpu_custom_call.1} parent=11 // pred_fallthru
          _
        // Predicated region
        $region37: #{tpu_custom_call.1} parent=11 // pred_check
          %p402 = pneg %p236
        $region38: #{tpu_custom_call.1} parent=11 // pred_check_branch
          %404 = sbr.rel (%p402) target = $region40
        $region39: #{tpu_custom_call.1} parent=11 // pred_region
          _
        $region40: #{tpu_custom_call.1} parent=11 // pred_fallthru
          _
        // Predicated region
        $region41: #{tpu_custom_call.1} parent=11 // pred_check
          %p405 = pneg %p257
        $region42: #{tpu_custom_call.1} parent=11 // pred_check_branch
          %407 = sbr.rel (%p405) target = $region44
        $region43: #{tpu_custom_call.1} parent=11 // pred_region
          _
        $region44: #{tpu_custom_call.1} parent=11 // pred_fallthru
          _
        // Predicated region
        $region45: #{tpu_custom_call.1} parent=11 // pred_check
          %p408 = pneg %p278
        $region46: #{tpu_custom_call.1} parent=11 // pred_check_branch
          %410 = sbr.rel (%p408) target = $region48
        $region47: #{tpu_custom_call.1} parent=11 // pred_region
          _
        $region48: #{tpu_custom_call.1} parent=11 // pred_fallthru
          _
        // Predicated region
        $region49: #{tpu_custom_call.1} parent=11 // pred_check
          %p411 = pneg %p299
        $region50: #{tpu_custom_call.1} parent=11 // pred_check_branch
          %413 = sbr.rel (%p411) target = $region52
        $region51: #{tpu_custom_call.1} parent=11 // pred_region
          _
        $region52: #{tpu_custom_call.1} parent=11 // pred_fallthru
          _
        // Predicated region
        $region53: #{tpu_custom_call.1} parent=11 // pred_check
          %p414 = pneg %p320
        $region54: #{tpu_custom_call.1} parent=11 // pred_check_branch
          %416 = sbr.rel (%p414) target = $region56
        $region55: #{tpu_custom_call.1} parent=11 // pred_region
          _
        $region56: #{tpu_custom_call.1} parent=11 // pred_fallthru
          _
        // Predicated region
        $region57: #{tpu_custom_call.1} parent=11 // pred_check
          %p417 = pneg %p341
        $region58: #{tpu_custom_call.1} parent=11 // pred_check_branch
          %419 = sbr.rel (%p417) target = $region60
        $region59: #{tpu_custom_call.1} parent=11 // pred_region
          _
        $region60: #{tpu_custom_call.1} parent=11 // pred_fallthru
          _
      $region12: #{tpu_custom_call.1} parent=5 // pred_fallthru
        _
      %p420 = scmp.lt.s32.totalorder %s23, 2
      // Predicated region
      $region61: #{tpu_custom_call.1} parent=5 // pred_check
        %p421 = pneg %p420
      $region62: #{tpu_custom_call.1} parent=5 // pred_check_branch
        %423 = sbr.rel (%p421) target = $region64
      $region63: #{tpu_custom_call.1} parent=5 // pred_region
        // Predicated region
        $region65: #{tpu_custom_call.1} parent=63 // pred_check
          %p424 = pneg %p57
        $region66: #{tpu_custom_call.1} parent=63 // pred_check_branch
          %426 = sbr.rel (%p424) target = $region68
        $region67: #{tpu_custom_call.1} parent=63 // pred_region
          %p427 = scmp.lt.s32.totalorder %s30, 1
          %s428 = scalar_select %p427, %s30, 1
          %p429 = scmp.lt.s32.totalorder %s31, 0
          %s430 = scalar_select %p429, %s31, 0
          %s431 = sadd.s32 %s430, %s428
          %s432 = smul.addr %s431, 8
          %s433 = scalar_lea.vmem %s0, %s432
        $region68: #{tpu_custom_call.1} parent=63 // pred_fallthru
          _
        // Predicated region
        $region69: #{tpu_custom_call.1} parent=63 // pred_check
          %p434 = pneg %p83
        $region70: #{tpu_custom_call.1} parent=63 // pred_check_branch
          %436 = sbr.rel (%p434) target = $region72
        $region71: #{tpu_custom_call.1} parent=63 // pred_region
          %p437 = scmp.lt.s32.totalorder %s30, 1
          %s438 = scalar_select %p437, %s30, 1
          %s439 = smul.addr %s438, 8
          %s440 = scalar_lea.vmem %s1, %s439
        $region72: #{tpu_custom_call.1} parent=63 // pred_fallthru
          _
      $region64: #{tpu_custom_call.1} parent=5 // pred_fallthru
        _
      %p441 = scmp.le.s32.totalorder 1, %s23
      %p442 = scmp.lt.s32.totalorder %s23, 3
      %p443 = pnand %p441, %p442
      %p444 = pneg %p443
      // Predicated region
      $region73: #{tpu_custom_call.1} parent=5 // pred_check
        _
      $region74: #{tpu_custom_call.1} parent=5 // pred_check_branch
        %446 = sbr.rel (%p443) target = $region76
      $region75: #{tpu_custom_call.1} parent=5 // pred_region
        %s447 = ssub.s32 %s23, 1
        %p448 = scmp.lt.s32.totalorder %s32, 1
        %s449 = scalar_select %p448, %s32, 1
        %p450 = scmp.lt.s32.totalorder %s33, 0
        %s451 = scalar_select %p450, %s33, 0
        %s452 = sadd.s32 %s451, %s449
        %s453 = smul.addr %s452, 8
        %s454 = scalar_lea.vmem %s0, %s453
        %p455 = pneg %p63
        %p456 = pneg %p60
        %p457 = scmp.lt.s32.totalorder %s32, 1
        %s458 = scalar_select %p457, %s32, 1
        %s459 = smul.addr %s458, 8
        %s460 = scalar_lea.vmem %s1, %s459
        %p461 = pneg %p89
        %p462 = pneg %p86
        %p463 = pneg %p110
        %p464 = pneg %p107
        %p465 = pneg %p131
        %p466 = pneg %p128
        %p467 = pneg %p152
        %p468 = pneg %p149
        %p469 = pneg %p173
        %p470 = pneg %p170
        %p471 = pneg %p194
        %p472 = pneg %p191
        %p473 = pneg %p215
        %p474 = pneg %p212
        %p475 = pneg %p236
        %p476 = pneg %p233
        %p477 = pneg %p257
        %p478 = pneg %p254
        %p479 = pneg %p278
        %p480 = pneg %p275
        %p481 = pneg %p299
        %p482 = pneg %p296
        %p483 = pneg %p320
        %p484 = pneg %p317
        %p485 = pneg %p341
        %p486 = pneg %p338
        %p487 = pneg %p369
        %p488 = pneg %p366
        %s489 = sand.u32 %s356, 1
        %s490 = scalar_lea.sflag [#allocation7], %s489
        %s491 = sand.u32 %s356, 1
        %s492 = smul.addr %s491, 8
        %s493 = scalar_lea.vmem [#allocation6], %s492
        %p494 = scmp.lt.s32.totalorder %s32, 1
        %s495 = scalar_select %p494, %s32, 1
        %p496 = scmp.lt.s32.totalorder %s33, 0
        %s497 = scalar_select %p496, %s33, 0
        %s498 = sadd.s32 %s497, %s495
        %s499 = smul.addr %s498, 8
        %s500 = scalar_lea.vmem %s0, %s499
        %p501 = scmp.lt.s32.totalorder %s32, 1
        %s502 = scalar_select %p501, %s32, 1
        %s503 = smul.addr %s502, 8
        %s504 = scalar_lea.vmem %s1, %s503
        %p505 = scmp.eq.s32.totalorder %s33, 0
        // Predicated region
        $region77: #{tpu_custom_call.1} parent=75 // pred_check
          %p506 = pneg %p505
        $region78: #{tpu_custom_call.1} parent=75 // pred_check_branch
          %508 = sbr.rel (%p506) target = $region80
        $region79: #{tpu_custom_call.1} parent=75 // pred_region
          %v509 = vld [vmem:[%s504] sm:$0xff]
          %v510 = vld [vmem:[%s3] sm:$0xff]
          %v511 = vld [vmem:[%s3 + $0x8] sm:$0xff]
          %v512 = vld [vmem:[%s3 + $0x10] sm:$0xff]
          %v513 = vld [vmem:[%s3 + $0x18] sm:$0xff]
          %vm514 = vcmask 261120
          %v516 = vsel %vm514, %v509, 0
          %518 = vmatpush.msra.mxu0 0.0
          %519 = vmatpush.msra.mxu0 0.0
          %520 = vmatpush.msra.mxu0 0.0
          %521 = vmatpush.msra.mxu0 0.0
          %522 = vmatpush.msra.mxu0 0.0
          %523 = vmatpush.msra.mxu0 0.0
          %524 = vmatpush.msra.mxu0 0.0
          %525 = vmatpush.msra.mxu0 0.0
          %526 = vmatpush.msra.mxu0 0.0
          %527 = vmatpush.msra.mxu0 0.0
          %528 = vmatpush.msra.mxu0 0.0
          %529 = vmatpush.msra.mxu0 0.0
          %530 = vmatpush.msra.mxu0 %v513
          %531 = vmatpush.msra.mxu0 %v512
          %532 = vmatpush.msra.mxu0 %v511
          %533 = vmatpush.msra.mxu0 %v510
          %534 = vmatmul.f32.gmra.mxu0 %v516
          %v535 = vpop.f32.mrf.mxu0
          %v536 = vadd.f32 0.0, %v535
          %537 = vdwg.mxu0
          %vm538 = vcmask 31744
          %539 = vst.msk [vmem:[#allocation2] sm:$0xff] %vm538, %v536
          %541 = vrot.lane.b32.xlu0 %v536, 96
          %v542 = vpop.permute.xlu0 %541
          %544 = vst.msk [vmem:[#allocation3] sm:$0xff] %vm538, %v542
          %545 = vrot.lane.b32.xlu0 %v536, 124
          %v546 = vpop.permute.xlu0 %545
          %s548 = scalar_lea.vmem [#allocation2], 8
          %549 = vst.msk [vmem:[%s548] sm:$0xff] %vm538, %v546
          %550 = vrot.lane.b32.xlu0 %v536, 92
          %v551 = vpop.permute.xlu0 %550
          %s553 = scalar_lea.vmem [#allocation3], 8
          %554 = vst.msk [vmem:[%s553] sm:$0xff] %vm538, %v551
          %555 = vrot.lane.b32.xlu0 %v536, 120
          %v556 = vpop.permute.xlu0 %555
          %s558 = scalar_lea.vmem [#allocation2], 16
          %559 = vst.msk [vmem:[%s558] sm:$0xff] %vm538, %v556
          %560 = vrot.lane.b32.xlu0 %v536, 88
          %v561 = vpop.permute.xlu0 %560
          %s563 = scalar_lea.vmem [#allocation3], 16
          %564 = vst.msk [vmem:[%s563] sm:$0xff] %vm538, %v561
          %565 = vrot.lane.b32.xlu0 %v536, 116
          %v566 = vpop.permute.xlu0 %565
          %s568 = scalar_lea.vmem [#allocation2], 24
          %569 = vst.msk [vmem:[%s568] sm:$0xff] %vm538, %v566
          %570 = vrot.lane.b32.xlu0 %v536, 84
          %v571 = vpop.permute.xlu0 %570
          %s573 = scalar_lea.vmem [#allocation3], 24
          %574 = vst.msk [vmem:[%s573] sm:$0xff] %vm538, %v571
          %575 = vrot.lane.b32.xlu0 %v536, 112
          %v576 = vpop.permute.xlu0 %575
          %s578 = scalar_lea.vmem [#allocation2], 32
          %579 = vst.msk [vmem:[%s578] sm:$0xff] %vm538, %v576
          %580 = vrot.lane.b32.xlu0 %v536, 80
          %v581 = vpop.permute.xlu0 %580
          %s583 = scalar_lea.vmem [#allocation3], 32
          %584 = vst.msk [vmem:[%s583] sm:$0xff] %vm538, %v581
          %585 = vrot.lane.b32.xlu0 %v536, 108
          %v586 = vpop.permute.xlu0 %585
          %s588 = scalar_lea.vmem [#allocation2], 40
          %589 = vst.msk [vmem:[%s588] sm:$0xff] %vm538, %v586
          %590 = vrot.lane.b32.xlu0 %v536, 76
          %v591 = vpop.permute.xlu0 %590
          %s593 = scalar_lea.vmem [#allocation3], 40
          %594 = vst.msk [vmem:[%s593] sm:$0xff] %vm538, %v591
          %595 = vrot.lane.b32.xlu0 %v536, 104
          %v596 = vpop.permute.xlu0 %595
          %s598 = scalar_lea.vmem [#allocation2], 48
          %599 = vst.msk [vmem:[%s598] sm:$0xff] %vm538, %v596
          %600 = vrot.lane.b32.xlu0 %v536, 72
          %v601 = vpop.permute.xlu0 %600
          %s603 = scalar_lea.vmem [#allocation3], 48
          %604 = vst.msk [vmem:[%s603] sm:$0xff] %vm538, %v601
          %605 = vrot.lane.b32.xlu0 %v536, 100
          %v606 = vpop.permute.xlu0 %605
          %s608 = scalar_lea.vmem [#allocation2], 56
          %609 = vst.msk [vmem:[%s608] sm:$0xff] %vm538, %v606
          %610 = vrot.lane.b32.xlu0 %v536, 68
          %v611 = vpop.permute.xlu0 %610
          %s613 = scalar_lea.vmem [#allocation3], 56
          %614 = vst.msk [vmem:[%s613] sm:$0xff] %vm538, %v611
        $region80: #{tpu_custom_call.1} parent=75 // pred_fallthru
          _
        %v615 = vld [vmem:[%s500] sm:$0xff]
        %v616 = vld [vmem:[%s2] sm:$0xff]
        %v617 = vld [vmem:[%s2 + $0x8] sm:$0xff]
        %v618 = vld [vmem:[%s2 + $0x10] sm:$0xff]
        %v619 = vld [vmem:[%s2 + $0x18] sm:$0xff]
        %vm620 = vcmask 261120
        %v622 = vsel %vm620, %v615, 0
        %624 = vmatpush.msra.mxu0 0.0
        %625 = vmatpush.msra.mxu0 0.0
        %626 = vmatpush.msra.mxu0 0.0
        %627 = vmatpush.msra.mxu0 0.0
        %628 = vmatpush.msra.mxu0 0.0
        %629 = vmatpush.msra.mxu0 0.0
        %630 = vmatpush.msra.mxu0 0.0
        %631 = vmatpush.msra.mxu0 0.0
        %632 = vmatpush.msra.mxu0 0.0
        %633 = vmatpush.msra.mxu0 0.0
        %634 = vmatpush.msra.mxu0 0.0
        %635 = vmatpush.msra.mxu0 0.0
        %636 = vmatpush.msra.mxu0 %v619
        %637 = vmatpush.msra.mxu0 %v618
        %638 = vmatpush.msra.mxu0 %v617
        %639 = vmatpush.msra.mxu0 %v616
        %640 = vmatmul.f32.gmra.mxu0 %v622
        %v641 = vpop.f32.mrf.mxu0
        %v642 = vadd.f32 0.0, %v641
        %643 = vdwg.mxu0
        %vm644 = vcmask 31744
        %645 = vst.msk [vmem:[#allocation4] sm:$0xff] %vm644, %v642
        %647 = vrot.lane.b32.xlu0 %v642, 124
        %v648 = vpop.permute.xlu0 %647
        %s650 = scalar_lea.vmem [#allocation4], 8
        %651 = vst.msk [vmem:[%s650] sm:$0xff] %vm644, %v648
        %652 = vrot.lane.b32.xlu0 %v642, 120
        %v653 = vpop.permute.xlu0 %652
        %s655 = scalar_lea.vmem [#allocation4], 16
        %656 = vst.msk [vmem:[%s655] sm:$0xff] %vm644, %v653
        %657 = vrot.lane.b32.xlu0 %v642, 116
        %v658 = vpop.permute.xlu0 %657
        %s660 = scalar_lea.vmem [#allocation4], 24
        %661 = vst.msk [vmem:[%s660] sm:$0xff] %vm644, %v658
        %662 = vrot.lane.b32.xlu0 %v642, 112
        %v663 = vpop.permute.xlu0 %662
        %s665 = scalar_lea.vmem [#allocation4], 32
        %666 = vst.msk [vmem:[%s665] sm:$0xff] %vm644, %v663
        %667 = vrot.lane.b32.xlu0 %v642, 108
        %v668 = vpop.permute.xlu0 %667
        %s670 = scalar_lea.vmem [#allocation4], 40
        %671 = vst.msk [vmem:[%s670] sm:$0xff] %vm644, %v668
        %672 = vrot.lane.b32.xlu0 %v642, 104
        %v673 = vpop.permute.xlu0 %672
        %s675 = scalar_lea.vmem [#allocation4], 48
        %676 = vst.msk [vmem:[%s675] sm:$0xff] %vm644, %v673
        %677 = vrot.lane.b32.xlu0 %v642, 100
        %v678 = vpop.permute.xlu0 %677
        %s680 = scalar_lea.vmem [#allocation4], 56
        %681 = vst.msk [vmem:[%s680] sm:$0xff] %vm644, %v678
        %v682 = vld [vmem:[#allocation4] sm:$0xff]
        %v683 = vld [vmem:[#allocation4 + $0x8] sm:$0xff]
        %v684 = vld [vmem:[#allocation4 + $0x10] sm:$0xff]
        %v685 = vld [vmem:[#allocation4 + $0x18] sm:$0xff]
        %v686 = vld [vmem:[#allocation4 + $0x20] sm:$0xff]
        %v687 = vld [vmem:[#allocation4 + $0x28] sm:$0xff]
        %v688 = vld [vmem:[#allocation4 + $0x30] sm:$0xff]
        %v689 = vld [vmem:[#allocation4 + $0x38] sm:$0xff]
        %v690 = vld [vmem:[#allocation2] sm:$0xff]
        %v691 = vld [vmem:[#allocation2 + $0x8] sm:$0xff]
        %v692 = vld [vmem:[#allocation2 + $0x10] sm:$0xff]
        %v693 = vld [vmem:[#allocation2 + $0x18] sm:$0xff]
        %v694 = vld [vmem:[#allocation2 + $0x20] sm:$0xff]
        %v695 = vld [vmem:[#allocation2 + $0x28] sm:$0xff]
        %v696 = vld [vmem:[#allocation2 + $0x30] sm:$0xff]
        %v697 = vld [vmem:[#allocation2 + $0x38] sm:$0xff]
        %v698 = vld [vmem:[#allocation3] sm:$0xff]
        %v699 = vld [vmem:[#allocation3 + $0x8] sm:$0xff]
        %v700 = vld [vmem:[#allocation3 + $0x10] sm:$0xff]
        %v701 = vld [vmem:[#allocation3 + $0x18] sm:$0xff]
        %v702 = vld [vmem:[#allocation3 + $0x20] sm:$0xff]
        %v703 = vld [vmem:[#allocation3 + $0x28] sm:$0xff]
        %v704 = vld [vmem:[#allocation3 + $0x30] sm:$0xff]
        %v705 = vld [vmem:[#allocation3 + $0x38] sm:$0xff]
        %v707 = vsel %vm644, %v682, 0
        %v710 = vsel %vm644, %v690, 0
        %712 = vmatpush.xpose.msra.mxu0 0.0
        %713 = vmatpush.xpose.msra.mxu0 0.0
        %714 = vmatpush.xpose.msra.mxu0 0.0
        %715 = vmatpush.xpose.msra.mxu0 0.0
        %716 = vmatpush.xpose.msra.mxu0 0.0
        %717 = vmatpush.xpose.msra.mxu0 0.0
        %718 = vmatpush.xpose.msra.mxu0 0.0
        %719 = vmatpush.xpose.msra.mxu0 0.0
        %720 = vmatpush.xpose.msra.mxu0 0.0
        %721 = vmatpush.xpose.msra.mxu0 0.0
        %722 = vmatpush.xpose.msra.mxu0 0.0
        %723 = vmatpush.xpose.msra.mxu0 0.0
        %724 = vmatpush.xpose.msra.mxu0 0.0
        %725 = vmatpush.xpose.msra.mxu0 0.0
        %726 = vmatpush.xpose.msra.mxu0 0.0
        %727 = vmatpush.xpose.msra.mxu0 %v710
        %728 = vmatmul.f32.gmra.mxu0 %v707
        %v729 = vpop.f32.mrf.mxu0
        %v730 = vadd.f32 0.0, %v729
        %731 = vdwg.mxu0
        %v733 = vsel %vm644, %v683, 0
        %v736 = vsel %vm644, %v691, 0
        %738 = vmatpush.xpose.msra.mxu0 0.0
        %739 = vmatpush.xpose.msra.mxu0 0.0
        %740 = vmatpush.xpose.msra.mxu0 0.0
        %741 = vmatpush.xpose.msra.mxu0 0.0
        %742 = vmatpush.xpose.msra.mxu0 0.0
        %743 = vmatpush.xpose.msra.mxu0 0.0
        %744 = vmatpush.xpose.msra.mxu0 0.0
        %745 = vmatpush.xpose.msra.mxu0 0.0
        %746 = vmatpush.xpose.msra.mxu0 0.0
        %747 = vmatpush.xpose.msra.mxu0 0.0
        %748 = vmatpush.xpose.msra.mxu0 0.0
        %749 = vmatpush.xpose.msra.mxu0 0.0
        %750 = vmatpush.xpose.msra.mxu0 0.0
        %751 = vmatpush.xpose.msra.mxu0 0.0
        %752 = vmatpush.xpose.msra.mxu0 0.0
        %753 = vmatpush.xpose.msra.mxu0 %v736
        %754 = vmatmul.f32.gmra.mxu0 %v733
        %v755 = vpop.f32.mrf.mxu0
        %v756 = vadd.f32 0.0, %v755
        %757 = vdwg.mxu0
        %v759 = vsel %vm644, %v684, 0
        %v762 = vsel %vm644, %v692, 0
        %764 = vmatpush.xpose.msra.mxu0 0.0
        %765 = vmatpush.xpose.msra.mxu0 0.0
        %766 = vmatpush.xpose.msra.mxu0 0.0
        %767 = vmatpush.xpose.msra.mxu0 0.0
        %768 = vmatpush.xpose.msra.mxu0 0.0
        %769 = vmatpush.xpose.msra.mxu0 0.0
        %770 = vmatpush.xpose.msra.mxu0 0.0
        %771 = vmatpush.xpose.msra.mxu0 0.0
        %772 = vmatpush.xpose.msra.mxu0 0.0
        %773 = vmatpush.xpose.msra.mxu0 0.0
        %774 = vmatpush.xpose.msra.mxu0 0.0
        %775 = vmatpush.xpose.msra.mxu0 0.0
        %776 = vmatpush.xpose.msra.mxu0 0.0
        %777 = vmatpush.xpose.msra.mxu0 0.0
        %778 = vmatpush.xpose.msra.mxu0 0.0
        %779 = vmatpush.xpose.msra.mxu0 %v762
        %780 = vmatmul.f32.gmra.mxu0 %v759
        %v781 = vpop.f32.mrf.mxu0
        %v782 = vadd.f32 0.0, %v781
        %783 = vdwg.mxu0
        %v785 = vsel %vm644, %v685, 0
        %v788 = vsel %vm644, %v693, 0
        %790 = vmatpush.xpose.msra.mxu0 0.0
        %791 = vmatpush.xpose.msra.mxu0 0.0
        %792 = vmatpush.xpose.msra.mxu0 0.0
        %793 = vmatpush.xpose.msra.mxu0 0.0
        %794 = vmatpush.xpose.msra.mxu0 0.0
        %795 = vmatpush.xpose.msra.mxu0 0.0
        %796 = vmatpush.xpose.msra.mxu0 0.0
        %797 = vmatpush.xpose.msra.mxu0 0.0
        %798 = vmatpush.xpose.msra.mxu0 0.0
        %799 = vmatpush.xpose.msra.mxu0 0.0
        %800 = vmatpush.xpose.msra.mxu0 0.0
        %801 = vmatpush.xpose.msra.mxu0 0.0
        %802 = vmatpush.xpose.msra.mxu0 0.0
        %803 = vmatpush.xpose.msra.mxu0 0.0
        %804 = vmatpush.xpose.msra.mxu0 0.0
        %805 = vmatpush.xpose.msra.mxu0 %v788
        %806 = vmatmul.f32.gmra.mxu0 %v785
        %v807 = vpop.f32.mrf.mxu0
        %v808 = vadd.f32 0.0, %v807
        %809 = vdwg.mxu0
        %v811 = vsel %vm644, %v686, 0
        %v814 = vsel %vm644, %v694, 0
        %816 = vmatpush.xpose.msra.mxu0 0.0
        %817 = vmatpush.xpose.msra.mxu0 0.0
        %818 = vmatpush.xpose.msra.mxu0 0.0
        %819 = vmatpush.xpose.msra.mxu0 0.0
        %820 = vmatpush.xpose.msra.mxu0 0.0
        %821 = vmatpush.xpose.msra.mxu0 0.0
        %822 = vmatpush.xpose.msra.mxu0 0.0
        %823 = vmatpush.xpose.msra.mxu0 0.0
        %824 = vmatpush.xpose.msra.mxu0 0.0
        %825 = vmatpush.xpose.msra.mxu0 0.0
        %826 = vmatpush.xpose.msra.mxu0 0.0
        %827 = vmatpush.xpose.msra.mxu0 0.0
        %828 = vmatpush.xpose.msra.mxu0 0.0
        %829 = vmatpush.xpose.msra.mxu0 0.0
        %830 = vmatpush.xpose.msra.mxu0 0.0
        %831 = vmatpush.xpose.msra.mxu0 %v814
        %832 = vmatmul.f32.gmra.mxu0 %v811
        %v833 = vpop.f32.mrf.mxu0
        %v834 = vadd.f32 0.0, %v833
        %835 = vdwg.mxu0
        %v837 = vsel %vm644, %v687, 0
        %v840 = vsel %vm644, %v695, 0
        %842 = vmatpush.xpose.msra.mxu0 0.0
        %843 = vmatpush.xpose.msra.mxu0 0.0
        %844 = vmatpush.xpose.msra.mxu0 0.0
        %845 = vmatpush.xpose.msra.mxu0 0.0
        %846 = vmatpush.xpose.msra.mxu0 0.0
        %847 = vmatpush.xpose.msra.mxu0 0.0
        %848 = vmatpush.xpose.msra.mxu0 0.0
        %849 = vmatpush.xpose.msra.mxu0 0.0
        %850 = vmatpush.xpose.msra.mxu0 0.0
        %851 = vmatpush.xpose.msra.mxu0 0.0
        %852 = vmatpush.xpose.msra.mxu0 0.0
        %853 = vmatpush.xpose.msra.mxu0 0.0
        %854 = vmatpush.xpose.msra.mxu0 0.0
        %855 = vmatpush.xpose.msra.mxu0 0.0
        %856 = vmatpush.xpose.msra.mxu0 0.0
        %857 = vmatpush.xpose.msra.mxu0 %v840
        %858 = vmatmul.f32.gmra.mxu0 %v837
        %v859 = vpop.f32.mrf.mxu0
        %v860 = vadd.f32 0.0, %v859
        %861 = vdwg.mxu0
        %v863 = vsel %vm644, %v688, 0
        %v866 = vsel %vm644, %v696, 0
        %868 = vmatpush.xpose.msra.mxu0 0.0
        %869 = vmatpush.xpose.msra.mxu0 0.0
        %870 = vmatpush.xpose.msra.mxu0 0.0
        %871 = vmatpush.xpose.msra.mxu0 0.0
        %872 = vmatpush.xpose.msra.mxu0 0.0
        %873 = vmatpush.xpose.msra.mxu0 0.0
        %874 = vmatpush.xpose.msra.mxu0 0.0
        %875 = vmatpush.xpose.msra.mxu0 0.0
        %876 = vmatpush.xpose.msra.mxu0 0.0
        %877 = vmatpush.xpose.msra.mxu0 0.0
        %878 = vmatpush.xpose.msra.mxu0 0.0
        %879 = vmatpush.xpose.msra.mxu0 0.0
        %880 = vmatpush.xpose.msra.mxu0 0.0
        %881 = vmatpush.xpose.msra.mxu0 0.0
        %882 = vmatpush.xpose.msra.mxu0 0.0
        %883 = vmatpush.xpose.msra.mxu0 %v866
        %884 = vmatmul.f32.gmra.mxu0 %v863
        %v885 = vpop.f32.mrf.mxu0
        %v886 = vadd.f32 0.0, %v885
        %887 = vdwg.mxu0
        %v889 = vsel %vm644, %v689, 0
        %v892 = vsel %vm644, %v697, 0
        %894 = vmatpush.xpose.msra.mxu0 0.0
        %895 = vmatpush.xpose.msra.mxu0 0.0
        %896 = vmatpush.xpose.msra.mxu0 0.0
        %897 = vmatpush.xpose.msra.mxu0 0.0
        %898 = vmatpush.xpose.msra.mxu0 0.0
        %899 = vmatpush.xpose.msra.mxu0 0.0
        %900 = vmatpush.xpose.msra.mxu0 0.0
        %901 = vmatpush.xpose.msra.mxu0 0.0
        %902 = vmatpush.xpose.msra.mxu0 0.0
        %903 = vmatpush.xpose.msra.mxu0 0.0
        %904 = vmatpush.xpose.msra.mxu0 0.0
        %905 = vmatpush.xpose.msra.mxu0 0.0
        %906 = vmatpush.xpose.msra.mxu0 0.0
        %907 = vmatpush.xpose.msra.mxu0 0.0
        %908 = vmatpush.xpose.msra.mxu0 0.0
        %909 = vmatpush.xpose.msra.mxu0 %v892
        %910 = vmatmul.f32.gmra.mxu0 %v889
        %v911 = vpop.f32.mrf.mxu0
        %v912 = vadd.f32 0.0, %v911
        %913 = vdwg.mxu0
        %vm914 = vcmask 64512
        %v915 = vsel %vm914, %v730, -inf
        %916 = vmax.xlane.f32.xlu0 %v915
        %v917 = vpop.xlane.xlu0 %916
        %v918 = vsel %vm914, %v756, -inf
        %919 = vmax.xlane.f32.xlu0 %v918
        %v920 = vpop.xlane.xlu0 %919
        %v921 = vsel %vm914, %v782, -inf
        %922 = vmax.xlane.f32.xlu0 %v921
        %v923 = vpop.xlane.xlu0 %922
        %v924 = vsel %vm914, %v808, -inf
        %925 = vmax.xlane.f32.xlu0 %v924
        %v926 = vpop.xlane.xlu0 %925
        %v927 = vsel %vm914, %v834, -inf
        %928 = vmax.xlane.f32.xlu0 %v927
        %v929 = vpop.xlane.xlu0 %928
        %v930 = vsel %vm914, %v860, -inf
        %931 = vmax.xlane.f32.xlu0 %v930
        %v932 = vpop.xlane.xlu0 %931
        %v933 = vsel %vm914, %v886, -inf
        %934 = vmax.xlane.f32.xlu0 %v933
        %v935 = vpop.xlane.xlu0 %934
        %v936 = vsel %vm914, %v912, -inf
        %937 = vmax.xlane.f32.xlu0 %v936
        %v938 = vpop.xlane.xlu0 %937
        %v939 = vsub.f32 -inf, %v917
        %v940 = vsub.f32 -inf, %v920
        %v941 = vsub.f32 -inf, %v923
        %v942 = vsub.f32 -inf, %v926
        %v943 = vsub.f32 -inf, %v929
        %v944 = vsub.f32 -inf, %v932
        %v945 = vsub.f32 -inf, %v935
        %v946 = vsub.f32 -inf, %v938
        %v947 = vmul.f32 %v939, 1.442695
        %v948 = vpow.pop %v947
        %v949 = vmul.f32 %v940, 1.442695
        %v950 = vpow.pop %v949
        %v951 = vmul.f32 %v941, 1.442695
        %v952 = vpow.pop %v951
        %v953 = vmul.f32 %v942, 1.442695
        %v954 = vpow.pop %v953
        %v955 = vmul.f32 %v943, 1.442695
        %v956 = vpow.pop %v955
        %v957 = vmul.f32 %v944, 1.442695
        %v958 = vpow.pop %v957
        %v959 = vmul.f32 %v945, 1.442695
        %v960 = vpow.pop %v959
        %v961 = vmul.f32 %v946, 1.442695
        %v962 = vpow.pop %v961
        %v963 = vsub.f32 %v730, %v917
        %v964 = vsub.f32 %v756, %v920
        %v965 = vsub.f32 %v782, %v923
        %v966 = vsub.f32 %v808, %v926
        %v967 = vsub.f32 %v834, %v929
        %v968 = vsub.f32 %v860, %v932
        %v969 = vsub.f32 %v886, %v935
        %v970 = vsub.f32 %v912, %v938
        %v971 = vmul.f32 %v963, 1.442695
        %v972 = vpow.pop %v971
        %v973 = vmul.f32 %v964, 1.442695
        %v974 = vpow.pop %v973
        %v975 = vmul.f32 %v965, 1.442695
        %v976 = vpow.pop %v975
        %v977 = vmul.f32 %v966, 1.442695
        %v978 = vpow.pop %v977
        %v979 = vmul.f32 %v967, 1.442695
        %v980 = vpow.pop %v979
        %v981 = vmul.f32 %v968, 1.442695
        %v982 = vpow.pop %v981
        %v983 = vmul.f32 %v969, 1.442695
        %v984 = vpow.pop %v983
        %v985 = vmul.f32 %v970, 1.442695
        %v986 = vpow.pop %v985
        %v987 = vmul.f32 %v948, 0.0
        %v988 = vmul.f32 %v950, 0.0
        %v989 = vmul.f32 %v952, 0.0
        %v990 = vmul.f32 %v954, 0.0
        %v991 = vmul.f32 %v956, 0.0
        %v992 = vmul.f32 %v958, 0.0
        %v993 = vmul.f32 %v960, 0.0
        %v994 = vmul.f32 %v962, 0.0
        %v995 = vsel %vm914, %v972, 0.0
        %996 = vadd.xlane.f32.xlu0 %v995
        %v997 = vpop.xlane.xlu0 %996
        %v998 = vsel %vm914, %v974, 0.0
        %999 = vadd.xlane.f32.xlu0 %v998
        %v1000 = vpop.xlane.xlu0 %999
        %v1001 = vsel %vm914, %v976, 0.0
        %1002 = vadd.xlane.f32.xlu0 %v1001
        %v1003 = vpop.xlane.xlu0 %1002
        %v1004 = vsel %vm914, %v978, 0.0
        %1005 = vadd.xlane.f32.xlu0 %v1004
        %v1006 = vpop.xlane.xlu0 %1005
        %v1007 = vsel %vm914, %v980, 0.0
        %1008 = vadd.xlane.f32.xlu0 %v1007
        %v1009 = vpop.xlane.xlu0 %1008
        %v1010 = vsel %vm914, %v982, 0.0
        %1011 = vadd.xlane.f32.xlu0 %v1010
        %v1012 = vpop.xlane.xlu0 %1011
        %v1013 = vsel %vm914, %v984, 0.0
        %1014 = vadd.xlane.f32.xlu0 %v1013
        %v1015 = vpop.xlane.xlu0 %1014
        %v1016 = vsel %vm914, %v986, 0.0
        %1017 = vadd.xlane.f32.xlu0 %v1016
        %v1018 = vpop.xlane.xlu0 %1017
        %v1019 = vadd.f32 %v987, %v997
        %v1020 = vadd.f32 %v988, %v1000
        %v1021 = vadd.f32 %v989, %v1003
        %v1022 = vadd.f32 %v990, %v1006
        %v1023 = vadd.f32 %v991, %v1009
        %v1024 = vadd.f32 %v992, %v1012
        %v1025 = vadd.f32 %v993, %v1015
        %v1026 = vadd.f32 %v994, %v1018
        %v1028 = vsel %vm914, %v972, 0
        %1030 = vmatpush.msra.mxu0 0.0
        %1031 = vmatpush.msra.mxu0 0.0
        %1032 = vmatpush.msra.mxu0 0.0
        %1033 = vmatpush.msra.mxu0 0.0
        %1034 = vmatpush.msra.mxu0 0.0
        %1035 = vmatpush.msra.mxu0 0.0
        %1036 = vmatpush.msra.mxu0 0.0
        %1037 = vmatpush.msra.mxu0 0.0
        %1038 = vmatpush.msra.mxu0 0.0
        %1039 = vmatpush.msra.mxu0 0.0
        %1040 = vmatpush.msra.mxu0 0.0
        %1041 = vmatpush.msra.mxu0 0.0
        %1042 = vmatpush.msra.mxu0 0.0
        %1043 = vmatpush.msra.mxu0 0.0
        %1044 = vmatpush.msra.mxu0 0.0
        %1045 = vmatpush.msra.mxu0 %v698
        %1046 = vmatmul.f32.gmra.mxu0 %v1028
        %v1047 = vpop.f32.mrf.mxu0
        %v1048 = vadd.f32 0.0, %v1047
        %1049 = vdwg.mxu0
        %v1051 = vsel %vm914, %v974, 0
        %1053 = vmatpush.msra.mxu0 0.0
        %1054 = vmatpush.msra.mxu0 0.0
        %1055 = vmatpush.msra.mxu0 0.0
        %1056 = vmatpush.msra.mxu0 0.0
        %1057 = vmatpush.msra.mxu0 0.0
        %1058 = vmatpush.msra.mxu0 0.0
        %1059 = vmatpush.msra.mxu0 0.0
        %1060 = vmatpush.msra.mxu0 0.0
        %1061 = vmatpush.msra.mxu0 0.0
        %1062 = vmatpush.msra.mxu0 0.0
        %1063 = vmatpush.msra.mxu0 0.0
        %1064 = vmatpush.msra.mxu0 0.0
        %1065 = vmatpush.msra.mxu0 0.0
        %1066 = vmatpush.msra.mxu0 0.0
        %1067 = vmatpush.msra.mxu0 0.0
        %1068 = vmatpush.msra.mxu0 %v699
        %1069 = vmatmul.f32.gmra.mxu0 %v1051
        %v1070 = vpop.f32.mrf.mxu0
        %v1071 = vadd.f32 0.0, %v1070
        %1072 = vdwg.mxu0
        %v1074 = vsel %vm914, %v976, 0
        %1076 = vmatpush.msra.mxu0 0.0
        %1077 = vmatpush.msra.mxu0 0.0
        %1078 = vmatpush.msra.mxu0 0.0
        %1079 = vmatpush.msra.mxu0 0.0
        %1080 = vmatpush.msra.mxu0 0.0
        %1081 = vmatpush.msra.mxu0 0.0
        %1082 = vmatpush.msra.mxu0 0.0
        %1083 = vmatpush.msra.mxu0 0.0
        %1084 = vmatpush.msra.mxu0 0.0
        %1085 = vmatpush.msra.mxu0 0.0
        %1086 = vmatpush.msra.mxu0 0.0
        %1087 = vmatpush.msra.mxu0 0.0
        %1088 = vmatpush.msra.mxu0 0.0
        %1089 = vmatpush.msra.mxu0 0.0
        %1090 = vmatpush.msra.mxu0 0.0
        %1091 = vmatpush.msra.mxu0 %v700
        %1092 = vmatmul.f32.gmra.mxu0 %v1074
        %v1093 = vpop.f32.mrf.mxu0
        %v1094 = vadd.f32 0.0, %v1093
        %1095 = vdwg.mxu0
        %v1097 = vsel %vm914, %v978, 0
        %1099 = vmatpush.msra.mxu0 0.0
        %1100 = vmatpush.msra.mxu0 0.0
        %1101 = vmatpush.msra.mxu0 0.0
        %1102 = vmatpush.msra.mxu0 0.0
        %1103 = vmatpush.msra.mxu0 0.0
        %1104 = vmatpush.msra.mxu0 0.0
        %1105 = vmatpush.msra.mxu0 0.0
        %1106 = vmatpush.msra.mxu0 0.0
        %1107 = vmatpush.msra.mxu0 0.0
        %1108 = vmatpush.msra.mxu0 0.0
        %1109 = vmatpush.msra.mxu0 0.0
        %1110 = vmatpush.msra.mxu0 0.0
        %1111 = vmatpush.msra.mxu0 0.0
        %1112 = vmatpush.msra.mxu0 0.0
        %1113 = vmatpush.msra.mxu0 0.0
        %1114 = vmatpush.msra.mxu0 %v701
        %1115 = vmatmul.f32.gmra.mxu0 %v1097
        %v1116 = vpop.f32.mrf.mxu0
        %v1117 = vadd.f32 0.0, %v1116
        %1118 = vdwg.mxu0
        %v1120 = vsel %vm914, %v980, 0
        %1122 = vmatpush.msra.mxu0 0.0
        %1123 = vmatpush.msra.mxu0 0.0
        %1124 = vmatpush.msra.mxu0 0.0
        %1125 = vmatpush.msra.mxu0 0.0
        %1126 = vmatpush.msra.mxu0 0.0
        %1127 = vmatpush.msra.mxu0 0.0
        %1128 = vmatpush.msra.mxu0 0.0
        %1129 = vmatpush.msra.mxu0 0.0
        %1130 = vmatpush.msra.mxu0 0.0
        %1131 = vmatpush.msra.mxu0 0.0
        %1132 = vmatpush.msra.mxu0 0.0
        %1133 = vmatpush.msra.mxu0 0.0
        %1134 = vmatpush.msra.mxu0 0.0
        %1135 = vmatpush.msra.mxu0 0.0
        %1136 = vmatpush.msra.mxu0 0.0
        %1137 = vmatpush.msra.mxu0 %v702
        %1138 = vmatmul.f32.gmra.mxu0 %v1120
        %v1139 = vpop.f32.mrf.mxu0
        %v1140 = vadd.f32 0.0, %v1139
        %1141 = vdwg.mxu0
        %v1143 = vsel %vm914, %v982, 0
        %1145 = vmatpush.msra.mxu0 0.0
        %1146 = vmatpush.msra.mxu0 0.0
        %1147 = vmatpush.msra.mxu0 0.0
        %1148 = vmatpush.msra.mxu0 0.0
        %1149 = vmatpush.msra.mxu0 0.0
        %1150 = vmatpush.msra.mxu0 0.0
        %1151 = vmatpush.msra.mxu0 0.0
        %1152 = vmatpush.msra.mxu0 0.0
        %1153 = vmatpush.msra.mxu0 0.0
        %1154 = vmatpush.msra.mxu0 0.0
        %1155 = vmatpush.msra.mxu0 0.0
        %1156 = vmatpush.msra.mxu0 0.0
        %1157 = vmatpush.msra.mxu0 0.0
        %1158 = vmatpush.msra.mxu0 0.0
        %1159 = vmatpush.msra.mxu0 0.0
        %1160 = vmatpush.msra.mxu0 %v703
        %1161 = vmatmul.f32.gmra.mxu0 %v1143
        %v1162 = vpop.f32.mrf.mxu0
        %v1163 = vadd.f32 0.0, %v1162
        %1164 = vdwg.mxu0
        %v1166 = vsel %vm914, %v984, 0
        %1168 = vmatpush.msra.mxu0 0.0
        %1169 = vmatpush.msra.mxu0 0.0
        %1170 = vmatpush.msra.mxu0 0.0
        %1171 = vmatpush.msra.mxu0 0.0
        %1172 = vmatpush.msra.mxu0 0.0
        %1173 = vmatpush.msra.mxu0 0.0
        %1174 = vmatpush.msra.mxu0 0.0
        %1175 = vmatpush.msra.mxu0 0.0
        %1176 = vmatpush.msra.mxu0 0.0
        %1177 = vmatpush.msra.mxu0 0.0
        %1178 = vmatpush.msra.mxu0 0.0
        %1179 = vmatpush.msra.mxu0 0.0
        %1180 = vmatpush.msra.mxu0 0.0
        %1181 = vmatpush.msra.mxu0 0.0
        %1182 = vmatpush.msra.mxu0 0.0
        %1183 = vmatpush.msra.mxu0 %v704
        %1184 = vmatmul.f32.gmra.mxu0 %v1166
        %v1185 = vpop.f32.mrf.mxu0
        %v1186 = vadd.f32 0.0, %v1185
        %1187 = vdwg.mxu0
        %v1189 = vsel %vm914, %v986, 0
        %1191 = vmatpush.msra.mxu0 0.0
        %1192 = vmatpush.msra.mxu0 0.0
        %1193 = vmatpush.msra.mxu0 0.0
        %1194 = vmatpush.msra.mxu0 0.0
        %1195 = vmatpush.msra.mxu0 0.0
        %1196 = vmatpush.msra.mxu0 0.0
        %1197 = vmatpush.msra.mxu0 0.0
        %1198 = vmatpush.msra.mxu0 0.0
        %1199 = vmatpush.msra.mxu0 0.0
        %1200 = vmatpush.msra.mxu0 0.0
        %1201 = vmatpush.msra.mxu0 0.0
        %1202 = vmatpush.msra.mxu0 0.0
        %1203 = vmatpush.msra.mxu0 0.0
        %1204 = vmatpush.msra.mxu0 0.0
        %1205 = vmatpush.msra.mxu0 0.0
        %1206 = vmatpush.msra.mxu0 %v705
        %1207 = vmatmul.f32.gmra.mxu0 %v1189
        %v1208 = vpop.f32.mrf.mxu0
        %v1209 = vadd.f32 0.0, %v1208
        %1210 = vdwg.mxu0
        %v1211 = vadd.f32 %v987, %v1048
        %v1212 = vadd.f32 %v988, %v1071
        %v1213 = vadd.f32 %v989, %v1094
        %v1214 = vadd.f32 %v990, %v1117
        %v1215 = vadd.f32 %v991, %v1140
        %v1216 = vadd.f32 %v992, %v1163
        %v1217 = vadd.f32 %v993, %v1186
        %v1218 = vadd.f32 %v994, %v1209
        %v1219 = vrcp.pop %v1019
        %v1220 = vrcp.pop %v1020
        %v1221 = vrcp.pop %v1021
        %v1222 = vrcp.pop %v1022
        %v1223 = vrcp.pop %v1023
        %v1224 = vrcp.pop %v1024
        %v1225 = vrcp.pop %v1025
        %v1226 = vrcp.pop %v1026
        %v1227 = vmul.f32 %v1211, %v1219
        %v1228 = vmul.f32 %v1212, %v1220
        %v1229 = vmul.f32 %v1213, %v1221
        %v1230 = vmul.f32 %v1214, %v1222
        %v1231 = vmul.f32 %v1215, %v1223
        %v1232 = vmul.f32 %v1216, %v1224
        %v1233 = vmul.f32 %v1217, %v1225
        %v1234 = vmul.f32 %v1218, %v1226
        %1235 = vst.msk [vmem:[#allocation5] sm:$0xff] %vm644, %v1227
        %1237 = vrot.lane.b32.xlu0 %v1228, 4
        %v1238 = vpop.permute.xlu0 %1237
        %vm1240 = vcmask 64544
        %1241 = vst.msk [vmem:[#allocation5] sm:$0xff] %vm1240, %v1238
        %1243 = vrot.lane.b32.xlu0 %v1229, 8
        %v1244 = vpop.permute.xlu0 %1243
        %vm1246 = vcmask 97344
        %1247 = vst.msk [vmem:[#allocation5] sm:$0xff] %vm1246, %v1244
        %1249 = vrot.lane.b32.xlu0 %v1230, 12
        %v1250 = vpop.permute.xlu0 %1249
        %vm1252 = vcmask 130144
        %1253 = vst.msk [vmem:[#allocation5] sm:$0xff] %vm1252, %v1250
        %1255 = vrot.lane.b32.xlu0 %v1231, 16
        %v1256 = vpop.permute.xlu0 %1255
        %vm1258 = vcmask 162944
        %1259 = vst.msk [vmem:[#allocation5] sm:$0xff] %vm1258, %v1256
        %1261 = vrot.lane.b32.xlu0 %v1232, 20
        %v1262 = vpop.permute.xlu0 %1261
        %vm1264 = vcmask 195744
        %1265 = vst.msk [vmem:[#allocation5] sm:$0xff] %vm1264, %v1262
        %1267 = vrot.lane.b32.xlu0 %v1233, 24
        %v1268 = vpop.permute.xlu0 %1267
        %vm1270 = vcmask 228544
        %1271 = vst.msk [vmem:[#allocation5] sm:$0xff] %vm1270, %v1268
        %1273 = vrot.lane.b32.xlu0 %v1234, 28
        %v1274 = vpop.permute.xlu0 %1273
        %vm1276 = vcmask 261344
        %1277 = vst.msk [vmem:[#allocation5] sm:$0xff] %vm1276, %v1274
        %v1278 = vld [vmem:[#allocation5] sm:$0xff]
        %v1279 = vld [vmem:[%s4] sm:$0xff]
        %v1280 = vld [vmem:[%s4 + $0x8] sm:$0xff]
        %v1281 = vld [vmem:[%s4 + $0x10] sm:$0xff]
        %v1282 = vld [vmem:[%s4 + $0x18] sm:$0xff]
        %v1283 = vld [vmem:[%s5] sm:$0x1]
        %v1285 = vperm.slane %v1283, 0
        %v1288 = vsel %vm620, %v1278, 0
        %1290 = vmatpush.msra.mxu0 0.0
        %1291 = vmatpush.msra.mxu0 0.0
        %1292 = vmatpush.msra.mxu0 0.0
        %1293 = vmatpush.msra.mxu0 0.0
        %1294 = vmatpush.msra.mxu0 0.0
        %1295 = vmatpush.msra.mxu0 0.0
        %1296 = vmatpush.msra.mxu0 0.0
        %1297 = vmatpush.msra.mxu0 0.0
        %1298 = vmatpush.msra.mxu0 0.0
        %1299 = vmatpush.msra.mxu0 0.0
        %1300 = vmatpush.msra.mxu0 0.0
        %1301 = vmatpush.msra.mxu0 0.0
        %1302 = vmatpush.msra.mxu0 %v1282
        %1303 = vmatpush.msra.mxu0 %v1281
        %1304 = vmatpush.msra.mxu0 %v1280
        %1305 = vmatpush.msra.mxu0 %v1279
        %1306 = vmatmul.f32.gmra.mxu0 %v1288
        %v1307 = vpop.f32.mrf.mxu0
        %v1308 = vadd.f32 %v1285, %v1307
        %1309 = vdwg.mxu0
        %v1310 = vadd.f32 %v615, %v1308
        %v1311 = vld [vmem:[%s6] sm:$0x1]
        %v1312 = vld [vmem:[%s7] sm:$0x1]
        %v1313 = vsel %vm620, %v1310, 0.0
        %1314 = vadd.xlane.f32.xlu0 %v1313
        %v1315 = vpop.xlane.xlu0 %1314
        %v1316 = vrcp.pop 32.0
        %v1317 = vmul.f32 32.0, %v1316
        %v1318 = vsub.f32 1.0, %v1317
        %v1319 = vmul.f32 %v1316, %v1318
        %v1320 = vadd.f32 %v1316, %v1319
        %vm1321 = vweird.f32 %v1316
        %v1322 = vsel %vm1321, %v1316, %v1320
        %v1323 = vmul.f32 %v1315, %v1322
        %v1324 = vsub.f32 %v1310, %v1323
        %v1325 = vmul.f32 %v1324, %v1324
        %v1326 = vsel %vm620, %v1325, 0.0
        %1327 = vadd.xlane.f32.xlu0 %v1326
        %v1328 = vpop.xlane.xlu0 %1327
        %v1329 = vmul.f32 %v1328, %v1322
        %v1330 = vadd.f32 %v1329, 1e-05
        %v1331 = vrsqrt.pop %v1330
        %v1332 = vmul.f32 %v1331, %v1330
        %v1333 = vmul.f32 %v1332, %v1331
        %v1334 = vmul.f32 0.5, %v1333
        %v1335 = vsub.f32 1.5, %v1334
        %v1336 = vmul.f32 %v1331, %v1335
        %vm1337 = vweird.f32 %v1330
        %vm1338 = vweird.f32 %v1331
        %vm1339 = vmor %vm1337, %vm1338
        %v1340 = vsel %vm1339, %v1331, %v1336
        %v1341 = vmul.f32 %v1324, %v1340
        %v1343 = vperm.slane %v1311, 0
        %v1345 = vmul.f32 %v1341, %v1343
        %v1347 = vperm.slane %v1312, 0
        %v1349 = vadd.f32 %v1345, %v1347
        %v1350 = vld [vmem:[%s8] sm:$0xff]
        %v1351 = vld [vmem:[%s8 + $0x8] sm:$0xff]
        %v1352 = vld [vmem:[%s8 + $0x10] sm:$0xff]
        %v1353 = vld [vmem:[%s8 + $0x18] sm:$0xff]
        %v1354 = vld [vmem:[%s9] sm:$0x1]
        %v1356 = vperm.slane %v1354, 0
        %v1359 = vsel %vm620, %v1349, 0
        %1361 = vmatpush.msra.mxu0 0.0
        %1362 = vmatpush.msra.mxu0 0.0
        %1363 = vmatpush.msra.mxu0 0.0
        %1364 = vmatpush.msra.mxu0 0.0
        %1365 = vmatpush.msra.mxu0 0.0
        %1366 = vmatpush.msra.mxu0 0.0
        %1367 = vmatpush.msra.mxu0 0.0
        %1368 = vmatpush.msra.mxu0 0.0
        %1369 = vmatpush.msra.mxu0 0.0
        %1370 = vmatpush.msra.mxu0 0.0
        %1371 = vmatpush.msra.mxu0 0.0
        %1372 = vmatpush.msra.mxu0 0.0
        %1373 = vmatpush.msra.mxu0 %v1353
        %1374 = vmatpush.msra.mxu0 %v1352
        %1375 = vmatpush.msra.mxu0 %v1351
        %1376 = vmatpush.msra.mxu0 %v1350
        %1377 = vmatmul.f32.gmra.mxu0 %v1359
        %v1378 = vpop.f32.mrf.mxu0
        %v1379 = vadd.f32 %v1356, %v1378
        %1380 = vdwg.mxu0
        %v1381 = vmul.f32 %v1379, 0.5
        %v1382 = vmul.f32 %v1379, 0.044715
        %v1383 = vmul.f32 %v1382, %v1379
        %v1384 = vmul.f32 %v1383, %v1379
        %v1385 = vadd.f32 %v1379, %v1384
        %v1386 = vmul.f32 %v1385, 0.7978846
        %v1387 = vtanh.pop %v1386
        %v1388 = vadd.f32 %v1387, 1.0
        %v1389 = vmul.f32 %v1381, %v1388
        %v1390 = vld [vmem:[%s10] sm:$0xff]
        %v1391 = vld [vmem:[%s10 + $0x8] sm:$0xff]
        %v1392 = vld [vmem:[%s10 + $0x10] sm:$0xff]
        %v1393 = vld [vmem:[%s10 + $0x18] sm:$0xff]
        %v1394 = vld [vmem:[%s10 + $0x20] sm:$0xff]
        %v1395 = vld [vmem:[%s10 + $0x28] sm:$0xff]
        %v1396 = vld [vmem:[%s10 + $0x30] sm:$0xff]
        %v1397 = vld [vmem:[%s10 + $0x38] sm:$0xff]
        %v1398 = vld [vmem:[%s10 + $0x40] sm:$0xff]
        %v1399 = vld [vmem:[%s10 + $0x48] sm:$0xff]
        %v1400 = vld [vmem:[%s10 + $0x50] sm:$0xff]
        %v1401 = vld [vmem:[%s10 + $0x58] sm:$0xff]
        %v1402 = vld [vmem:[%s10 + $0x60] sm:$0xff]
        %v1403 = vld [vmem:[%s10 + $0x68] sm:$0xff]
        %v1404 = vld [vmem:[%s10 + $0x70] sm:$0xff]
        %v1405 = vld [vmem:[%s10 + $0x78] sm:$0xff]
        %v1406 = vld [vmem:[%s11] sm:$0x1]
        %v1408 = vperm.slane %v1406, 0
        %1410 = vmatpush.msra.mxu0 %v1405
        %1411 = vmatpush.msra.mxu0 %v1404
        %1412 = vmatpush.msra.mxu0 %v1403
        %1413 = vmatpush.msra.mxu0 %v1402
        %1414 = vmatpush.msra.mxu0 %v1401
        %1415 = vmatpush.msra.mxu0 %v1400
        %1416 = vmatpush.msra.mxu0 %v1399
        %1417 = vmatpush.msra.mxu0 %v1398
        %1418 = vmatpush.msra.mxu0 %v1397
        %1419 = vmatpush.msra.mxu0 %v1396
        %1420 = vmatpush.msra.mxu0 %v1395
        %1421 = vmatpush.msra.mxu0 %v1394
        %1422 = vmatpush.msra.mxu0 %v1393
        %1423 = vmatpush.msra.mxu0 %v1392
        %1424 = vmatpush.msra.mxu0 %v1391
        %1425 = vmatpush.msra.mxu0 %v1390
        %1426 = vmatmul.f32.gmra.mxu0 %v1389
        %v1427 = vpop.f32.mrf.mxu0
        %v1428 = vadd.f32 %v1408, %v1427
        %1429 = vdwg.mxu0
        %v1430 = vadd.f32 %v1349, %v1428
        %v1431 = vld [vmem:[%s12] sm:$0x1]
        %v1432 = vld [vmem:[%s13] sm:$0x1]
        %v1433 = vsel %vm620, %v1430, 0.0
        %1434 = vadd.xlane.f32.xlu0 %v1433
        %v1435 = vpop.xlane.xlu0 %1434
        %v1436 = vmul.f32 %v1435, %v1322
        %v1437 = vsub.f32 %v1430, %v1436
        %v1438 = vmul.f32 %v1437, %v1437
        %v1439 = vsel %vm620, %v1438, 0.0
        %1440 = vadd.xlane.f32.xlu0 %v1439
        %v1441 = vpop.xlane.xlu0 %1440
        %v1442 = vmul.f32 %v1441, %v1322
        %v1443 = vadd.f32 %v1442, 1e-05
        %v1444 = vrsqrt.pop %v1443
        %v1445 = vmul.f32 %v1444, %v1443
        %v1446 = vmul.f32 %v1445, %v1444
        %v1447 = vmul.f32 0.5, %v1446
        %v1448 = vsub.f32 1.5, %v1447
        %v1449 = vmul.f32 %v1444, %v1448
        %vm1450 = vweird.f32 %v1443
        %vm1451 = vweird.f32 %v1444
        %vm1452 = vmor %vm1450, %vm1451
        %v1453 = vsel %vm1452, %v1444, %v1449
        %v1454 = vmul.f32 %v1437, %v1453
        %v1456 = vperm.slane %v1431, 0
        %v1458 = vmul.f32 %v1454, %v1456
        %v1460 = vperm.slane %v1432, 0
        %v1462 = vadd.f32 %v1458, %v1460
        %1463 = vst.msk [vmem:[%s493] sm:$0xff] %vm620, %v1462
        %s1464 = sand.u32 %s356, 1
        %s1465 = scalar_lea.sflag [#allocation7], %s1464
        %s1466 = sand.u32 %s356, 1
        %s1467 = smul.addr %s1466, 8
        %s1468 = scalar_lea.vmem [#allocation6], %s1467
        // Predicated region
        $region81: #{tpu_custom_call.1} parent=75 // pred_check
          %p1469 = pneg %p366
        $region82: #{tpu_custom_call.1} parent=75 // pred_check_branch
          %1471 = sbr.rel (%p1469) target = $region84
        $region83: #{tpu_custom_call.1} parent=75 // pred_region
          %1473 = vsyncadd %s1465, 0
          %s1474 = sadd.s32 %s33, %s32
          %s1475 = smul.addr %s1474, 8
          %s1476 = scalar_lea.hbm %s14, %s1475
          %s1478 = sshll.u32 %s1468, 4
          %s1479 = int_to_ptr.vmem [resolvable:$true] %s1478
          %s1480 = sshll.u32 %s1476, 4
          %s1481 = int_to_ptr.hbm [resolvable:$true] %s1480
          %1483 = dma.vmem_to_hbm [thread:$0]  %s1479, 128, %s1481, %s1465
        $region84: #{tpu_custom_call.1} parent=75 // pred_fallthru
          _
      $region76: #{tpu_custom_call.1} parent=5 // pred_fallthru
        _
      %p1484 = scmp.le.s32.totalorder 2, %s23
      // Predicated region
      $region85: #{tpu_custom_call.1} parent=5 // pred_check
        %p1485 = pneg %p1484
      $region86: #{tpu_custom_call.1} parent=5 // pred_check_branch
        %1487 = sbr.rel (%p1485) target = $region88
      $region87: #{tpu_custom_call.1} parent=5 // pred_region
        %s1488 = ssub.s32 %s23, 2
        // Predicated region
        $region89: #{tpu_custom_call.1} parent=87 // pred_check
          %p1489 = pneg %p372
        $region90: #{tpu_custom_call.1} parent=87 // pred_check_branch
          %1491 = sbr.rel (%p1489) target = $region92
        $region91: #{tpu_custom_call.1} parent=87 // pred_region
          %s1492 = sand.u32 %s357, 1
          %s1493 = scalar_lea.sflag [#allocation7], %s1492
          %s1494 = sand.u32 %s357, 1
          %s1495 = smul.addr %s1494, 8
          %s1496 = scalar_lea.vmem [#allocation6], %s1495
          %1498 = dma.done %s1493, 128
        $region92: #{tpu_custom_call.1} parent=87 // pred_fallthru
          _
      $region88: #{tpu_custom_call.1} parent=5 // pred_fallthru
        _
    $region6: #{tpu_custom_call.1} parent=1 // loop_footer
      %s27 = sadd.s32 1, %s23
    $region7: #{tpu_custom_call.1} parent=1 // loop_footer_branch
      %22 = sbr.rel target = $region3
    $region8: #{tpu_custom_call.1} parent=1 // loop_exit
      _
    %1499 = vsyncpa [#allocation7], 1
    %s1500 = scalar_lea.sflag [#allocation7], 1
    %1501 = vsyncpa %s1500, 1

// kernel: tpu_custom_call.1
$region0: #{tpu_custom_call.1}
  #allocation0 [shape = 'u32[]', space=smem, size = 0x4, offset = 0x4, fixed_abs, tag = 'smem constant byte address 0x4 - core index']
  #allocation1 [shape = 'u32[72,128]{1,0:T(1,128)}', space=vmem, size = 0x9000, scoped, tag = 'internal scratch']
  #allocation2 [shape = 'f32[8,8,4]{2,1,0:T(8,128)}', space=vmem, size = 0x8000, scoped, tag = 'scratch operand']
  #allocation3 [shape = 'f32[8,8,4]{2,1,0:T(8,128)}', space=vmem, size = 0x8000, scoped, tag = 'scratch operand']
  #allocation4 [shape = 'f32[8,8,4]{2,1,0:T(8,128)}', space=vmem, size = 0x8000, scoped, tag = 'scratch operand']
  #allocation5 [shape = 'f32[8,32]{1,0:T(8,128)}', space=vmem, size = 0x1000, scoped, tag = 'scratch operand']
  %s0 = inlined_call_operand.vmem [shape: f32[2,8,32], index: 0, kind: input, shape index: {}]
  %s1 = inlined_call_operand.vmem [shape: f32[2,8,32], index: 1, kind: input, shape index: {}]
  %s2 = inlined_call_operand.vmem [shape: f32[32,32], index: 2, kind: input, shape index: {}]
  %s3 = inlined_call_operand.vmem [shape: f32[32,64], index: 3, kind: input, shape index: {}]
  %s4 = inlined_call_operand.vmem [shape: f32[32,32], index: 4, kind: input, shape index: {}]
  %s5 = inlined_call_operand.vmem [shape: f32[1,32], index: 5, kind: input, shape index: {}]
  %s6 = inlined_call_operand.vmem [shape: f32[1,32], index: 6, kind: input, shape index: {}]
  %s7 = inlined_call_operand.vmem [shape: f32[1,32], index: 7, kind: input, shape index: {}]
  %s8 = inlined_call_operand.vmem [shape: f32[32,128], index: 8, kind: input, shape index: {}]
  %s9 = inlined_call_operand.vmem [shape: f32[1,128], index: 9, kind: input, shape index: {}]
  %s10 = inlined_call_operand.vmem [shape: f32[128,32], index: 10, kind: input, shape index: {}]
  %s11 = inlined_call_operand.vmem [shape: f32[1,32], index: 11, kind: input, shape index: {}]
  %s12 = inlined_call_operand.vmem [shape: f32[1,32], index: 12, kind: input, shape index: {}]
  %s13 = inlined_call_operand.vmem [shape: f32[1,32], index: 13, kind: input, shape index: {}]
  %s14 = inlined_call_operand.hbm [shape: f32[2,8,32], index: 14, kind: output, shape index: {}]
  %s15 = sld [smem:[#allocation0]]
  $region93: #{tpu_custom_call.1} parent=0
    _
  %s17 = ssub.s32 1, %s15
  %s18 = scalar_select 0, %s17, %s15
  $region1: #{tpu_custom_call.1} parent=0
    #allocation6 [shape = 'u8[8192]{0}', space=vmem, size = 0x2000, scoped, tag = 'output window, operand 0']
    #allocation7 [shape = 's32[2]{0}', space=sflag, size = 0x8, scoped, tag = 'scoped memory for tpu_custom_call.1']
    %19 = vsyncpa [#allocation7], 0
    %s20 = scalar_lea.sflag [#allocation7], 1
    %21 = vsyncpa %s20, 0
    loop: start=0, step=1, limit=4
    $region2: #{tpu_custom_call.1} parent=1 // loop_pre_header
      _
    $region3: #{tpu_custom_call.1} parent=1 // loop_header
      %s23 = sphi 0, %s27
      %p24 = scmp.ge.s32.totalorder %s23, 4
      %s30 = sphi 0, %s42
      %s31 = sphi 0, %s38
      %s32 = sphi 0, %s30
      %s33 = sphi 0, %s31
      %s34 = sphi 0, %s32
      %s35 = sphi 0, %s33
      %s47 = sphi 0, %s49
      %s50 = sphi 0, %s47
      %s51 = sphi 0, %s50
      %s67 = sphi 0, %s51
      %s73 = sphi 0, %s75
      %s76 = sphi 0, %s73
      %s77 = sphi 0, %s76
      %s93 = sphi 0, %s77
      %s97 = sphi 0, %s97
      %s99 = sphi 0, %s97
      %s100 = sphi 0, %s99
      %s114 = sphi 0, %s100
      %s118 = sphi 0, %s118
      %s120 = sphi 0, %s118
      %s121 = sphi 0, %s120
      %s135 = sphi 0, %s121
      %s139 = sphi 0, %s139
      %s141 = sphi 0, %s139
      %s142 = sphi 0, %s141
      %s156 = sphi 0, %s142
      %s160 = sphi 0, %s160
      %s162 = sphi 0, %s160
      %s163 = sphi 0, %s162
      %s177 = sphi 0, %s163
      %s181 = sphi 0, %s181
      %s183 = sphi 0, %s181
      %s184 = sphi 0, %s183
      %s198 = sphi 0, %s184
      %s202 = sphi 0, %s202
      %s204 = sphi 0, %s202
      %s205 = sphi 0, %s204
      %s219 = sphi 0, %s205
      %s223 = sphi 0, %s223
      %s225 = sphi 0, %s223
      %s226 = sphi 0, %s225
      %s240 = sphi 0, %s226
      %s244 = sphi 0, %s244
      %s246 = sphi 0, %s244
      %s247 = sphi 0, %s246
      %s261 = sphi 0, %s247
      %s265 = sphi 0, %s265
      %s267 = sphi 0, %s265
      %s268 = sphi 0, %s267
      %s282 = sphi 0, %s268
      %s286 = sphi 0, %s286
      %s288 = sphi 0, %s286
      %s289 = sphi 0, %s288
      %s303 = sphi 0, %s289
      %s307 = sphi 0, %s307
      %s309 = sphi 0, %s307
      %s310 = sphi 0, %s309
      %s324 = sphi 0, %s310
      %s328 = sphi 0, %s328
      %s330 = sphi 0, %s328
      %s331 = sphi 0, %s330
      %s345 = sphi 0, %s331
      %s353 = sphi 0, %s355
      %s356 = sphi 0, %s353
      %s357 = sphi 0, %s356
      %s373 = sphi 0, %s357
    $region4: #{tpu_custom_call.1} parent=1 // loop_header_branch
      %26 = sbr.rel (%p24) target = $region8
    $region5: #{tpu_custom_call.1} parent=1 // loop_body
      %s28 = ssub.s32 %s23, 1
      %s29 = ssub.s32 %s23, 2
      %s36 = sadd.s32 1, %s31
      %p37 = scmp.ge.s32.totalorder %s36, 1
      %s38 = scalar_select %p37, 0, %s36
      %s39 = sadd.s32 1, %s30
      %s40 = scalar_select %p37, %s39, %s30
      %p41 = scmp.ge.s32.totalorder %s40, 2
      %s42 = scalar_select %p41, 0, %s40
      %s43 = ssub.s32 %s30, %s42
      %s44 = ssub.s32 %s31, %s38
      %s45 = sor.u32 %s43, %s44
      %p46 = scmp.eq.s32.totalorder %s45, 0
      %s48 = sadd.s32 %s47, 1
      %s49 = scalar_select %p46, %s47, %s48
      %p52 = pneg %p46
      %p53 = scmp.eq.s32.totalorder %s23, 1
      %p54 = por %p52, %p53
      %p55 = scmp.ne.s32.totalorder %s47, %s50
      %p56 = scmp.eq.s32.totalorder %s23, 0
      %p57 = por %p55, %p56
      %p58 = scmp.ne.s32.totalorder %s47, %s50
      %p59 = scmp.eq.s32.totalorder %s28, 1
      %p60 = por %p58, %p59
      %p61 = scmp.ne.s32.totalorder %s50, %s51
      %p62 = scmp.eq.s32.totalorder %s28, 0
      %p63 = por %p61, %p62
      %p64 = scmp.ne.s32.totalorder %s50, %s51
      %p65 = scmp.eq.s32.totalorder %s29, 1
      %p66 = por %p64, %p65
      %p68 = scmp.ne.s32.totalorder %s51, %s67
      %p69 = scmp.eq.s32.totalorder %s29, 0
      %p70 = por %p68, %p69
      %s71 = ssub.s32 %s30, %s42
      %p72 = scmp.eq.s32.totalorder %s71, 0
      %s74 = sadd.s32 %s73, 1
      %s75 = scalar_select %p72, %s73, %s74
      %p78 = pneg %p72
      %p79 = scmp.eq.s32.totalorder %s23, 1
      %p80 = por %p78, %p79
      %p81 = scmp.ne.s32.totalorder %s73, %s76
      %p82 = scmp.eq.s32.totalorder %s23, 0
      %p83 = por %p81, %p82
      %p84 = scmp.ne.s32.totalorder %s73, %s76
      %p85 = scmp.eq.s32.totalorder %s28, 1
      %p86 = por %p84, %p85
      %p87 = scmp.ne.s32.totalorder %s76, %s77
      %p88 = scmp.eq.s32.totalorder %s28, 0
      %p89 = por %p87, %p88
      %p90 = scmp.ne.s32.totalorder %s76, %s77
      %p91 = scmp.eq.s32.totalorder %s29, 1
      %p92 = por %p90, %p91
      %p94 = scmp.ne.s32.totalorder %s77, %s93
      %p95 = scmp.eq.s32.totalorder %s29, 0
      %p96 = por %p94, %p95
      %s98 = sadd.s32 %s97, 1
      %p101 = scmp.eq.s32.totalorder %s23, 1
      %p102 = scmp.ne.s32.totalorder %s97, %s99
      %p103 = scmp.eq.s32.totalorder %s23, 0
      %p104 = por %p102, %p103
      %p105 = scmp.ne.s32.totalorder %s97, %s99
      %p106 = scmp.eq.s32.totalorder %s28, 1
      %p107 = por %p105, %p106
      %p108 = scmp.ne.s32.totalorder %s99, %s100
      %p109 = scmp.eq.s32.totalorder %s28, 0
      %p110 = por %p108, %p109
      %p111 = scmp.ne.s32.totalorder %s99, %s100
      %p112 = scmp.eq.s32.totalorder %s29, 1
      %p113 = por %p111, %p112
      %p115 = scmp.ne.s32.totalorder %s100, %s114
      %p116 = scmp.eq.s32.totalorder %s29, 0
      %p117 = por %p115, %p116
      %s119 = sadd.s32 %s118, 1
      %p122 = scmp.eq.s32.totalorder %s23, 1
      %p123 = scmp.ne.s32.totalorder %s118, %s120
      %p124 = scmp.eq.s32.totalorder %s23, 0
      %p125 = por %p123, %p124
      %p126 = scmp.ne.s32.totalorder %s118, %s120
      %p127 = scmp.eq.s32.totalorder %s28, 1
      %p128 = por %p126, %p127
      %p129 = scmp.ne.s32.totalorder %s120, %s121
      %p130 = scmp.eq.s32.totalorder %s28, 0
      %p131 = por %p129, %p130
      %p132 = scmp.ne.s32.totalorder %s120, %s121
      %p133 = scmp.eq.s32.totalorder %s29, 1
      %p134 = por %p132, %p133
      %p136 = scmp.ne.s32.totalorder %s121, %s135
      %p137 = scmp.eq.s32.totalorder %s29, 0
      %p138 = por %p136, %p137
      %s140 = sadd.s32 %s139, 1
      %p143 = scmp.eq.s32.totalorder %s23, 1
      %p144 = scmp.ne.s32.totalorder %s139, %s141
      %p145 = scmp.eq.s32.totalorder %s23, 0
      %p146 = por %p144, %p145
      %p147 = scmp.ne.s32.totalorder %s139, %s141
      %p148 = scmp.eq.s32.totalorder %s28, 1
      %p149 = por %p147, %p148
      %p150 = scmp.ne.s32.totalorder %s141, %s142
      %p151 = scmp.eq.s32.totalorder %s28, 0
      %p152 = por %p150, %p151
      %p153 = scmp.ne.s32.totalorder %s141, %s142
      %p154 = scmp.eq.s32.totalorder %s29, 1
      %p155 = por %p153, %p154
      %p157 = scmp.ne.s32.totalorder %s142, %s156
      %p158 = scmp.eq.s32.totalorder %s29, 0
      %p159 = por %p157, %p158
      %s161 = sadd.s32 %s160, 1
      %p164 = scmp.eq.s32.totalorder %s23, 1
      %p165 = scmp.ne.s32.totalorder %s160, %s162
      %p166 = scmp.eq.s32.totalorder %s23, 0
      %p167 = por %p165, %p166
      %p168 = scmp.ne.s32.totalorder %s160, %s162
      %p169 = scmp.eq.s32.totalorder %s28, 1
      %p170 = por %p168, %p169
      %p171 = scmp.ne.s32.totalorder %s162, %s163
      %p172 = scmp.eq.s32.totalorder %s28, 0
      %p173 = por %p171, %p172
      %p174 = scmp.ne.s32.totalorder %s162, %s163
      %p175 = scmp.eq.s32.totalorder %s29, 1
      %p176 = por %p174, %p175
      %p178 = scmp.ne.s32.totalorder %s163, %s177
      %p179 = scmp.eq.s32.totalorder %s29, 0
      %p180 = por %p178, %p179
      %s182 = sadd.s32 %s181, 1
      %p185 = scmp.eq.s32.totalorder %s23, 1
      %p186 = scmp.ne.s32.totalorder %s181, %s183
      %p187 = scmp.eq.s32.totalorder %s23, 0
      %p188 = por %p186, %p187
      %p189 = scmp.ne.s32.totalorder %s181, %s183
      %p190 = scmp.eq.s32.totalorder %s28, 1
      %p191 = por %p189, %p190
      %p192 = scmp.ne.s32.totalorder %s183, %s184
      %p193 = scmp.eq.s32.totalorder %s28, 0
      %p194 = por %p192, %p193
      %p195 = scmp.ne.s32.totalorder %s183, %s184
      %p196 = scmp.eq.s32.totalorder %s29, 1
      %p197 = por %p195, %p196
      %p199 = scmp.ne.s32.totalorder %s184, %s198
      %p200 = scmp.eq.s32.totalorder %s29, 0
      %p201 = por %p199, %p200
      %s203 = sadd.s32 %s202, 1
      %p206 = scmp.eq.s32.totalorder %s23, 1
      %p207 = scmp.ne.s32.totalorder %s202, %s204
      %p208 = scmp.eq.s32.totalorder %s23, 0
      %p209 = por %p207, %p208
      %p210 = scmp.ne.s32.totalorder %s202, %s204
      %p211 = scmp.eq.s32.totalorder %s28, 1
      %p212 = por %p210, %p211
      %p213 = scmp.ne.s32.totalorder %s204, %s205
      %p214 = scmp.eq.s32.totalorder %s28, 0
      %p215 = por %p213, %p214
      %p216 = scmp.ne.s32.totalorder %s204, %s205
      %p217 = scmp.eq.s32.totalorder %s29, 1
      %p218 = por %p216, %p217
      %p220 = scmp.ne.s32.totalorder %s205, %s219
      %p221 = scmp.eq.s32.totalorder %s29, 0
      %p222 = por %p220, %p221
      %s224 = sadd.s32 %s223, 1
      %p227 = scmp.eq.s32.totalorder %s23, 1
      %p228 = scmp.ne.s32.totalorder %s223, %s225
      %p229 = scmp.eq.s32.totalorder %s23, 0
      %p230 = por %p228, %p229
      %p231 = scmp.ne.s32.totalorder %s223, %s225
      %p232 = scmp.eq.s32.totalorder %s28, 1
      %p233 = por %p231, %p232
      %p234 = scmp.ne.s32.totalorder %s225, %s226
      %p235 = scmp.eq.s32.totalorder %s28, 0
      %p236 = por %p234, %p235
      %p237 = scmp.ne.s32.totalorder %s225, %s226
      %p238 = scmp.eq.s32.totalorder %s29, 1
      %p239 = por %p237, %p238
      %p241 = scmp.ne.s32.totalorder %s226, %s240
      %p242 = scmp.eq.s32.totalorder %s29, 0
      %p243 = por %p241, %p242
      %s245 = sadd.s32 %s244, 1
      %p248 = scmp.eq.s32.totalorder %s23, 1
      %p249 = scmp.ne.s32.totalorder %s244, %s246
      %p250 = scmp.eq.s32.totalorder %s23, 0
      %p251 = por %p249, %p250
      %p252 = scmp.ne.s32.totalorder %s244, %s246
      %p253 = scmp.eq.s32.totalorder %s28, 1
      %p254 = por %p252, %p253
      %p255 = scmp.ne.s32.totalorder %s246, %s247
      %p256 = scmp.eq.s32.totalorder %s28, 0
      %p257 = por %p255, %p256
      %p258 = scmp.ne.s32.totalorder %s246, %s247
      %p259 = scmp.eq.s32.totalorder %s29, 1
      %p260 = por %p258, %p259
      %p262 = scmp.ne.s32.totalorder %s247, %s261
      %p263 = scmp.eq.s32.totalorder %s29, 0
      %p264 = por %p262, %p263
      %s266 = sadd.s32 %s265, 1
      %p269 = scmp.eq.s32.totalorder %s23, 1
      %p270 = scmp.ne.s32.totalorder %s265, %s267
      %p271 = scmp.eq.s32.totalorder %s23, 0
      %p272 = por %p270, %p271
      %p273 = scmp.ne.s32.totalorder %s265, %s267
      %p274 = scmp.eq.s32.totalorder %s28, 1
      %p275 = por %p273, %p274
      %p276 = scmp.ne.s32.totalorder %s267, %s268
      %p277 = scmp.eq.s32.totalorder %s28, 0
      %p278 = por %p276, %p277
      %p279 = scmp.ne.s32.totalorder %s267, %s268
      %p280 = scmp.eq.s32.totalorder %s29, 1
      %p281 = por %p279, %p280
      %p283 = scmp.ne.s32.totalorder %s268, %s282
      %p284 = scmp.eq.s32.totalorder %s29, 0
      %p285 = por %p283, %p284
      %s287 = sadd.s32 %s286, 1
      %p290 = scmp.eq.s32.totalorder %s23, 1
      %p291 = scmp.ne.s32.totalorder %s286, %s288
      %p292 = scmp.eq.s32.totalorder %s23, 0
      %p293 = por %p291, %p292
      %p294 = scmp.ne.s32.totalorder %s286, %s288
      %p295 = scmp.eq.s32.totalorder %s28, 1
      %p296 = por %p294, %p295
      %p297 = scmp.ne.s32.totalorder %s288, %s289
      %p298 = scmp.eq.s32.totalorder %s28, 0
      %p299 = por %p297, %p298
      %p300 = scmp.ne.s32.totalorder %s288, %s289
      %p301 = scmp.eq.s32.totalorder %s29, 1
      %p302 = por %p300, %p301
      %p304 = scmp.ne.s32.totalorder %s289, %s303
      %p305 = scmp.eq.s32.totalorder %s29, 0
      %p306 = por %p304, %p305
      %s308 = sadd.s32 %s307, 1
      %p311 = scmp.eq.s32.totalorder %s23, 1
      %p312 = scmp.ne.s32.totalorder %s307, %s309
      %p313 = scmp.eq.s32.totalorder %s23, 0
      %p314 = por %p312, %p313
      %p315 = scmp.ne.s32.totalorder %s307, %s309
      %p316 = scmp.eq.s32.totalorder %s28, 1
      %p317 = por %p315, %p316
      %p318 = scmp.ne.s32.totalorder %s309, %s310
      %p319 = scmp.eq.s32.totalorder %s28, 0
      %p320 = por %p318, %p319
      %p321 = scmp.ne.s32.totalorder %s309, %s310
      %p322 = scmp.eq.s32.totalorder %s29, 1
      %p323 = por %p321, %p322
      %p325 = scmp.ne.s32.totalorder %s310, %s324
      %p326 = scmp.eq.s32.totalorder %s29, 0
      %p327 = por %p325, %p326
      %s329 = sadd.s32 %s328, 1
      %p332 = scmp.eq.s32.totalorder %s23, 1
      %p333 = scmp.ne.s32.totalorder %s328, %s330
      %p334 = scmp.eq.s32.totalorder %s23, 0
      %p335 = por %p333, %p334
      %p336 = scmp.ne.s32.totalorder %s328, %s330
      %p337 = scmp.eq.s32.totalorder %s28, 1
      %p338 = por %p336, %p337
      %p339 = scmp.ne.s32.totalorder %s330, %s331
      %p340 = scmp.eq.s32.totalorder %s28, 0
      %p341 = por %p339, %p340
      %p342 = scmp.ne.s32.totalorder %s330, %s331
      %p343 = scmp.eq.s32.totalorder %s29, 1
      %p344 = por %p342, %p343
      %p346 = scmp.ne.s32.totalorder %s331, %s345
      %p347 = scmp.eq.s32.totalorder %s29, 0
      %p348 = por %p346, %p347
      %s349 = ssub.s32 %s30, %s42
      %s350 = ssub.s32 %s31, %s38
      %s351 = sor.u32 %s349, %s350
      %p352 = scmp.eq.s32.totalorder %s351, 0
      %s354 = sadd.s32 %s353, 1
      %s355 = scalar_select %p352, %s353, %s354
      %p358 = pneg %p352
      %p359 = scmp.eq.s32.totalorder %s23, 1
      %p360 = por %p358, %p359
      %p361 = scmp.ne.s32.totalorder %s353, %s356
      %p362 = scmp.eq.s32.totalorder %s23, 0
      %p363 = por %p361, %p362
      %p364 = scmp.ne.s32.totalorder %s353, %s356
      %p365 = scmp.eq.s32.totalorder %s28, 1
      %p366 = por %p364, %p365
      %p367 = scmp.ne.s32.totalorder %s356, %s357
      %p368 = scmp.eq.s32.totalorder %s28, 0
      %p369 = por %p367, %p368
      %p370 = scmp.ne.s32.totalorder %s356, %s357
      %p371 = scmp.eq.s32.totalorder %s29, 1
      %p372 = por %p370, %p371
      %p374 = scmp.ne.s32.totalorder %s357, %s373
      %p375 = scmp.eq.s32.totalorder %s29, 0
      %p376 = por %p374, %p375
      %p377 = scmp.le.s32.totalorder 1, %s23
      %p378 = scmp.lt.s32.totalorder %s23, 3
      %p379 = pnand %p377, %p378
      %p380 = pneg %p379
      // Predicated region
      $region9: #{tpu_custom_call.1} parent=5 // pred_check
        _
      $region10: #{tpu_custom_call.1} parent=5 // pred_check_branch
        %382 = sbr.rel (%p379) target = $region12
      $region11: #{tpu_custom_call.1} parent=5 // pred_region
        %s383 = ssub.s32 %s23, 1
        // Predicated region
        $region13: #{tpu_custom_call.1} parent=11 // pred_check
          %p384 = pneg %p110
        $region14: #{tpu_custom_call.1} parent=11 // pred_check_branch
          %386 = sbr.rel (%p384) target = $region16
        $region15: #{tpu_custom_call.1} parent=11 // pred_region
          _
        $region16: #{tpu_custom_call.1} parent=11 // pred_fallthru
          _
        // Predicated region
        $region17: #{tpu_custom_call.1} parent=11 // pred_check
          %p387 = pneg %p131
        $region18: #{tpu_custom_call.1} parent=11 // pred_check_branch
          %389 = sbr.rel (%p387) target = $region20
        $region19: #{tpu_custom_call.1} parent=11 // pred_region
          _
        $region20: #{tpu_custom_call.1} parent=11 // pred_fallthru
          _
        // Predicated region
        $region21: #{tpu_custom_call.1} parent=11 // pred_check
          %p390 = pneg %p152
        $region22: #{tpu_custom_call.1} parent=11 // pred_check_branch
          %392 = sbr.rel (%p390) target = $region24
        $region23: #{tpu_custom_call.1} parent=11 // pred_region
          _
        $region24: #{tpu_custom_call.1} parent=11 // pred_fallthru
          _
        // Predicated region
        $region25: #{tpu_custom_call.1} parent=11 // pred_check
          %p393 = pneg %p173
        $region26: #{tpu_custom_call.1} parent=11 // pred_check_branch
          %395 = sbr.rel (%p393) target = $region28
        $region27: #{tpu_custom_call.1} parent=11 // pred_region
          _
        $region28: #{tpu_custom_call.1} parent=11 // pred_fallthru
          _
        // Predicated region
        $region29: #{tpu_custom_call.1} parent=11 // pred_check
          %p396 = pneg %p194
        $region30: #{tpu_custom_call.1} parent=11 // pred_check_branch
          %398 = sbr.rel (%p396) target = $region32
        $region31: #{tpu_custom_call.1} parent=11 // pred_region
          _
        $region32: #{tpu_custom_call.1} parent=11 // pred_fallthru
          _
        // Predicated region
        $region33: #{tpu_custom_call.1} parent=11 // pred_check
          %p399 = pneg %p215
        $region34: #{tpu_custom_call.1} parent=11 // pred_check_branch
          %401 = sbr.rel (%p399) target = $region36
        $region35: #{tpu_custom_call.1} parent=11 // pred_region
          _
        $region36: #{tpu_custom_call.1} parent=11 // pred_fallthru
          _
        // Predicated region
        $region37: #{tpu_custom_call.1} parent=11 // pred_check
          %p402 = pneg %p236
        $region38: #{tpu_custom_call.1} parent=11 // pred_check_branch
          %404 = sbr.rel (%p402) target = $region40
        $region39: #{tpu_custom_call.1} parent=11 // pred_region
          _
        $region40: #{tpu_custom_call.1} parent=11 // pred_fallthru
          _
        // Predicated region
        $region41: #{tpu_custom_call.1} parent=11 // pred_check
          %p405 = pneg %p257
        $region42: #{tpu_custom_call.1} parent=11 // pred_check_branch
          %407 = sbr.rel (%p405) target = $region44
        $region43: #{tpu_custom_call.1} parent=11 // pred_region
          _
        $region44: #{tpu_custom_call.1} parent=11 // pred_fallthru
          _
        // Predicated region
        $region45: #{tpu_custom_call.1} parent=11 // pred_check
          %p408 = pneg %p278
        $region46: #{tpu_custom_call.1} parent=11 // pred_check_branch
          %410 = sbr.rel (%p408) target = $region48
        $region47: #{tpu_custom_call.1} parent=11 // pred_region
          _
        $region48: #{tpu_custom_call.1} parent=11 // pred_fallthru
          _
        // Predicated region
        $region49: #{tpu_custom_call.1} parent=11 // pred_check
          %p411 = pneg %p299
        $region50: #{tpu_custom_call.1} parent=11 // pred_check_branch
          %413 = sbr.rel (%p411) target = $region52
        $region51: #{tpu_custom_call.1} parent=11 // pred_region
          _
        $region52: #{tpu_custom_call.1} parent=11 // pred_fallthru
          _
        // Predicated region
        $region53: #{tpu_custom_call.1} parent=11 // pred_check
          %p414 = pneg %p320
        $region54: #{tpu_custom_call.1} parent=11 // pred_check_branch
          %416 = sbr.rel (%p414) target = $region56
        $region55: #{tpu_custom_call.1} parent=11 // pred_region
          _
        $region56: #{tpu_custom_call.1} parent=11 // pred_fallthru
          _
        // Predicated region
        $region57: #{tpu_custom_call.1} parent=11 // pred_check
          %p417 = pneg %p341
        $region58: #{tpu_custom_call.1} parent=11 // pred_check_branch
          %419 = sbr.rel (%p417) target = $region60
        $region59: #{tpu_custom_call.1} parent=11 // pred_region
          _
        $region60: #{tpu_custom_call.1} parent=11 // pred_fallthru
          _
      $region12: #{tpu_custom_call.1} parent=5 // pred_fallthru
        _
      %p420 = scmp.lt.s32.totalorder %s23, 2
      // Predicated region
      $region61: #{tpu_custom_call.1} parent=5 // pred_check
        %p421 = pneg %p420
      $region62: #{tpu_custom_call.1} parent=5 // pred_check_branch
        %423 = sbr.rel (%p421) target = $region64
      $region63: #{tpu_custom_call.1} parent=5 // pred_region
        // Predicated region
        $region65: #{tpu_custom_call.1} parent=63 // pred_check
          %p424 = pneg %p57
        $region66: #{tpu_custom_call.1} parent=63 // pred_check_branch
          %426 = sbr.rel (%p424) target = $region68
        $region67: #{tpu_custom_call.1} parent=63 // pred_region
          %p427 = scmp.lt.s32.totalorder %s30, 1
          %s428 = scalar_select %p427, %s30, 1
          %p429 = scmp.lt.s32.totalorder %s31, 0
          %s430 = scalar_select %p429, %s31, 0
          %s431 = sadd.s32 %s430, %s428
          %s432 = smul.addr %s431, 8
          %s433 = scalar_lea.vmem %s0, %s432
        $region68: #{tpu_custom_call.1} parent=63 // pred_fallthru
          _
        // Predicated region
        $region69: #{tpu_custom_call.1} parent=63 // pred_check
          %p434 = pneg %p83
        $region70: #{tpu_custom_call.1} parent=63 // pred_check_branch
          %436 = sbr.rel (%p434) target = $region72
        $region71: #{tpu_custom_call.1} parent=63 // pred_region
          %p437 = scmp.lt.s32.totalorder %s30, 1
          %s438 = scalar_select %p437, %s30, 1
          %s439 = smul.addr %s438, 8
          %s440 = scalar_lea.vmem %s1, %s439
        $region72: #{tpu_custom_call.1} parent=63 // pred_fallthru
          _
      $region64: #{tpu_custom_call.1} parent=5 // pred_fallthru
        _
      %p441 = scmp.le.s32.totalorder 1, %s23
      %p442 = scmp.lt.s32.totalorder %s23, 3
      %p443 = pnand %p441, %p442
      %p444 = pneg %p443
      // Predicated region
      $region73: #{tpu_custom_call.1} parent=5 // pred_check
        _
      $region74: #{tpu_custom_call.1} parent=5 // pred_check_branch
        %446 = sbr.rel (%p443) target = $region76
      $region75: #{tpu_custom_call.1} parent=5 // pred_region
        %s447 = ssub.s32 %s23, 1
        %p448 = scmp.lt.s32.totalorder %s32, 1
        %s449 = scalar_select %p448, %s32, 1
        %p450 = scmp.lt.s32.totalorder %s33, 0
        %s451 = scalar_select %p450, %s33, 0
        %s452 = sadd.s32 %s451, %s449
        %s453 = smul.addr %s452, 8
        %s454 = scalar_lea.vmem %s0, %s453
        %p455 = pneg %p63
        %p456 = pneg %p60
        %p457 = scmp.lt.s32.totalorder %s32, 1
        %s458 = scalar_select %p457, %s32, 1
        %s459 = smul.addr %s458, 8
        %s460 = scalar_lea.vmem %s1, %s459
        %p461 = pneg %p89
        %p462 = pneg %p86
        %p463 = pneg %p110
        %p464 = pneg %p107
        %p465 = pneg %p131
        %p466 = pneg %p128
        %p467 = pneg %p152
        %p468 = pneg %p149
        %p469 = pneg %p173
        %p470 = pneg %p170
        %p471 = pneg %p194
        %p472 = pneg %p191
        %p473 = pneg %p215
        %p474 = pneg %p212
        %p475 = pneg %p236
        %p476 = pneg %p233
        %p477 = pneg %p257
        %p478 = pneg %p254
        %p479 = pneg %p278
        %p480 = pneg %p275
        %p481 = pneg %p299
        %p482 = pneg %p296
        %p483 = pneg %p320
        %p484 = pneg %p317
        %p485 = pneg %p341
        %p486 = pneg %p338
        %p487 = pneg %p369
        %p488 = pneg %p366
        %s489 = sand.u32 %s356, 1
        %s490 = scalar_lea.sflag [#allocation7], %s489
        %s491 = sand.u32 %s356, 1
        %s492 = smul.addr %s491, 8
        %s493 = scalar_lea.vmem [#allocation6], %s492
        %p494 = scmp.lt.s32.totalorder %s32, 1
        %s495 = scalar_select %p494, %s32, 1
        %p496 = scmp.lt.s32.totalorder %s33, 0
        %s497 = scalar_select %p496, %s33, 0
        %s498 = sadd.s32 %s497, %s495
        %s499 = smul.addr %s498, 8
        %s500 = scalar_lea.vmem %s0, %s499
        %p501 = scmp.lt.s32.totalorder %s32, 1
        %s502 = scalar_select %p501, %s32, 1
        %s503 = smul.addr %s502, 8
        %s504 = scalar_lea.vmem %s1, %s503
        %p505 = scmp.eq.s32.totalorder %s33, 0
        // Predicated region
        $region77: #{tpu_custom_call.1} parent=75 // pred_check
          %p506 = pneg %p505
        $region78: #{tpu_custom_call.1} parent=75 // pred_check_branch
          %508 = sbr.rel (%p506) target = $region80
        $region79: #{tpu_custom_call.1} parent=75 // pred_region
          %v509 = vld [vmem:[%s504] sm:$0xff]
          %v510 = vld [vmem:[%s3] sm:$0xff]
          %v511 = vld [vmem:[%s3 + $0x8] sm:$0xff]
          %v512 = vld [vmem:[%s3 + $0x10] sm:$0xff]
          %v513 = vld [vmem:[%s3 + $0x18] sm:$0xff]
          %vm514 = vcmask 261120
          %v516 = vsel %vm514, %v509, 0
          %518 = vmatpush.msra.mxu0 0.0
          %519 = vmatpush.msra.mxu0 0.0
          %520 = vmatpush.msra.mxu0 0.0
          %521 = vmatpush.msra.mxu0 0.0
          %522 = vmatpush.msra.mxu0 0.0
          %523 = vmatpush.msra.mxu0 0.0
          %524 = vmatpush.msra.mxu0 0.0
          %525 = vmatpush.msra.mxu0 0.0
          %526 = vmatpush.msra.mxu0 0.0
          %527 = vmatpush.msra.mxu0 0.0
          %528 = vmatpush.msra.mxu0 0.0
          %529 = vmatpush.msra.mxu0 0.0
          %530 = vmatpush.msra.mxu0 %v513
          %531 = vmatpush.msra.mxu0 %v512
          %532 = vmatpush.msra.mxu0 %v511
          %533 = vmatpush.msra.mxu0 %v510
          %534 = vmatmul.f32.gmra.mxu0 %v516
          %v535 = vpop.f32.mrf.mxu0
          %v536 = vadd.f32 0.0, %v535
          %537 = vdwg.mxu0
          %vm538 = vcmask 31744
          %539 = vst.msk [vmem:[#allocation2] sm:$0xff] %vm538, %v536
          %541 = vrot.lane.b32.xlu0 %v536, 96
          %v542 = vpop.permute.xlu0 %541
          %544 = vst.msk [vmem:[#allocation3] sm:$0xff] %vm538, %v542
          %545 = vrot.lane.b32.xlu0 %v536, 124
          %v546 = vpop.permute.xlu0 %545
          %s548 = scalar_lea.vmem [#allocation2], 8
          %549 = vst.msk [vmem:[%s548] sm:$0xff] %vm538, %v546
          %550 = vrot.lane.b32.xlu0 %v536, 92
          %v551 = vpop.permute.xlu0 %550
          %s553 = scalar_lea.vmem [#allocation3], 8
          %554 = vst.msk [vmem:[%s553] sm:$0xff] %vm538, %v551
          %555 = vrot.lane.b32.xlu0 %v536, 120
          %v556 = vpop.permute.xlu0 %555
          %s558 = scalar_lea.vmem [#allocation2], 16
          %559 = vst.msk [vmem:[%s558] sm:$0xff] %vm538, %v556
          %560 = vrot.lane.b32.xlu0 %v536, 88
          %v561 = vpop.permute.xlu0 %560
          %s563 = scalar_lea.vmem [#allocation3], 16
          %564 = vst.msk [vmem:[%s563] sm:$0xff] %vm538, %v561
          %565 = vrot.lane.b32.xlu0 %v536, 116
          %v566 = vpop.permute.xlu0 %565
          %s568 = scalar_lea.vmem [#allocation2], 24
          %569 = vst.msk [vmem:[%s568] sm:$0xff] %vm538, %v566
          %570 = vrot.lane.b32.xlu0 %v536, 84
          %v571 = vpop.permute.xlu0 %570
          %s573 = scalar_lea.vmem [#allocation3], 24
          %574 = vst.msk [vmem:[%s573] sm:$0xff] %vm538, %v571
          %575 = vrot.lane.b32.xlu0 %v536, 112
          %v576 = vpop.permute.xlu0 %575
          %s578 = scalar_lea.vmem [#allocation2], 32
          %579 = vst.msk [vmem:[%s578] sm:$0xff] %vm538, %v576
          %580 = vrot.lane.b32.xlu0 %v536, 80
          %v581 = vpop.permute.xlu0 %580
          %s583 = scalar_lea.vmem [#allocation3], 32
          %584 = vst.msk [vmem:[%s583] sm:$0xff] %vm538, %v581
          %585 = vrot.lane.b32.xlu0 %v536, 108
          %v586 = vpop.permute.xlu0 %585
          %s588 = scalar_lea.vmem [#allocation2], 40
          %589 = vst.msk [vmem:[%s588] sm:$0xff] %vm538, %v586
          %590 = vrot.lane.b32.xlu0 %v536, 76
          %v591 = vpop.permute.xlu0 %590
          %s593 = scalar_lea.vmem [#allocation3], 40
          %594 = vst.msk [vmem:[%s593] sm:$0xff] %vm538, %v591
          %595 = vrot.lane.b32.xlu0 %v536, 104
          %v596 = vpop.permute.xlu0 %595
          %s598 = scalar_lea.vmem [#allocation2], 48
          %599 = vst.msk [vmem:[%s598] sm:$0xff] %vm538, %v596
          %600 = vrot.lane.b32.xlu0 %v536, 72
          %v601 = vpop.permute.xlu0 %600
          %s603 = scalar_lea.vmem [#allocation3], 48
          %604 = vst.msk [vmem:[%s603] sm:$0xff] %vm538, %v601
          %605 = vrot.lane.b32.xlu0 %v536, 100
          %v606 = vpop.permute.xlu0 %605
          %s608 = scalar_lea.vmem [#allocation2], 56
          %609 = vst.msk [vmem:[%s608] sm:$0xff] %vm538, %v606
          %610 = vrot.lane.b32.xlu0 %v536, 68
          %v611 = vpop.permute.xlu0 %610
          %s613 = scalar_lea.vmem [#allocation3], 56
          %614 = vst.msk [vmem:[%s613] sm:$0xff] %vm538, %v611
        $region80: #{tpu_custom_call.1} parent=75 // pred_fallthru
          _
        %v615 = vld [vmem:[%s500] sm:$0xff]
        %v616 = vld [vmem:[%s2] sm:$0xff]
        %v617 = vld [vmem:[%s2 + $0x8] sm:$0xff]
        %v618 = vld [vmem:[%s2 + $0x10] sm:$0xff]
        %v619 = vld [vmem:[%s2 + $0x18] sm:$0xff]
        %vm620 = vcmask 261120
        %v622 = vsel %vm620, %v615, 0
        %624 = vmatpush.msra.mxu0 0.0
        %625 = vmatpush.msra.mxu0 0.0
        %626 = vmatpush.msra.mxu0 0.0
        %627 = vmatpush.msra.mxu0 0.0
        %628 = vmatpush.msra.mxu0 0.0
        %629 = vmatpush.msra.mxu0 0.0
        %630 = vmatpush.msra.mxu0 0.0
        %631 = vmatpush.msra.mxu0 0.0
        %632 = vmatpush.msra.mxu0 0.0
        %633 = vmatpush.msra.mxu0 0.0
        %634 = vmatpush.msra.mxu0 0.0
        %635 = vmatpush.msra.mxu0 0.0
        %636 = vmatpush.msra.mxu0 %v619
        %637 = vmatpush.msra.mxu0 %v618
        %638 = vmatpush.msra.mxu0 %v617
        %639 = vmatpush.msra.mxu0 %v616
        %640 = vmatmul.f32.gmra.mxu0 %v622
        %v641 = vpop.f32.mrf.mxu0
        %v642 = vadd.f32 0.0, %v641
        %643 = vdwg.mxu0
        %vm644 = vcmask 31744
        %645 = vst.msk [vmem:[#allocation4] sm:$0xff] %vm644, %v642
        %647 = vrot.lane.b32.xlu0 %v642, 124
        %v648 = vpop.permute.xlu0 %647
        %s650 = scalar_lea.vmem [#allocation4], 8
        %651 = vst.msk [vmem:[%s650] sm:$0xff] %vm644, %v648
        %652 = vrot.lane.b32.xlu0 %v642, 120
        %v653 = vpop.permute.xlu0 %652
        %s655 = scalar_lea.vmem [#allocation4], 16
        %656 = vst.msk [vmem:[%s655] sm:$0xff] %vm644, %v653
        %657 = vrot.lane.b32.xlu0 %v642, 116
        %v658 = vpop.permute.xlu0 %657
        %s660 = scalar_lea.vmem [#allocation4], 24
        %661 = vst.msk [vmem:[%s660] sm:$0xff] %vm644, %v658
        %662 = vrot.lane.b32.xlu0 %v642, 112
        %v663 = vpop.permute.xlu0 %662
        %s665 = scalar_lea.vmem [#allocation4], 32
        %666 = vst.msk [vmem:[%s665] sm:$0xff] %vm644, %v663
        %667 = vrot.lane.b32.xlu0 %v642, 108
        %v668 = vpop.permute.xlu0 %667
        %s670 = scalar_lea.vmem [#allocation4], 40
        %671 = vst.msk [vmem:[%s670] sm:$0xff] %vm644, %v668
        %672 = vrot.lane.b32.xlu0 %v642, 104
        %v673 = vpop.permute.xlu0 %672
        %s675 = scalar_lea.vmem [#allocation4], 48
        %676 = vst.msk [vmem:[%s675] sm:$0xff] %vm644, %v673
        %677 = vrot.lane.b32.xlu0 %v642, 100
        %v678 = vpop.permute.xlu0 %677
        %s680 = scalar_lea.vmem [#allocation4], 56
        %681 = vst.msk [vmem:[%s680] sm:$0xff] %vm644, %v678
        %v682 = vld [vmem:[#allocation4] sm:$0xff]
        %v683 = vld [vmem:[#allocation4 + $0x8] sm:$0xff]
        %v684 = vld [vmem:[#allocation4 + $0x10] sm:$0xff]
        %v685 = vld [vmem:[#allocation4 + $0x18] sm:$0xff]
        %v686 = vld [vmem:[#allocation4 + $0x20] sm:$0xff]
        %v687 = vld [vmem:[#allocation4 + $0x28] sm:$0xff]
        %v688 = vld [vmem:[#allocation4 + $0x30] sm:$0xff]
        %v689 = vld [vmem:[#allocation4 + $0x38] sm:$0xff]
        %v690 = vld [vmem:[#allocation2] sm:$0xff]
        %v691 = vld [vmem:[#allocation2 + $0x8] sm:$0xff]
        %v692 = vld [vmem:[#allocation2 + $0x10] sm:$0xff]
        %v693 = vld [vmem:[#allocation2 + $0x18] sm:$0xff]
        %v694 = vld [vmem:[#allocation2 + $0x20] sm:$0xff]
        %v695 = vld [vmem:[#allocation2 + $0x28] sm:$0xff]
        %v696 = vld [vmem:[#allocation2 + $0x30] sm:$0xff]
        %v697 = vld [vmem:[#allocation2 + $0x38] sm:$0xff]
        %v698 = vld [vmem:[#allocation3] sm:$0xff]
        %v699 = vld [vmem:[#allocation3 + $0x8] sm:$0xff]
        %v700 = vld [vmem:[#allocation3 + $0x10] sm:$0xff]
        %v701 = vld [vmem:[#allocation3 + $0x18] sm:$0xff]
        %v702 = vld [vmem:[#allocation3 + $0x20] sm:$0xff]
        %v703 = vld [vmem:[#allocation3 + $0x28] sm:$0xff]
        %v704 = vld [vmem:[#allocation3 + $0x30] sm:$0xff]
        %v705 = vld [vmem:[#allocation3 + $0x38] sm:$0xff]
        %v707 = vsel %vm644, %v682, 0
        %v710 = vsel %vm644, %v690, 0
        %712 = vmatpush.xpose.msra.mxu0 0.0
        %713 = vmatpush.xpose.msra.mxu0 0.0
        %714 = vmatpush.xpose.msra.mxu0 0.0
        %715 = vmatpush.xpose.msra.mxu0 0.0
        %716 = vmatpush.xpose.msra.mxu0 0.0
        %717 = vmatpush.xpose.msra.mxu0 0.0
        %718 = vmatpush.xpose.msra.mxu0 0.0
        %719 = vmatpush.xpose.msra.mxu0 0.0
        %720 = vmatpush.xpose.msra.mxu0 0.0
        %721 = vmatpush.xpose.msra.mxu0 0.0
        %722 = vmatpush.xpose.msra.mxu0 0.0
        %723 = vmatpush.xpose.msra.mxu0 0.0
        %724 = vmatpush.xpose.msra.mxu0 0.0
        %725 = vmatpush.xpose.msra.mxu0 0.0
        %726 = vmatpush.xpose.msra.mxu0 0.0
        %727 = vmatpush.xpose.msra.mxu0 %v710
        %728 = vmatmul.f32.gmra.mxu0 %v707
        %v729 = vpop.f32.mrf.mxu0
        %v730 = vadd.f32 0.0, %v729
        %731 = vdwg.mxu0
        %v733 = vsel %vm644, %v683, 0
        %v736 = vsel %vm644, %v691, 0
        %738 = vmatpush.xpose.msra.mxu0 0.0
        %739 = vmatpush.xpose.msra.mxu0 0.0
        %740 = vmatpush.xpose.msra.mxu0 0.0
        %741 = vmatpush.xpose.msra.mxu0 0.0
        %742 = vmatpush.xpose.msra.mxu0 0.0
        %743 = vmatpush.xpose.msra.mxu0 0.0
        %744 = vmatpush.xpose.msra.mxu0 0.0
        %745 = vmatpush.xpose.msra.mxu0 0.0
        %746 = vmatpush.xpose.msra.mxu0 0.0
        %747 = vmatpush.xpose.msra.mxu0 0.0
        %748 = vmatpush.xpose.msra.mxu0 0.0
        %749 = vmatpush.xpose.msra.mxu0 0.0
        %750 = vmatpush.xpose.msra.mxu0 0.0
        %751 = vmatpush.xpose.msra.mxu0 0.0
        %752 = vmatpush.xpose.msra.mxu0 0.0
        %753 = vmatpush.xpose.msra.mxu0 %v736
        %754 = vmatmul.f32.gmra.mxu0 %v733
        %v755 = vpop.f32.mrf.mxu0
        %v756 = vadd.f32 0.0, %v755
        %757 = vdwg.mxu0
        %v759 = vsel %vm644, %v684, 0
        %v762 = vsel %vm644, %v692, 0
        %764 = vmatpush.xpose.msra.mxu0 0.0
        %765 = vmatpush.xpose.msra.mxu0 0.0
        %766 = vmatpush.xpose.msra.mxu0 0.0
        %767 = vmatpush.xpose.msra.mxu0 0.0
        %768 = vmatpush.xpose.msra.mxu0 0.0
        %769 = vmatpush.xpose.msra.mxu0 0.0
        %770 = vmatpush.xpose.msra.mxu0 0.0
        %771 = vmatpush.xpose.msra.mxu0 0.0
        %772 = vmatpush.xpose.msra.mxu0 0.0
        %773 = vmatpush.xpose.msra.mxu0 0.0
        %774 = vmatpush.xpose.msra.mxu0 0.0
        %775 = vmatpush.xpose.msra.mxu0 0.0
        %776 = vmatpush.xpose.msra.mxu0 0.0
        %777 = vmatpush.xpose.msra.mxu0 0.0
        %778 = vmatpush.xpose.msra.mxu0 0.0
        %779 = vmatpush.xpose.msra.mxu0 %v762
        %780 = vmatmul.f32.gmra.mxu0 %v759
        %v781 = vpop.f32.mrf.mxu0
        %v782 = vadd.f32 0.0, %v781
        %783 = vdwg.mxu0
        %v785 = vsel %vm644, %v685, 0
        %v788 = vsel %vm644, %v693, 0
        %790 = vmatpush.xpose.msra.mxu0 0.0
        %791 = vmatpush.xpose.msra.mxu0 0.0
        %792 = vmatpush.xpose.msra.mxu0 0.0
        %793 = vmatpush.xpose.msra.mxu0 0.0
        %794 = vmatpush.xpose.msra.mxu0 0.0
        %795 = vmatpush.xpose.msra.mxu0 0.0
        %796 = vmatpush.xpose.msra.mxu0 0.0
        %797 = vmatpush.xpose.msra.mxu0 0.0
        %798 = vmatpush.xpose.msra.mxu0 0.0
        %799 = vmatpush.xpose.msra.mxu0 0.0
        %800 = vmatpush.xpose.msra.mxu0 0.0
        %801 = vmatpush.xpose.msra.mxu0 0.0
        %802 = vmatpush.xpose.msra.mxu0 0.0
        %803 = vmatpush.xpose.msra.mxu0 0.0
        %804 = vmatpush.xpose.msra.mxu0 0.0
        %805 = vmatpush.xpose.msra.mxu0 %v788
        %806 = vmatmul.f32.gmra.mxu0 %v785
        %v807 = vpop.f32.mrf.mxu0
        %v808 = vadd.f32 0.0, %v807
        %809 = vdwg.mxu0
        %v811 = vsel %vm644, %v686, 0
        %v814 = vsel %vm644, %v694, 0
        %816 = vmatpush.xpose.msra.mxu0 0.0
        %817 = vmatpush.xpose.msra.mxu0 0.0
        %818 = vmatpush.xpose.msra.mxu0 0.0
        %819 = vmatpush.xpose.msra.mxu0 0.0
        %820 = vmatpush.xpose.msra.mxu0 0.0
        %821 = vmatpush.xpose.msra.mxu0 0.0
        %822 = vmatpush.xpose.msra.mxu0 0.0
        %823 = vmatpush.xpose.msra.mxu0 0.0
        %824 = vmatpush.xpose.msra.mxu0 0.0
        %825 = vmatpush.xpose.msra.mxu0 0.0
        %826 = vmatpush.xpose.msra.mxu0 0.0
        %827 = vmatpush.xpose.msra.mxu0 0.0
        %828 = vmatpush.xpose.msra.mxu0 0.0
        %829 = vmatpush.xpose.msra.mxu0 0.0
        %830 = vmatpush.xpose.msra.mxu0 0.0
        %831 = vmatpush.xpose.msra.mxu0 %v814
        %832 = vmatmul.f32.gmra.mxu0 %v811
        %v833 = vpop.f32.mrf.mxu0
        %v834 = vadd.f32 0.0, %v833
        %835 = vdwg.mxu0
        %v837 = vsel %vm644, %v687, 0
        %v840 = vsel %vm644, %v695, 0
        %842 = vmatpush.xpose.msra.mxu0 0.0
        %843 = vmatpush.xpose.msra.mxu0 0.0
        %844 = vmatpush.xpose.msra.mxu0 0.0
        %845 = vmatpush.xpose.msra.mxu0 0.0
        %846 = vmatpush.xpose.msra.mxu0 0.0
        %847 = vmatpush.xpose.msra.mxu0 0.0
        %848 = vmatpush.xpose.msra.mxu0 0.0
        %849 = vmatpush.xpose.msra.mxu0 0.0
        %850 = vmatpush.xpose.msra.mxu0 0.0
        %851 = vmatpush.xpose.msra.mxu0 0.0
        %852 = vmatpush.xpose.msra.mxu0 0.0
        %853 = vmatpush.xpose.msra.mxu0 0.0
        %854 = vmatpush.xpose.msra.mxu0 0.0
        %855 = vmatpush.xpose.msra.mxu0 0.0
        %856 = vmatpush.xpose.msra.mxu0 0.0
        %857 = vmatpush.xpose.msra.mxu0 %v840
        %858 = vmatmul.f32.gmra.mxu0 %v837
        %v859 = vpop.f32.mrf.mxu0
        %v860 = vadd.f32 0.0, %v859
        %861 = vdwg.mxu0
        %v863 = vsel %vm644, %v688, 0
        %v866 = vsel %vm644, %v696, 0
        %868 = vmatpush.xpose.msra.mxu0 0.0
        %869 = vmatpush.xpose.msra.mxu0 0.0
        %870 = vmatpush.xpose.msra.mxu0 0.0
        %871 = vmatpush.xpose.msra.mxu0 0.0
        %872 = vmatpush.xpose.msra.mxu0 0.0
        %873 = vmatpush.xpose.msra.mxu0 0.0
        %874 = vmatpush.xpose.msra.mxu0 0.0
        %875 = vmatpush.xpose.msra.mxu0 0.0
        %876 = vmatpush.xpose.msra.mxu0 0.0
        %877 = vmatpush.xpose.msra.mxu0 0.0
        %878 = vmatpush.xpose.msra.mxu0 0.0
        %879 = vmatpush.xpose.msra.mxu0 0.0
        %880 = vmatpush.xpose.msra.mxu0 0.0
        %881 = vmatpush.xpose.msra.mxu0 0.0
        %882 = vmatpush.xpose.msra.mxu0 0.0
        %883 = vmatpush.xpose.msra.mxu0 %v866
        %884 = vmatmul.f32.gmra.mxu0 %v863
        %v885 = vpop.f32.mrf.mxu0
        %v886 = vadd.f32 0.0, %v885
        %887 = vdwg.mxu0
        %v889 = vsel %vm644, %v689, 0
        %v892 = vsel %vm644, %v697, 0
        %894 = vmatpush.xpose.msra.mxu0 0.0
        %895 = vmatpush.xpose.msra.mxu0 0.0
        %896 = vmatpush.xpose.msra.mxu0 0.0
        %897 = vmatpush.xpose.msra.mxu0 0.0
        %898 = vmatpush.xpose.msra.mxu0 0.0
        %899 = vmatpush.xpose.msra.mxu0 0.0
        %900 = vmatpush.xpose.msra.mxu0 0.0
        %901 = vmatpush.xpose.msra.mxu0 0.0
        %902 = vmatpush.xpose.msra.mxu0 0.0
        %903 = vmatpush.xpose.msra.mxu0 0.0
        %904 = vmatpush.xpose.msra.mxu0 0.0
        %905 = vmatpush.xpose.msra.mxu0 0.0
        %906 = vmatpush.xpose.msra.mxu0 0.0
        %907 = vmatpush.xpose.msra.mxu0 0.0
        %908 = vmatpush.xpose.msra.mxu0 0.0
        %909 = vmatpush.xpose.msra.mxu0 %v892
        %910 = vmatmul.f32.gmra.mxu0 %v889
        %v911 = vpop.f32.mrf.mxu0
        %v912 = vadd.f32 0.0, %v911
        %913 = vdwg.mxu0
        %vm914 = vcmask 64512
        %v915 = vsel %vm914, %v730, -inf
        %916 = vmax.xlane.f32.xlu0 %v915
        %v917 = vpop.xlane.xlu0 %916
        %v918 = vsel %vm914, %v756, -inf
        %919 = vmax.xlane.f32.xlu0 %v918
        %v920 = vpop.xlane.xlu0 %919
        %v921 = vsel %vm914, %v782, -inf
        %922 = vmax.xlane.f32.xlu0 %v921
        %v923 = vpop.xlane.xlu0 %922
        %v924 = vsel %vm914, %v808, -inf
        %925 = vmax.xlane.f32.xlu0 %v924
        %v926 = vpop.xlane.xlu0 %925
        %v927 = vsel %vm914, %v834, -inf
        %928 = vmax.xlane.f32.xlu0 %v927
        %v929 = vpop.xlane.xlu0 %928
        %v930 = vsel %vm914, %v860, -inf
        %931 = vmax.xlane.f32.xlu0 %v930
        %v932 = vpop.xlane.xlu0 %931
        %v933 = vsel %vm914, %v886, -inf
        %934 = vmax.xlane.f32.xlu0 %v933
        %v935 = vpop.xlane.xlu0 %934
        %v936 = vsel %vm914, %v912, -inf
        %937 = vmax.xlane.f32.xlu0 %v936
        %v938 = vpop.xlane.xlu0 %937
        %v939 = vsub.f32 -inf, %v917
        %v940 = vsub.f32 -inf, %v920
        %v941 = vsub.f32 -inf, %v923
        %v942 = vsub.f32 -inf, %v926
        %v943 = vsub.f32 -inf, %v929
        %v944 = vsub.f32 -inf, %v932
        %v945 = vsub.f32 -inf, %v935
        %v946 = vsub.f32 -inf, %v938
        %v947 = vmul.f32 %v939, 1.442695
        %v948 = vpow.pop %v947
        %v949 = vmul.f32 %v940, 1.442695
        %v950 = vpow.pop %v949
        %v951 = vmul.f32 %v941, 1.442695
        %v952 = vpow.pop %v951
        %v953 = vmul.f32 %v942, 1.442695
        %v954 = vpow.pop %v953
        %v955 = vmul.f32 %v943, 1.442695
        %v956 = vpow.pop %v955
        %v957 = vmul.f32 %v944, 1.442695
        %v958 = vpow.pop %v957
        %v959 = vmul.f32 %v945, 1.442695
        %v960 = vpow.pop %v959
        %v961 = vmul.f32 %v946, 1.442695
        %v962 = vpow.pop %v961
        %v963 = vsub.f32 %v730, %v917
        %v964 = vsub.f32 %v756, %v920
        %v965 = vsub.f32 %v782, %v923
        %v966 = vsub.f32 %v808, %v926
        %v967 = vsub.f32 %v834, %v929
        %v968 = vsub.f32 %v860, %v932
        %v969 = vsub.f32 %v886, %v935
        %v970 = vsub.f32 %v912, %v938
        %v971 = vmul.f32 %v963, 1.442695
        %v972 = vpow.pop %v971
        %v973 = vmul.f32 %v964, 1.442695
        %v974 = vpow.pop %v973
        %v975 = vmul.f32 %v965, 1.442695
        %v976 = vpow.pop %v975
        %v977 = vmul.f32 %v966, 1.442695
        %v978 = vpow.pop %v977
        %v979 = vmul.f32 %v967, 1.442695
        %v980 = vpow.pop %v979
        %v981 = vmul.f32 %v968, 1.442695
        %v982 = vpow.pop %v981
        %v983 = vmul.f32 %v969, 1.442695
        %v984 = vpow.pop %v983
        %v985 = vmul.f32 %v970, 1.442695
        %v986 = vpow.pop %v985
        %v987 = vmul.f32 %v948, 0.0
        %v988 = vmul.f32 %v950, 0.0
        %v989 = vmul.f32 %v952, 0.0
        %v990 = vmul.f32 %v954, 0.0
        %v991 = vmul.f32 %v956, 0.0
        %v992 = vmul.f32 %v958, 0.0
        %v993 = vmul.f32 %v960, 0.0
        %v994 = vmul.f32 %v962, 0.0
        %v995 = vsel %vm914, %v972, 0.0
        %996 = vadd.xlane.f32.xlu0 %v995
        %v997 = vpop.xlane.xlu0 %996
        %v998 = vsel %vm914, %v974, 0.0
        %999 = vadd.xlane.f32.xlu0 %v998
        %v1000 = vpop.xlane.xlu0 %999
        %v1001 = vsel %vm914, %v976, 0.0
        %1002 = vadd.xlane.f32.xlu0 %v1001
        %v1003 = vpop.xlane.xlu0 %1002
        %v1004 = vsel %vm914, %v978, 0.0
        %1005 = vadd.xlane.f32.xlu0 %v1004
        %v1006 = vpop.xlane.xlu0 %1005
        %v1007 = vsel %vm914, %v980, 0.0
        %1008 = vadd.xlane.f32.xlu0 %v1007
        %v1009 = vpop.xlane.xlu0 %1008
        %v1010 = vsel %vm914, %v982, 0.0
        %1011 = vadd.xlane.f32.xlu0 %v1010
        %v1012 = vpop.xlane.xlu0 %1011
        %v1013 = vsel %vm914, %v984, 0.0
        %1014 = vadd.xlane.f32.xlu0 %v1013
        %v1015 = vpop.xlane.xlu0 %1014
        %v1016 = vsel %vm914, %v986, 0.0
        %1017 = vadd.xlane.f32.xlu0 %v1016
        %v1018 = vpop.xlane.xlu0 %1017
        %v1019 = vadd.f32 %v987, %v997
        %v1020 = vadd.f32 %v988, %v1000
        %v1021 = vadd.f32 %v989, %v1003
        %v1022 = vadd.f32 %v990, %v1006
        %v1023 = vadd.f32 %v991, %v1009
        %v1024 = vadd.f32 %v992, %v1012
        %v1025 = vadd.f32 %v993, %v1015
        %v1026 = vadd.f32 %v994, %v1018
        %v1028 = vsel %vm914, %v972, 0
        %1030 = vmatpush.msra.mxu0 0.0
        %1031 = vmatpush.msra.mxu0 0.0
        %1032 = vmatpush.msra.mxu0 0.0
        %1033 = vmatpush.msra.mxu0 0.0
        %1034 = vmatpush.msra.mxu0 0.0
        %1035 = vmatpush.msra.mxu0 0.0
        %1036 = vmatpush.msra.mxu0 0.0
        %1037 = vmatpush.msra.mxu0 0.0
        %1038 = vmatpush.msra.mxu0 0.0
        %1039 = vmatpush.msra.mxu0 0.0
        %1040 = vmatpush.msra.mxu0 0.0
        %1041 = vmatpush.msra.mxu0 0.0
        %1042 = vmatpush.msra.mxu0 0.0
        %1043 = vmatpush.msra.mxu0 0.0
        %1044 = vmatpush.msra.mxu0 0.0
        %1045 = vmatpush.msra.mxu0 %v698
        %1046 = vmatmul.f32.gmra.mxu0 %v1028
        %v1047 = vpop.f32.mrf.mxu0
        %v1048 = vadd.f32 0.0, %v1047
        %1049 = vdwg.mxu0
        %v1051 = vsel %vm914, %v974, 0
        %1053 = vmatpush.msra.mxu0 0.0
        %1054 = vmatpush.msra.mxu0 0.0
        %1055 = vmatpush.msra.mxu0 0.0
        %1056 = vmatpush.msra.mxu0 0.0
        %1057 = vmatpush.msra.mxu0 0.0
        %1058 = vmatpush.msra.mxu0 0.0
        %1059 = vmatpush.msra.mxu0 0.0
        %1060 = vmatpush.msra.mxu0 0.0
        %1061 = vmatpush.msra.mxu0 0.0
        %1062 = vmatpush.msra.mxu0 0.0
        %1063 = vmatpush.msra.mxu0 0.0
        %1064 = vmatpush.msra.mxu0 0.0
        %1065 = vmatpush.msra.mxu0 0.0
        %1066 = vmatpush.msra.mxu0 0.0
        %1067 = vmatpush.msra.mxu0 0.0
        %1068 = vmatpush.msra.mxu0 %v699
        %1069 = vmatmul.f32.gmra.mxu0 %v1051
        %v1070 = vpop.f32.mrf.mxu0
        %v1071 = vadd.f32 0.0, %v1070
        %1072 = vdwg.mxu0
        %v1074 = vsel %vm914, %v976, 0
        %1076 = vmatpush.msra.mxu0 0.0
        %1077 = vmatpush.msra.mxu0 0.0
        %1078 = vmatpush.msra.mxu0 0.0
        %1079 = vmatpush.msra.mxu0 0.0
        %1080 = vmatpush.msra.mxu0 0.0
        %1081 = vmatpush.msra.mxu0 0.0
        %1082 = vmatpush.msra.mxu0 0.0
        %1083 = vmatpush.msra.mxu0 0.0
        %1084 = vmatpush.msra.mxu0 0.0
        %1085 = vmatpush.msra.mxu0 0.0
        %1086 = vmatpush.msra.mxu0 0.0
        %1087 = vmatpush.msra.mxu0 0.0
        %1088 = vmatpush.msra.mxu0 0.0
        %1089 = vmatpush.msra.mxu0 0.0
        %1090 = vmatpush.msra.mxu0 0.0
        %1091 = vmatpush.msra.mxu0 %v700
        %1092 = vmatmul.f32.gmra.mxu0 %v1074
        %v1093 = vpop.f32.mrf.mxu0
        %v1094 = vadd.f32 0.0, %v1093
        %1095 = vdwg.mxu0
        %v1097 = vsel %vm914, %v978, 0
        %1099 = vmatpush.msra.mxu0 0.0
        %1100 = vmatpush.msra.mxu0 0.0
        %1101 = vmatpush.msra.mxu0 0.0
        %1102 = vmatpush.msra.mxu0 0.0
        %1103 = vmatpush.msra.mxu0 0.0
        %1104 = vmatpush.msra.mxu0 0.0
        %1105 = vmatpush.msra.mxu0 0.0
        %1106 = vmatpush.msra.mxu0 0.0
        %1107 = vmatpush.msra.mxu0 0.0
        %1108 = vmatpush.msra.mxu0 0.0
        %1109 = vmatpush.msra.mxu0 0.0
        %1110 = vmatpush.msra.mxu0 0.0
        %1111 = vmatpush.msra.mxu0 0.0
        %1112 = vmatpush.msra.mxu0 0.0
        %1113 = vmatpush.msra.mxu0 0.0
        %1114 = vmatpush.msra.mxu0 %v701
        %1115 = vmatmul.f32.gmra.mxu0 %v1097
        %v1116 = vpop.f32.mrf.mxu0
        %v1117 = vadd.f32 0.0, %v1116
        %1118 = vdwg.mxu0
        %v1120 = vsel %vm914, %v980, 0
        %1122 = vmatpush.msra.mxu0 0.0
        %1123 = vmatpush.msra.mxu0 0.0
        %1124 = vmatpush.msra.mxu0 0.0
        %1125 = vmatpush.msra.mxu0 0.0
        %1126 = vmatpush.msra.mxu0 0.0
        %1127 = vmatpush.msra.mxu0 0.0
        %1128 = vmatpush.msra.mxu0 0.0
        %1129 = vmatpush.msra.mxu0 0.0
        %1130 = vmatpush.msra.mxu0 0.0
        %1131 = vmatpush.msra.mxu0 0.0
        %1132 = vmatpush.msra.mxu0 0.0
        %1133 = vmatpush.msra.mxu0 0.0
        %1134 = vmatpush.msra.mxu0 0.0
        %1135 = vmatpush.msra.mxu0 0.0
        %1136 = vmatpush.msra.mxu0 0.0
        %1137 = vmatpush.msra.mxu0 %v702
        %1138 = vmatmul.f32.gmra.mxu0 %v1120
        %v1139 = vpop.f32.mrf.mxu0
        %v1140 = vadd.f32 0.0, %v1139
        %1141 = vdwg.mxu0
        %v1143 = vsel %vm914, %v982, 0
        %1145 = vmatpush.msra.mxu0 0.0
        %1146 = vmatpush.msra.mxu0 0.0
        %1147 = vmatpush.msra.mxu0 0.0
        %1148 = vmatpush.msra.mxu0 0.0
        %1149 = vmatpush.msra.mxu0 0.0
        %1150 = vmatpush.msra.mxu0 0.0
        %1151 = vmatpush.msra.mxu0 0.0
        %1152 = vmatpush.msra.mxu0 0.0
        %1153 = vmatpush.msra.mxu0 0.0
        %1154 = vmatpush.msra.mxu0 0.0
        %1155 = vmatpush.msra.mxu0 0.0
        %1156 = vmatpush.msra.mxu0 0.0
        %1157 = vmatpush.msra.mxu0 0.0
        %1158 = vmatpush.msra.mxu0 0.0
        %1159 = vmatpush.msra.mxu0 0.0
        %1160 = vmatpush.msra.mxu0 %v703
        %1161 = vmatmul.f32.gmra.mxu0 %v1143
        %v1162 = vpop.f32.mrf.mxu0
        %v1163 = vadd.f32 0.0, %v1162
        %1164 = vdwg.mxu0
        %v1166 = vsel %vm914, %v984, 0
        %1168 = vmatpush.msra.mxu0 0.0
        %1169 = vmatpush.msra.mxu0 0.0
        %1170 = vmatpush.msra.mxu0 0.0
        %1171 = vmatpush.msra.mxu0 0.0
        %1172 = vmatpush.msra.mxu0 0.0
        %1173 = vmatpush.msra.mxu0 0.0
        %1174 = vmatpush.msra.mxu0 0.0
        %1175 = vmatpush.msra.mxu0 0.0
        %1176 = vmatpush.msra.mxu0 0.0
        %1177 = vmatpush.msra.mxu0 0.0
        %1178 = vmatpush.msra.mxu0 0.0
        %1179 = vmatpush.msra.mxu0 0.0
        %1180 = vmatpush.msra.mxu0 0.0
        %1181 = vmatpush.msra.mxu0 0.0
        %1182 = vmatpush.msra.mxu0 0.0
        %1183 = vmatpush.msra.mxu0 %v704
        %1184 = vmatmul.f32.gmra.mxu0 %v1166
        %v1185 = vpop.f32.mrf.mxu0
        %v1186 = vadd.f32 0.0, %v1185
        %1187 = vdwg.mxu0
        %v1189 = vsel %vm914, %v986, 0
        %1191 = vmatpush.msra.mxu0 0.0
        %1192 = vmatpush.msra.mxu0 0.0
        %1193 = vmatpush.msra.mxu0 0.0
        %1194 = vmatpush.msra.mxu0 0.0
        %1195 = vmatpush.msra.mxu0 0.0
        %1196 = vmatpush.msra.mxu0 0.0
        %1197 = vmatpush.msra.mxu0 0.0
        %1198 = vmatpush.msra.mxu0 0.0
        %1199 = vmatpush.msra.mxu0 0.0
        %1200 = vmatpush.msra.mxu0 0.0
        %1201 = vmatpush.msra.mxu0 0.0
        %1202 = vmatpush.msra.mxu0 0.0
        %1203 = vmatpush.msra.mxu0 0.0
        %1204 = vmatpush.msra.mxu0 0.0
        %1205 = vmatpush.msra.mxu0 0.0
        %1206 = vmatpush.msra.mxu0 %v705
        %1207 = vmatmul.f32.gmra.mxu0 %v1189
        %v1208 = vpop.f32.mrf.mxu0
        %v1209 = vadd.f32 0.0, %v1208
        %1210 = vdwg.mxu0
        %v1211 = vadd.f32 %v987, %v1048
        %v1212 = vadd.f32 %v988, %v1071
        %v1213 = vadd.f32 %v989, %v1094
        %v1214 = vadd.f32 %v990, %v1117
        %v1215 = vadd.f32 %v991, %v1140
        %v1216 = vadd.f32 %v992, %v1163
        %v1217 = vadd.f32 %v993, %v1186
        %v1218 = vadd.f32 %v994, %v1209
        %v1219 = vrcp.pop %v1019
        %v1220 = vrcp.pop %v1020
        %v1221 = vrcp.pop %v1021
        %v1222 = vrcp.pop %v1022
        %v1223 = vrcp.pop %v1023
        %v1224 = vrcp.pop %v1024
        %v1225 = vrcp.pop %v1025
        %v1226 = vrcp.pop %v1026
        %v1227 = vmul.f32 %v1211, %v1219
        %v1228 = vmul.f32 %v1212, %v1220
        %v1229 = vmul.f32 %v1213, %v1221
        %v1230 = vmul.f32 %v1214, %v1222
        %v1231 = vmul.f32 %v1215, %v1223
        %v1232 = vmul.f32 %v1216, %v1224
        %v1233 = vmul.f32 %v1217, %v1225
        %v1234 = vmul.f32 %v1218, %v1226
        %1235 = vst.msk [vmem:[#allocation5] sm:$0xff] %vm644, %v1227
        %1237 = vrot.lane.b32.xlu0 %v1228, 4
        %v1238 = vpop.permute.xlu0 %1237
        %vm1240 = vcmask 64544
        %1241 = vst.msk [vmem:[#allocation5] sm:$0xff] %vm1240, %v1238
        %1243 = vrot.lane.b32.xlu0 %v1229, 8
        %v1244 = vpop.permute.xlu0 %1243
        %vm1246 = vcmask 97344
        %1247 = vst.msk [vmem:[#allocation5] sm:$0xff] %vm1246, %v1244
        %1249 = vrot.lane.b32.xlu0 %v1230, 12
        %v1250 = vpop.permute.xlu0 %1249
        %vm1252 = vcmask 130144
        %1253 = vst.msk [vmem:[#allocation5] sm:$0xff] %vm1252, %v1250
        %1255 = vrot.lane.b32.xlu0 %v1231, 16
        %v1256 = vpop.permute.xlu0 %1255
        %vm1258 = vcmask 162944
        %1259 = vst.msk [vmem:[#allocation5] sm:$0xff] %vm1258, %v1256
        %1261 = vrot.lane.b32.xlu0 %v1232, 20
        %v1262 = vpop.permute.xlu0 %1261
        %vm1264 = vcmask 195744
        %1265 = vst.msk [vmem:[#allocation5] sm:$0xff] %vm1264, %v1262
        %1267 = vrot.lane.b32.xlu0 %v1233, 24
        %v1268 = vpop.permute.xlu0 %1267
        %vm1270 = vcmask 228544
        %1271 = vst.msk [vmem:[#allocation5] sm:$0xff] %vm1270, %v1268
        %1273 = vrot.lane.b32.xlu0 %v1234, 28
        %v1274 = vpop.permute.xlu0 %1273
        %vm1276 = vcmask 261344
        %1277 = vst.msk [vmem:[#allocation5] sm:$0xff] %vm1276, %v1274
        %v1278 = vld [vmem:[#allocation5] sm:$0xff]
        %v1279 = vld [vmem:[%s4] sm:$0xff]
        %v1280 = vld [vmem:[%s4 + $0x8] sm:$0xff]
        %v1281 = vld [vmem:[%s4 + $0x10] sm:$0xff]
        %v1282 = vld [vmem:[%s4 + $0x18] sm:$0xff]
        %v1283 = vld [vmem:[%s5] sm:$0x1]
        %v1285 = vperm.slane %v1283, 0
        %v1288 = vsel %vm620, %v1278, 0
        %1290 = vmatpush.msra.mxu0 0.0
        %1291 = vmatpush.msra.mxu0 0.0
        %1292 = vmatpush.msra.mxu0 0.0
        %1293 = vmatpush.msra.mxu0 0.0
        %1294 = vmatpush.msra.mxu0 0.0
        %1295 = vmatpush.msra.mxu0 0.0
        %1296 = vmatpush.msra.mxu0 0.0
        %1297 = vmatpush.msra.mxu0 0.0
        %1298 = vmatpush.msra.mxu0 0.0
        %1299 = vmatpush.msra.mxu0 0.0
        %1300 = vmatpush.msra.mxu0 0.0
        %1301 = vmatpush.msra.mxu0 0.0
        %1302 = vmatpush.msra.mxu0 %v1282
        %1303 = vmatpush.msra.mxu0 %v1281
        %1304 = vmatpush.msra.mxu0 %v1280
        %1305 = vmatpush.msra.mxu0 %v1279
        %1306 = vmatmul.f32.gmra.mxu0 %v1288
        %v1307 = vpop.f32.mrf.mxu0
        %v1308 = vadd.f32 %v1285, %v1307
        %1309 = vdwg.mxu0
        %v1310 = vadd.f32 %v615, %v1308
        %v1311 = vld [vmem:[%s6] sm:$0x1]
        %v1312 = vld [vmem:[%s7] sm:$0x1]
        %v1313 = vsel %vm620, %v1310, 0.0
        %1314 = vadd.xlane.f32.xlu0 %v1313
        %v1315 = vpop.xlane.xlu0 %1314
        %v1316 = vrcp.pop 32.0
        %v1317 = vmul.f32 32.0, %v1316
        %v1318 = vsub.f32 1.0, %v1317
        %v1319 = vmul.f32 %v1316, %v1318
        %v1320 = vadd.f32 %v1316, %v1319
        %vm1321 = vweird.f32 %v1316
        %v1322 = vsel %vm1321, %v1316, %v1320
        %v1323 = vmul.f32 %v1315, %v1322
        %v1324 = vsub.f32 %v1310, %v1323
        %v1325 = vmul.f32 %v1324, %v1324
        %v1326 = vsel %vm620, %v1325, 0.0
        %1327 = vadd.xlane.f32.xlu0 %v1326
        %v1328 = vpop.xlane.xlu0 %1327
        %v1329 = vmul.f32 %v1328, %v1322
        %v1330 = vadd.f32 %v1329, 1e-05
        %v1331 = vrsqrt.pop %v1330
        %v1332 = vmul.f32 %v1331, %v1330
        %v1333 = vmul.f32 %v1332, %v1331
        %v1334 = vmul.f32 0.5, %v1333
        %v1335 = vsub.f32 1.5, %v1334
        %v1336 = vmul.f32 %v1331, %v1335
        %vm1337 = vweird.f32 %v1330
        %vm1338 = vweird.f32 %v1331
        %vm1339 = vmor %vm1337, %vm1338
        %v1340 = vsel %vm1339, %v1331, %v1336
        %v1341 = vmul.f32 %v1324, %v1340
        %v1343 = vperm.slane %v1311, 0
        %v1345 = vmul.f32 %v1341, %v1343
        %v1347 = vperm.slane %v1312, 0
        %v1349 = vadd.f32 %v1345, %v1347
        %v1350 = vld [vmem:[%s8] sm:$0xff]
        %v1351 = vld [vmem:[%s8 + $0x8] sm:$0xff]
        %v1352 = vld [vmem:[%s8 + $0x10] sm:$0xff]
        %v1353 = vld [vmem:[%s8 + $0x18] sm:$0xff]
        %v1354 = vld [vmem:[%s9] sm:$0x1]
        %v1356 = vperm.slane %v1354, 0
        %v1359 = vsel %vm620, %v1349, 0
        %1361 = vmatpush.msra.mxu0 0.0
        %1362 = vmatpush.msra.mxu0 0.0
        %1363 = vmatpush.msra.mxu0 0.0
        %1364 = vmatpush.msra.mxu0 0.0
        %1365 = vmatpush.msra.mxu0 0.0
        %1366 = vmatpush.msra.mxu0 0.0
        %1367 = vmatpush.msra.mxu0 0.0
        %1368 = vmatpush.msra.mxu0 0.0
        %1369 = vmatpush.msra.mxu0 0.0
        %1370 = vmatpush.msra.mxu0 0.0
        %1371 = vmatpush.msra.mxu0 0.0
        %1372 = vmatpush.msra.mxu0 0.0
        %1373 = vmatpush.msra.mxu0 %v1353
        %1374 = vmatpush.msra.mxu0 %v1352
        %1375 = vmatpush.msra.mxu0 %v1351
        %1376 = vmatpush.msra.mxu0 %v1350
        %1377 = vmatmul.f32.gmra.mxu0 %v1359
        %v1378 = vpop.f32.mrf.mxu0
        %v1379 = vadd.f32 %v1356, %v1378
        %1380 = vdwg.mxu0
        %v1381 = vmul.f32 %v1379, 0.5
        %v1382 = vmul.f32 %v1379, 0.044715
        %v1383 = vmul.f32 %v1382, %v1379
        %v1384 = vmul.f32 %v1383, %v1379
        %v1385 = vadd.f32 %v1379, %v1384
        %v1386 = vmul.f32 %v1385, 0.7978846
        %v1387 = vtanh.pop %v1386
        %v1388 = vadd.f32 %v1387, 1.0
        %v1389 = vmul.f32 %v1381, %v1388
        %v1390 = vld [vmem:[%s10] sm:$0xff]
        %v1391 = vld [vmem:[%s10 + $0x8] sm:$0xff]
        %v1392 = vld [vmem:[%s10 + $0x10] sm:$0xff]
        %v1393 = vld [vmem:[%s10 + $0x18] sm:$0xff]
        %v1394 = vld [vmem:[%s10 + $0x20] sm:$0xff]
        %v1395 = vld [vmem:[%s10 + $0x28] sm:$0xff]
        %v1396 = vld [vmem:[%s10 + $0x30] sm:$0xff]
        %v1397 = vld [vmem:[%s10 + $0x38] sm:$0xff]
        %v1398 = vld [vmem:[%s10 + $0x40] sm:$0xff]
        %v1399 = vld [vmem:[%s10 + $0x48] sm:$0xff]
        %v1400 = vld [vmem:[%s10 + $0x50] sm:$0xff]
        %v1401 = vld [vmem:[%s10 + $0x58] sm:$0xff]
        %v1402 = vld [vmem:[%s10 + $0x60] sm:$0xff]
        %v1403 = vld [vmem:[%s10 + $0x68] sm:$0xff]
        %v1404 = vld [vmem:[%s10 + $0x70] sm:$0xff]
        %v1405 = vld [vmem:[%s10 + $0x78] sm:$0xff]
        %v1406 = vld [vmem:[%s11] sm:$0x1]
        %v1408 = vperm.slane %v1406, 0
        %1410 = vmatpush.msra.mxu0 %v1405
        %1411 = vmatpush.msra.mxu0 %v1404
        %1412 = vmatpush.msra.mxu0 %v1403
        %1413 = vmatpush.msra.mxu0 %v1402
        %1414 = vmatpush.msra.mxu0 %v1401
        %1415 = vmatpush.msra.mxu0 %v1400
        %1416 = vmatpush.msra.mxu0 %v1399
        %1417 = vmatpush.msra.mxu0 %v1398
        %1418 = vmatpush.msra.mxu0 %v1397
        %1419 = vmatpush.msra.mxu0 %v1396
        %1420 = vmatpush.msra.mxu0 %v1395
        %1421 = vmatpush.msra.mxu0 %v1394
        %1422 = vmatpush.msra.mxu0 %v1393
        %1423 = vmatpush.msra.mxu0 %v1392
        %1424 = vmatpush.msra.mxu0 %v1391
        %1425 = vmatpush.msra.mxu0 %v1390
        %1426 = vmatmul.f32.gmra.mxu0 %v1389
        %v1427 = vpop.f32.mrf.mxu0
        %v1428 = vadd.f32 %v1408, %v1427
        %1429 = vdwg.mxu0
        %v1430 = vadd.f32 %v1349, %v1428
        %v1431 = vld [vmem:[%s12] sm:$0x1]
        %v1432 = vld [vmem:[%s13] sm:$0x1]
        %v1433 = vsel %vm620, %v1430, 0.0
        %1434 = vadd.xlane.f32.xlu0 %v1433
        %v1435 = vpop.xlane.xlu0 %1434
        %v1436 = vmul.f32 %v1435, %v1322
        %v1437 = vsub.f32 %v1430, %v1436
        %v1438 = vmul.f32 %v1437, %v1437
        %v1439 = vsel %vm620, %v1438, 0.0
        %1440 = vadd.xlane.f32.xlu0 %v1439
        %v1441 = vpop.xlane.xlu0 %1440
        %v1442 = vmul.f32 %v1441, %v1322
        %v1443 = vadd.f32 %v1442, 1e-05
        %v1444 = vrsqrt.pop %v1443
        %v1445 = vmul.f32 %v1444, %v1443
        %v1446 = vmul.f32 %v1445, %v1444
        %v1447 = vmul.f32 0.5, %v1446
        %v1448 = vsub.f32 1.5, %v1447
        %v1449 = vmul.f32 %v1444, %v1448
        %vm1450 = vweird.f32 %v1443
        %vm1451 = vweird.f32 %v1444
        %vm1452 = vmor %vm1450, %vm1451
        %v1453 = vsel %vm1452, %v1444, %v1449
        %v1454 = vmul.f32 %v1437, %v1453
        %v1456 = vperm.slane %v1431, 0
        %v1458 = vmul.f32 %v1454, %v1456
        %v1460 = vperm.slane %v1432, 0
        %v1462 = vadd.f32 %v1458, %v1460
        %1463 = vst.msk [vmem:[%s493] sm:$0xff] %vm620, %v1462
        %s1464 = sand.u32 %s356, 1
        %s1465 = scalar_lea.sflag [#allocation7], %s1464
        %s1466 = sand.u32 %s356, 1
        %s1467 = smul.addr %s1466, 8
        %s1468 = scalar_lea.vmem [#allocation6], %s1467
        // Predicated region
        $region81: #{tpu_custom_call.1} parent=75 // pred_check
          %p1469 = pneg %p366
        $region82: #{tpu_custom_call.1} parent=75 // pred_check_branch
          %1471 = sbr.rel (%p1469) target = $region84
        $region83: #{tpu_custom_call.1} parent=75 // pred_region
          %1473 = vsyncadd %s1465, 0
          %s1474 = sadd.s32 %s33, %s32
          %s1475 = smul.addr %s1474, 8
          %s1476 = scalar_lea.hbm %s14, %s1475
          %s1478 = sshll.u32 %s1468, 4
          %s1479 = int_to_ptr.vmem [resolvable:$true] %s1478
          %s1480 = sshll.u32 %s1476, 4
          %s1481 = int_to_ptr.hbm [resolvable:$true] %s1480
          %1483 = dma.vmem_to_hbm [thread:$0]  %s1479, 128, %s1481, %s1465
        $region84: #{tpu_custom_call.1} parent=75 // pred_fallthru
          _
      $region76: #{tpu_custom_call.1} parent=5 // pred_fallthru
        _
      %p1484 = scmp.le.s32.totalorder 2, %s23
      // Predicated region
      $region85: #{tpu_custom_call.1} parent=5 // pred_check
        %p1485 = pneg %p1484
      $region86: #{tpu_custom_call.1} parent=5 // pred_check_branch
        %1487 = sbr.rel (%p1485) target = $region88
      $region87: #{tpu_custom_call.1} parent=5 // pred_region
        %s1488 = ssub.s32 %s23, 2
        // Predicated region
        $region89: #{tpu_custom_call.1} parent=87 // pred_check
          %p1489 = pneg %p372
        $region90: #{tpu_custom_call.1} parent=87 // pred_check_branch
          %1491 = sbr.rel (%p1489) target = $region92
        $region91: #{tpu_custom_call.1} parent=87 // pred_region
          %s1492 = sand.u32 %s357, 1
          %s1493 = scalar_lea.sflag [#allocation7], %s1492
          %s1494 = sand.u32 %s357, 1
          %s1495 = smul.addr %s1494, 8
          %s1496 = scalar_lea.vmem [#allocation6], %s1495
          %1498 = dma.done %s1493, 128
        $region92: #{tpu_custom_call.1} parent=87 // pred_fallthru
          _
      $region88: #{tpu_custom_call.1} parent=5 // pred_fallthru
        _
    $region6: #{tpu_custom_call.1} parent=1 // loop_footer
      %s27 = sadd.s32 1, %s23
    $region7: #{tpu_custom_call.1} parent=1 // loop_footer_branch
      %22 = sbr.rel target = $region3
    $region8: #{tpu_custom_call.1} parent=1 // loop_exit
      _
    %1499 = vsyncpa [#allocation7], 1
    %s1500 = scalar_lea.sflag [#allocation7], 1
    %1501 = vsyncpa %s1500, 1

</llo_original>
